<compile_context>
chip_gen: v7x
topology: tpu7x:2x2x1
jax: 0.10.0
libtpu: 0.0.40
codegen_flags: <defaults>
</compile_context>

<pallas_src>
import math
import functools

import jax
import jax.numpy as jnp
from jax.experimental import pallas as pl
from jax.experimental.pallas import tpu as pltpu

NEG_INF = -1e30
ACT_DTYPE = jnp.bfloat16          # inter-kernel activation dtype in HBM


# ---------------------------------------------------------------------------
# small helpers
# ---------------------------------------------------------------------------

def _tile(d, pref):
    """Largest (8,128)-friendly tile <= pref that divides d, else the full dim."""
    if d <= pref:
        return d
    for t in (pref, 512, 256, 128):
        if t <= pref and d % t == 0:
            return t
    return d                      # NOTE: non-divisible large dims fall back to un-tiled


def _apply_activation(y, activation):
    if activation == "relu":
        return jnp.maximum(y, 0.0)
    if activation == "tanh":
        return jnp.tanh(y)
    return y


# ---------------------------------------------------------------------------
# Linear (M/N tiles + K-reduction axis, bias/activation epilogue)
# ---------------------------------------------------------------------------

def _matmul_kernel(x_ref, w_ref, b_ref, o_ref, acc_ref, *, activation, nk):
    @pl.when(pl.program_id(2) == 0)
    def _():
        acc_ref[...] = jnp.zeros_like(acc_ref)

    acc_ref[...] += jnp.dot(x_ref[...].astype(jnp.bfloat16),
                            w_ref[...].astype(jnp.bfloat16),
                            preferred_element_type=jnp.float32)

    @pl.when(pl.program_id(2) == nk - 1)
    def _():
        y = acc_ref[...] + b_ref[...].astype(jnp.float32)
        o_ref[...] = _apply_activation(y, activation).astype(o_ref.dtype)


def linear(x2d, w, b, activation="none", out_dtype=ACT_DTYPE):
    """x2d: [M, K] bf16, w: [K, N] bf16 (pre-transposed), b: [N] f32."""
    M, K = x2d.shape
    N = w.shape[1]
    tm, tn, tk = _tile(M, 512), _tile(N, 512), _tile(K, 512)
    gm, gn, gk = M // tm, N // tn, K // tk
    return pl.pallas_call(
        functools.partial(_matmul_kernel, activation=activation, nk=gk),
        out_shape=jax.ShapeDtypeStruct((M, N), out_dtype),
        grid=(gm, gn, gk),
        in_specs=[pl.BlockSpec((tm, tk), lambda i, j, k: (i, k)),
                  pl.BlockSpec((tk, tn), lambda i, j, k: (k, j)),
                  pl.BlockSpec((1, tn), lambda i, j, k: (0, j))],
        out_specs=pl.BlockSpec((tm, tn), lambda i, j, k: (i, j)),
        scratch_shapes=[pltpu.VMEM((tm, tn), jnp.float32)],
        compiler_params=pltpu.CompilerParams(
            dimension_semantics=("parallel", "parallel", "arbitrary")),
    )(x2d, w, b.reshape(1, N))


# ---------------------------------------------------------------------------
# Linear + residual + LayerNorm  (K-tiled, epilogue does residual + LN)
# ---------------------------------------------------------------------------

def _linear_res_ln_kernel(x_ref, w_ref, b_ref, r_ref, g_ref, bt_ref, o_ref, acc_ref, *, nk):
    @pl.when(pl.program_id(1) == 0)
    def _():
        acc_ref[...] = jnp.zeros_like(acc_ref)

    acc_ref[...] += jnp.dot(x_ref[...].astype(jnp.bfloat16),
                            w_ref[...].astype(jnp.bfloat16),
                            preferred_element_type=jnp.float32)

    @pl.when(pl.program_id(1) == nk - 1)
    def _():
        x = acc_ref[...] + b_ref[...].astype(jnp.float32) + r_ref[...].astype(jnp.float32)
        mu = jnp.mean(x, axis=-1, keepdims=True)
        var = jnp.mean(jnp.square(x - mu), axis=-1, keepdims=True)
        yn = (x - mu) * jax.lax.rsqrt(var + 1e-5)     # eps = 1e-5 (PyTorch default)
        o_ref[...] = (yn * g_ref[...].astype(jnp.float32)
                      + bt_ref[...].astype(jnp.float32)).astype(o_ref.dtype)


def linear_residual_layernorm(x2d, w, b, res2d, gamma, beta):
    """LayerNorm(res + x @ w + b). x: [M,K], w: [K,E], res: [M,E]."""
    M, K = x2d.shape
    E = w.shape[1]
    tm, tk = _tile(M, 256), _tile(K, 512)
    gm, gk = M // tm, K // tk
    return pl.pallas_call(
        functools.partial(_linear_res_ln_kernel, nk=gk),
        out_shape=jax.ShapeDtypeStruct((M, E), ACT_DTYPE),
        grid=(gm, gk),
        in_specs=[pl.BlockSpec((tm, tk), lambda i, k: (i, k)),
                  pl.BlockSpec((tk, E), lambda i, k: (k, 0)),
                  pl.BlockSpec((1, E), lambda i, k: (0, 0)),
                  pl.BlockSpec((tm, E), lambda i, k: (i, 0)),
                  pl.BlockSpec((1, E), lambda i, k: (0, 0)),
                  pl.BlockSpec((1, E), lambda i, k: (0, 0))],
        out_specs=pl.BlockSpec((tm, E), lambda i, k: (i, 0)),
        scratch_shapes=[pltpu.VMEM((tm, E), jnp.float32)],
        compiler_params=pltpu.CompilerParams(
            dimension_semantics=("parallel", "arbitrary")),
    )(x2d, w, b.reshape(1, E), res2d, gamma.reshape(1, E), beta.reshape(1, E))


# ---------------------------------------------------------------------------
# Residual-free LayerNorm (final encoder/decoder norms)
# ---------------------------------------------------------------------------

def _ln_kernel(x_ref, g_ref, b_ref, o_ref):
    x = x_ref[...].astype(jnp.float32)
    mu = jnp.mean(x, axis=-1, keepdims=True)
    var = jnp.mean(jnp.square(x - mu), axis=-1, keepdims=True)
    y = (x - mu) * jax.lax.rsqrt(var + 1e-5)
    o_ref[...] = (y * g_ref[...] + b_ref[...]).astype(o_ref.dtype)


def layernorm(x2d, gamma, beta):
    M, E = x2d.shape
    tm = _tile(M, 512)
    gm = M // tm
    return pl.pallas_call(
        _ln_kernel,
        out_shape=jax.ShapeDtypeStruct((M, E), ACT_DTYPE),
        grid=(gm,),
        in_specs=[pl.BlockSpec((tm, E), lambda i: (i, 0)),
                  pl.BlockSpec((1, E), lambda i: (0, 0)),
                  pl.BlockSpec((1, E), lambda i: (0, 0))],
        out_specs=pl.BlockSpec((tm, E), lambda i: (i, 0)),
        compiler_params=pltpu.CompilerParams(dimension_semantics=("parallel",)),
    )(x2d, gamma.reshape(1, E), beta.reshape(1, E))


# ---------------------------------------------------------------------------
# Vocab projection + log_softmax, V-tiled (online max/sum-exp, then subtract pass)
# ---------------------------------------------------------------------------

def _vocab_logits_kernel(x_ref, w_ref, b_ref, logits_ref, m_ref, l_ref):
    j = pl.program_id(1)

    @pl.when(j == 0)
    def _():
        m_ref[...] = jnp.full(m_ref.shape, NEG_INF, m_ref.dtype)
        l_ref[...] = jnp.zeros(l_ref.shape, l_ref.dtype)

    y = jnp.dot(x_ref[...].astype(jnp.bfloat16), w_ref[...].astype(jnp.bfloat16),
                preferred_element_type=jnp.float32) + b_ref[...].astype(jnp.float32)
    logits_ref[...] = y
    m_prev = m_ref[...]
    m_new = jnp.maximum(m_prev, jnp.max(y, axis=-1, keepdims=True))
    l_ref[...] = (l_ref[...] * jnp.exp(m_prev - m_new)
                  + jnp.sum(jnp.exp(y - m_new), axis=-1, keepdims=True))
    m_ref[...] = m_new


def _logsoftmax_apply_kernel(logits_ref, m_ref, l_ref, o_ref):
    o_ref[...] = (logits_ref[...]
                  - (m_ref[...] + jnp.log(l_ref[...]))).astype(o_ref.dtype)


def linear_log_softmax(x2d, w, b):
    """V-tiled vocab projection + log_softmax. x: [M,E] bf16, w: [E,V] bf16."""
    M, K = x2d.shape
    V = w.shape[1]
    tm, tv = _tile(M, 256), _tile(V, 512)
    gm, gv = M // tm, V // tv
    logits, m, l = pl.pallas_call(
        _vocab_logits_kernel,
        out_shape=(jax.ShapeDtypeStruct((M, V), jnp.float32),
                   jax.ShapeDtypeStruct((M, 1), jnp.float32),
                   jax.ShapeDtypeStruct((M, 1), jnp.float32)),
        grid=(gm, gv),
        in_specs=[pl.BlockSpec((tm, K), lambda i, j: (i, 0)),
                  pl.BlockSpec((K, tv), lambda i, j: (0, j)),
                  pl.BlockSpec((1, tv), lambda i, j: (0, j))],
        out_specs=(pl.BlockSpec((tm, tv), lambda i, j: (i, j)),
                   pl.BlockSpec((tm, 1), lambda i, j: (i, 0)),
                   pl.BlockSpec((tm, 1), lambda i, j: (i, 0))),
        compiler_params=pltpu.CompilerParams(
            dimension_semantics=("parallel", "arbitrary")),
    )(x2d, w, b.reshape(1, V))

    return pl.pallas_call(
        _logsoftmax_apply_kernel,
        out_shape=jax.ShapeDtypeStruct((M, V), jnp.float32),
        grid=(gm, gv),
        in_specs=[pl.BlockSpec((tm, tv), lambda i, j: (i, j)),
                  pl.BlockSpec((tm, 1), lambda i, j: (i, 0)),
                  pl.BlockSpec((tm, 1), lambda i, j: (i, 0))],
        out_specs=pl.BlockSpec((tm, tv), lambda i, j: (i, j)),
        compiler_params=pltpu.CompilerParams(
            dimension_semantics=("parallel", "parallel")),
    )(logits, m, l)


# ----------------------------- attention ----------------------------------

def _mha_heads(q, k, v, bias, nhead, o_ref):
    """q,k,v: [L*, E] bf16; bias: additive f32 broadcastable to [Lq, Lk].
    Writes each head's [Lq, Dh] result directly into o_ref[0, :, h*Dh:(h+1)*Dh]."""
    Lq, E = q.shape
    Dh = E // nhead
    for h in range(nhead):                         # static unroll over heads
        sl = slice(h * Dh, (h + 1) * Dh)
        s = jax.lax.dot_general(q[:, sl], k[:, sl],
                                dimension_numbers=(((1,), (1,)), ((), ())),
                                preferred_element_type=jnp.float32)   # [Lq, Lk]
        s = s + bias
        mx = jnp.max(s, axis=-1, keepdims=True)
        p = jnp.exp(s - mx)
        denom = jnp.sum(p, axis=-1, keepdims=True)
        p = p * pl.reciprocal(denom, approx=True)                     # EUP, ~free
        o = jnp.dot(p.astype(jnp.bfloat16), v[:, sl],
                    preferred_element_type=jnp.float32)               # [Lq, Dh]
        o_ref[0, :, sl] = o.astype(o_ref.dtype)


def _self_attn_kernel(qkv_ref, kpm_ref, o_ref, *, nhead, causal):
    qkv = qkv_ref[0]                               # [L, 3E] bf16
    L = qkv.shape[0]
    E = qkv.shape[-1] // 3
    bias = kpm_ref[0].astype(jnp.float32)          # [1, L] additive
    if causal:
        row = jax.lax.broadcasted_iota(jnp.int32, (L, L), 0)
        col = jax.lax.broadcasted_iota(jnp.int32, (L, L), 1)
        bias = bias + jnp.where(row >= col, 0.0, NEG_INF).astype(jnp.float32)
    _mha_heads(qkv[:, :E], qkv[:, E:2 * E], qkv[:, 2 * E:], bias, nhead, o_ref)


def self_attention(qkv, kpm_add, nhead, causal):
    """qkv: [B, L, 3E] bf16 (fused projection output), kpm_add: [B, 1, L] additive f32."""
    B, L, E3 = qkv.shape
    E = E3 // 3
    return pl.pallas_call(
        functools.partial(_self_attn_kernel, nhead=nhead, causal=causal),
        out_shape=jax.ShapeDtypeStruct((B, L, E), ACT_DTYPE),
        grid=(B,),
        in_specs=[pl.BlockSpec((1, L, E3), lambda b: (b, 0, 0)),
                  pl.BlockSpec((1, 1, L), lambda b: (b, 0, 0))],
        out_specs=pl.BlockSpec((1, L, E), lambda b: (b, 0, 0)),
        compiler_params=pltpu.CompilerParams(dimension_semantics=("parallel",)),
    )(qkv, kpm_add)


def _cross_attn_kernel(q_ref, kv_ref, kpm_ref, o_ref, *, nhead):
    kv = kv_ref[0]                                 # [Lk, 2E] bf16
    E = kv.shape[-1] // 2
    bias = kpm_ref[0].astype(jnp.float32)
    _mha_heads(q_ref[0], kv[:, :E], kv[:, E:], bias, nhead, o_ref)


def cross_attention(q, kv, kpm_add, nhead):
    """q: [B, Lq, E] bf16, kv: [B, Lk, 2E] bf16, kpm_add: [B, 1, Lk] additive f32."""
    B, Lq, E = q.shape
    Lk = kv.shape[1]
    return pl.pallas_call(
        functools.partial(_cross_attn_kernel, nhead=nhead),
        out_shape=jax.ShapeDtypeStruct((B, Lq, E), ACT_DTYPE),
        grid=(B,),
        in_specs=[pl.BlockSpec((1, Lq, E), lambda b: (b, 0, 0)),
                  pl.BlockSpec((1, Lk, 2 * E), lambda b: (b, 0, 0)),
                  pl.BlockSpec((1, 1, Lk), lambda b: (b, 0, 0))],
        out_specs=pl.BlockSpec((1, Lq, E), lambda b: (b, 0, 0)),
        compiler_params=pltpu.CompilerParams(dimension_semantics=("parallel",)),
    )(q, kv, kpm_add)


# ---------------------------------------------------------------------------
# Transformer layers (glue is just free reshapes between Pallas kernels)
# ---------------------------------------------------------------------------

def encoder_layer(x_ble, p, nhead, src_kpm):
    B, L, E = x_ble.shape
    x2d = x_ble.reshape(B * L, E)
    qkv = linear(x2d, p["qkv_w"], p["qkv_b"]).reshape(B, L, 3 * E)
    a = self_attention(qkv, src_kpm, nhead, causal=False).reshape(B * L, E)
    x2d = linear_residual_layernorm(a, p["out_w"], p["out_b"], x2d,
                                    p["norm1_w"], p["norm1_b"])
    h = linear(x2d, p["lin1_w"], p["lin1_b"], activation="relu")
    x2d = linear_residual_layernorm(h, p["lin2_w"], p["lin2_b"], x2d,
                                    p["norm2_w"], p["norm2_b"])
    return x2d.reshape(B, L, E)


def decoder_layer(y_ble, memory2d, S, p, nhead, tgt_kpm, mem_kpm):
    B, T, E = y_ble.shape
    x2d = y_ble.reshape(B * T, E)
    # masked self-attention
    qkv = linear(x2d, p["sa_qkv_w"], p["sa_qkv_b"]).reshape(B, T, 3 * E)
    a = self_attention(qkv, tgt_kpm, nhead, causal=True).reshape(B * T, E)
    x2d = linear_residual_layernorm(a, p["sa_out_w"], p["sa_out_b"], x2d,
                                    p["norm1_w"], p["norm1_b"])
    # cross-attention over encoder memory
    q = linear(x2d, p["ca_q_w"], p["ca_q_b"]).reshape(B, T, E)
    kv = linear(memory2d, p["ca_kv_w"], p["ca_kv_b"]).reshape(B, S, 2 * E)
    c = cross_attention(q, kv, mem_kpm, nhead).reshape(B * T, E)
    x2d = linear_residual_layernorm(c, p["ca_out_w"], p["ca_out_b"], x2d,
                                    p["norm2_w"], p["norm2_b"])
    # feed-forward
    h = linear(x2d, p["lin1_w"], p["lin1_b"], activation="relu")
    x2d = linear_residual_layernorm(h, p["lin2_w"], p["lin2_b"], x2d,
                                    p["norm3_w"], p["norm3_b"])
    return x2d.reshape(B, T, E)


def transformer_forward(params, src, tgt, nhead,
                        src_key_padding_mask=None, tgt_key_padding_mask=None,
                        memory_key_padding_mask=None, do_multitask=False):
    emb = params["embedding"]
    V, E = emb.shape
    B, S = src.shape
    T = tgt.shape[1]
    pe = params["pe"]
    sqrt_e = math.sqrt(E)

    def embed(tok):   # TransformerEmbedding: emb(x)*sqrt(E) + pe[:L]  (gather done in XLA)
        L = tok.shape[1]
        return (jnp.take(emb, tok, axis=0) * sqrt_e + pe[None, :L, :]).astype(ACT_DTYPE)

    def kpm_add(mask, L):
        if mask is None:
            return jnp.zeros((B, 1, L), jnp.float32)
        return jnp.where(mask, NEG_INF, 0.0).astype(jnp.float32)[:, None, :]

    src_kpm = kpm_add(src_key_padding_mask, S)
    mem_kpm = src_kpm if memory_key_padding_mask is None \
        else kpm_add(memory_key_padding_mask, S)
    tgt_kpm = kpm_add(tgt_key_padding_mask, T)

    # ---- encoder ----
    x = embed(src)                                            # [B, S, E] bf16
    for p in params["enc_layers"]:
        x = encoder_layer(x, p, nhead, src_kpm)
    memory2d = layernorm(x.reshape(B * S, E),
                         params["enc_norm_w"], params["enc_norm_b"])
    memory = memory2d.reshape(B, S, E)

    # ---- decoder ----
    y = embed(tgt)                                            # [B, T, E] bf16
    for p in params["dec_layers"]:
        y = decoder_layer(y, memory2d, S, p, nhead, tgt_kpm, mem_kpm)
    out2d = layernorm(y.reshape(B * T, E),
                      params["dec_norm_w"], params["dec_norm_b"])

    # ---- V-tiled output projection + log_softmax ----
    logprobs = linear_log_softmax(out2d, params["dec_emb_w"], params["dec_emb_b"])
    # TODO(synk): emit [T,B,V] directly from the kernel to skip this XLA transpose.
    logprobs = logprobs.reshape(B, T, V).transpose(1, 0, 2)   # [T, B, V] (PyTorch layout)

    if do_multitask:
        cls_emb = memory[:, 0, :]                             # == memory[0] time-major
        h = linear(cls_emb, params["cls1_w"], params["cls1_b"], activation="tanh")
        cls_result = linear(h, params["cls2_w"], params["cls2_b"], out_dtype=jnp.float32)
        return logprobs, cls_result
    return logprobs


# ---------------------------------------------------------------------------
# Deterministic parameter init (synthetic; shapes match the PyTorch module,
# already pre-transposed / fused / scaled into the kernel-friendly layout)
# ---------------------------------------------------------------------------

def make_pe(max_len, d_model):
    position = jnp.arange(max_len, dtype=jnp.float32)[:, None]
    div_term = jnp.exp(jnp.arange(0, d_model, 2, dtype=jnp.float32)
                       * (-math.log(10000.0) / d_model))
    pe = jnp.zeros((max_len, d_model), jnp.float32)
    pe = pe.at[:, 0::2].set(jnp.sin(position * div_term))
    pe = pe.at[:, 1::2].set(jnp.cos(position * div_term))
    return pe                                                  # [max_len, E]


def init_params(key, vocab, E, nhead, n_enc, n_dec, ffn, ann, max_len=64):
    keys = iter(jax.random.split(key, 512))
    Dh = E // nhead
    q_scale = 1.0 / math.sqrt(Dh)
    wdt = jnp.bfloat16                                        # MXU operand dtype

    def u(shape, s=0.1):
        return jax.random.uniform(next(keys), shape, jnp.float32, -s, s)

    def attn_self():
        in_w, in_b = u((3 * E, E)), u((3 * E,))               # torch in_proj [3E, E]
        out_w, out_b = u((E, E)), u((E,))
        qkv_w = in_w.T                                        # [E, 3E] -> cols [Q|K|V]
        qkv_b = in_b
        qkv_w = qkv_w.at[:, :E].multiply(q_scale)             # fold 1/sqrt(Dh) into Q
        qkv_b = qkv_b.at[:E].multiply(q_scale)
        return {"qkv_w": qkv_w.astype(wdt), "qkv_b": qkv_b,
                "out_w": out_w.T.astype(wdt), "out_b": out_b}

    def attn_cross():
        in_w, in_b = u((3 * E, E)), u((3 * E,))
        out_w, out_b = u((E, E)), u((E,))
        wq, wk, wv = in_w[:E], in_w[E:2 * E], in_w[2 * E:]
        bq, bk, bv = in_b[:E], in_b[E:2 * E], in_b[2 * E:]
        return {"q_w": (wq.T * q_scale).astype(wdt), "q_b": bq * q_scale,
                "kv_w": jnp.concatenate([wk.T, wv.T], axis=1).astype(wdt),
                "kv_b": jnp.concatenate([bk, bv]),
                "out_w": out_w.T.astype(wdt), "out_b": out_b}

    def ffn_and_norms(n_norms):
        d = {"lin1_w": u((ffn, E)).T.astype(wdt), "lin1_b": u((ffn,)),
             "lin2_w": u((E, ffn)).T.astype(wdt), "lin2_b": u((E,))}
        for i in range(1, n_norms + 1):
            d[f"norm{i}_w"] = jnp.ones((E,), jnp.float32)
            d[f"norm{i}_b"] = jnp.zeros((E,), jnp.float32)
        return d

    def enc():
        a = attn_self()
        return {"qkv_w": a["qkv_w"], "qkv_b": a["qkv_b"],
                "out_w": a["out_w"], "out_b": a["out_b"], **ffn_and_norms(2)}

    def dec():
        sa, ca = attn_self(), attn_cross()
        return {"sa_qkv_w": sa["qkv_w"], "sa_qkv_b": sa["qkv_b"],
                "sa_out_w": sa["out_w"], "sa_out_b": sa["out_b"],
                "ca_q_w": ca["q_w"], "ca_q_b": ca["q_b"],
                "ca_kv_w": ca["kv_w"], "ca_kv_b": ca["kv_b"],
                "ca_out_w": ca["out_w"], "ca_out_b": ca["out_b"],
                **ffn_and_norms(3)}

    return {
        "embedding": u((vocab, E)),                           # init_weights: U(-0.1, 0.1)
        "pe": make_pe(max_len, E),
        "enc_layers": [enc() for _ in range(n_enc)],
        "dec_layers": [dec() for _ in range(n_dec)],
        "enc_norm_w": jnp.ones((E,), jnp.float32), "enc_norm_b": jnp.zeros((E,), jnp.float32),
        "dec_norm_w": jnp.ones((E,), jnp.float32), "dec_norm_b": jnp.zeros((E,), jnp.float32),
        "dec_emb_w": u((vocab, E)).T.astype(wdt),             # stored [E, V]
        "dec_emb_b": jnp.zeros((vocab,), jnp.float32),        # decoder_embeddings bias zeroed
        "cls1_w": u((E, E)).T.astype(wdt), "cls1_b": u((E,)),
        "cls2_w": u((ann, E)).T.astype(wdt), "cls2_b": u((ann,)),
    }


# ---------------------------------------------------------------------------
# Main
# ---------------------------------------------------------------------------

if __name__ == "__main__":
    VOCAB, EMB, NHEAD, N_ENC, N_DEC, FFN, ANN = 64, 32, 4, 2, 2, 64, 8
    B, S, T = 2, 8, 8

    key = jax.random.PRNGKey(0)
    pkey, skey, tkey = jax.random.split(key, 3)
    params = init_params(pkey, VOCAB, EMB, NHEAD, N_ENC, N_DEC, FFN, ANN)

    src = jax.random.randint(skey, (B, S), 0, VOCAB, dtype=jnp.int32)
    tgt = jax.random.randint(tkey, (B, T), 0, VOCAB, dtype=jnp.int32)

    fwd = jax.jit(functools.partial(transformer_forward, nhead=NHEAD, do_multitask=True))
    logprobs, cls_result = fwd(params, src, tgt)
    jax.block_until_ready(logprobs)
    jax.block_until_ready(cls_result)

    assert logprobs.shape == (T, B, VOCAB)
    assert cls_result.shape == (B, ANN)
    assert bool(jnp.all(jnp.isfinite(logprobs)))
    assert bool(jnp.all(jnp.isfinite(cls_result)))
    print("KERNEL_OK")
</pallas_src>

<mosaic_0001>
module attributes {stable_mosaic.version = 11 : i64} {
  func.func @_matmul_kernel(%arg0: i32, %arg1: i32, %arg2: i32, %arg3: memref<16x32xbf16, #tpu.memory_space<vmem>>, %arg4: memref<32x96xbf16, #tpu.memory_space<vmem>>, %arg5: memref<1x96xf32, #tpu.memory_space<vmem>>, %arg6: memref<16x96xbf16, #tpu.memory_space<vmem>>, %arg7: memref<16x96xf32, #tpu.memory_space<vmem>>) attributes {dimension_semantics = [#tpu.dimension_semantics<parallel>, #tpu.dimension_semantics<parallel>, #tpu.dimension_semantics<arbitrary>], iteration_bounds = array<i64: 1, 1, 1>, scalar_prefetch = 0 : i64, scratch_operands = 1 : i64, tpu.core_type = #tpu.core_type<tc>, window_params = [{transform_indices = @transform_0, window_bounds = array<i64: 16, 32>}, {transform_indices = @transform_1, window_bounds = array<i64: 32, 96>}, {transform_indices = @transform_2, window_bounds = array<i64: 1, 96>}, {transform_indices = @transform_3, window_bounds = array<i64: 16, 96>}]} {
    %c0_i32 = arith.constant 0 : i32
    %0 = arith.cmpi eq, %arg2, %c0_i32 : i32
    %1 = arith.extui %0 : i1 to i32
    %c0_i32_0 = arith.constant 0 : i32
    %2 = arith.cmpi ne, %1, %c0_i32_0 : i32
    scf.if %2 {
      %cst_10 = arith.constant 0.000000e+00 : f32
      %12 = vector.broadcast %cst_10 : f32 to vector<16x96xf32>
      %c0_11 = arith.constant 0 : index
      %c0_12 = arith.constant 0 : index
      %13 = vector.load %arg7[%c0_11, %c0_12] : memref<16x96xf32, #tpu.memory_space<vmem>>, vector<16x96xf32>
      tpu.vector_store %arg7[%c0_11, %c0_12], %12 {strides = array<i32>} : memref<16x96xf32, #tpu.memory_space<vmem>>, vector<16x96xf32>,
    } else {
    }
    %c0 = arith.constant 0 : index
    %c0_1 = arith.constant 0 : index
    %3 = vector.load %arg7[%c0, %c0_1] : memref<16x96xf32, #tpu.memory_space<vmem>>, vector<16x96xf32>
    %c0_2 = arith.constant 0 : index
    %c0_3 = arith.constant 0 : index
    %4 = vector.load %arg3[%c0_2, %c0_3] : memref<16x32xbf16, #tpu.memory_space<vmem>>, vector<16x32xbf16>
    %c0_4 = arith.constant 0 : index
    %c0_5 = arith.constant 0 : index
    %5 = vector.load %arg4[%c0_4, %c0_5] : memref<32x96xbf16, #tpu.memory_space<vmem>>, vector<32x96xbf16>
    %cst = arith.constant dense<0.000000e+00> : vector<16x96xf32>
    %6 = tpu.matmul %4, %5, %cst {dimension_numbers = #tpu.dot_dimension_numbers<[1], [0], [0], [1], [0, 0, 1, 1], [], []>} : vector<16x32xbf16>, vector<32x96xbf16>, vector<16x96xf32> -> vector<16x96xf32>
    %7 = arith.addf %3, %6 : vector<16x96xf32>
    %c0_6 = arith.constant 0 : index
    %c0_7 = arith.constant 0 : index
    %8 = vector.load %arg7[%c0_6, %c0_7] : memref<16x96xf32, #tpu.memory_space<vmem>>, vector<16x96xf32>
    tpu.vector_store %arg7[%c0_6, %c0_7], %7 {strides = array<i32>} : memref<16x96xf32, #tpu.memory_space<vmem>>, vector<16x96xf32>,
    %c0_i32_8 = arith.constant 0 : i32
    %9 = arith.cmpi eq, %arg2, %c0_i32_8 : i32
    %10 = arith.extui %9 : i1 to i32
    %c0_i32_9 = arith.constant 0 : i32
    %11 = arith.cmpi ne, %10, %c0_i32_9 : i32
    scf.if %11 {
      %c0_10 = arith.constant 0 : index
      %c0_11 = arith.constant 0 : index
      %12 = vector.load %arg7[%c0_10, %c0_11] : memref<16x96xf32, #tpu.memory_space<vmem>>, vector<16x96xf32>
      %c0_12 = arith.constant 0 : index
      %c0_13 = arith.constant 0 : index
      %13 = vector.load %arg5[%c0_12, %c0_13] : memref<1x96xf32, #tpu.memory_space<vmem>>, vector<1x96xf32>
      %14 = vector.broadcast %13 : vector<1x96xf32> to vector<16x96xf32>
      %15 = arith.addf %12, %14 : vector<16x96xf32>
      %16 = arith.truncf %15 : vector<16x96xf32> to vector<16x96xbf16>
      %c0_14 = arith.constant 0 : index
      %c0_15 = arith.constant 0 : index
      %17 = vector.load %arg6[%c0_14, %c0_15] : memref<16x96xbf16, #tpu.memory_space<vmem>>, vector<16x96xbf16>
      tpu.vector_store %arg6[%c0_14, %c0_15], %16 {strides = array<i32>} : memref<16x96xbf16, #tpu.memory_space<vmem>>, vector<16x96xbf16>,
    } else {
    }
    return
  }
  func.func @transform_0(%arg0: i32, %arg1: i32, %arg2: i32) -> (i32, i32) {
    %c0_i32 = arith.constant 0 : i32
    return %arg0, %arg2 : i32, i32
  }
  func.func @transform_1(%arg0: i32, %arg1: i32, %arg2: i32) -> (i32, i32) {
    %c0_i32 = arith.constant 0 : i32
    return %arg2, %arg1 : i32, i32
  }
  func.func @transform_2(%arg0: i32, %arg1: i32, %arg2: i32) -> (i32, i32) {
    %c0_i32 = arith.constant 0 : i32
    %c0_i32_0 = arith.constant 0 : i32
    return %c0_i32, %arg1 : i32, i32
  }
  func.func @transform_3(%arg0: i32, %arg1: i32, %arg2: i32) -> (i32, i32) {
    %c0_i32 = arith.constant 0 : i32
    return %arg0, %arg1 : i32, i32
  }
}

module attributes {stable_mosaic.version = 11 : i64} {
  func.func @_linear_res_ln_kernel(%arg0: i32, %arg1: i32, %arg2: memref<16x32xbf16, #tpu.memory_space<vmem>>, %arg3: memref<32x32xbf16, #tpu.memory_space<vmem>>, %arg4: memref<1x32xf32, #tpu.memory_space<vmem>>, %arg5: memref<16x32xbf16, #tpu.memory_space<vmem>>, %arg6: memref<1x32xf32, #tpu.memory_space<vmem>>, %arg7: memref<1x32xf32, #tpu.memory_space<vmem>>, %arg8: memref<16x32xbf16, #tpu.memory_space<vmem>>, %arg9: memref<16x32xf32, #tpu.memory_space<vmem>>) attributes {dimension_semantics = [#tpu.dimension_semantics<parallel>, #tpu.dimension_semantics<arbitrary>], iteration_bounds = array<i64: 1, 1>, scalar_prefetch = 0 : i64, scratch_operands = 1 : i64, tpu.core_type = #tpu.core_type<tc>, window_params = [{transform_indices = @transform_0, window_bounds = array<i64: 16, 32>}, {transform_indices = @transform_1, window_bounds = array<i64: 32, 32>}, {pipeline_mode = #tpu.pipeline_mode<synchronous>, transform_indices = @transform_2, window_bounds = array<i64: 1, 32>}, {transform_indices = @transform_3, window_bounds = array<i64: 16, 32>}, {pipeline_mode = #tpu.pipeline_mode<synchronous>, transform_indices = @transform_4, window_bounds = array<i64: 1, 32>}, {pipeline_mode = #tpu.pipeline_mode<synchronous>, transform_indices = @transform_5, window_bounds = array<i64: 1, 32>}, {transform_indices = @transform_6, window_bounds = array<i64: 16, 32>}]} {
    %c0_i32 = arith.constant 0 : i32
    %0 = arith.cmpi eq, %arg1, %c0_i32 : i32
    %1 = arith.extui %0 : i1 to i32
    %c0_i32_0 = arith.constant 0 : i32
    %2 = arith.cmpi ne, %1, %c0_i32_0 : i32
    scf.if %2 {
      %cst_10 = arith.constant 0.000000e+00 : f32
      %12 = vector.broadcast %cst_10 : f32 to vector<16x32xf32>
      %c0_11 = arith.constant 0 : index
      %c0_12 = arith.constant 0 : index
      %13 = vector.load %arg9[%c0_11, %c0_12] : memref<16x32xf32, #tpu.memory_space<vmem>>, vector<16x32xf32>
      tpu.vector_store %arg9[%c0_11, %c0_12], %12 {strides = array<i32>} : memref<16x32xf32, #tpu.memory_space<vmem>>, vector<16x32xf32>,
    } else {
    }
    %c0 = arith.constant 0 : index
    %c0_1 = arith.constant 0 : index
    %3 = vector.load %arg9[%c0, %c0_1] : memref<16x32xf32, #tpu.memory_space<vmem>>, vector<16x32xf32>
    %c0_2 = arith.constant 0 : index
    %c0_3 = arith.constant 0 : index
    %4 = vector.load %arg2[%c0_2, %c0_3] : memref<16x32xbf16, #tpu.memory_space<vmem>>, vector<16x32xbf16>
    %c0_4 = arith.constant 0 : index
    %c0_5 = arith.constant 0 : index
    %5 = vector.load %arg3[%c0_4, %c0_5] : memref<32x32xbf16, #tpu.memory_space<vmem>>, vector<32x32xbf16>
    %cst = arith.constant dense<0.000000e+00> : vector<16x32xf32>
    %6 = tpu.matmul %4, %5, %cst {dimension_numbers = #tpu.dot_dimension_numbers<[1], [0], [0], [1], [0, 0, 1, 1], [], []>} : vector<16x32xbf16>, vector<32x32xbf16>, vector<16x32xf32> -> vector<16x32xf32>
    %7 = arith.addf %3, %6 : vector<16x32xf32>
    %c0_6 = arith.constant 0 : index
    %c0_7 = arith.constant 0 : index
    %8 = vector.load %arg9[%c0_6, %c0_7] : memref<16x32xf32, #tpu.memory_space<vmem>>, vector<16x32xf32>
    tpu.vector_store %arg9[%c0_6, %c0_7], %7 {strides = array<i32>} : memref<16x32xf32, #tpu.memory_space<vmem>>, vector<16x32xf32>,
    %c0_i32_8 = arith.constant 0 : i32
    %9 = arith.cmpi eq, %arg1, %c0_i32_8 : i32
    %10 = arith.extui %9 : i1 to i32
    %c0_i32_9 = arith.constant 0 : i32
    %11 = arith.cmpi ne, %10, %c0_i32_9 : i32
    scf.if %11 {
      %c0_10 = arith.constant 0 : index
      %c0_11 = arith.constant 0 : index
      %12 = vector.load %arg9[%c0_10, %c0_11] : memref<16x32xf32, #tpu.memory_space<vmem>>, vector<16x32xf32>
      %c0_12 = arith.constant 0 : index
      %c0_13 = arith.constant 0 : index
      %13 = vector.load %arg4[%c0_12, %c0_13] : memref<1x32xf32, #tpu.memory_space<vmem>>, vector<1x32xf32>
      %14 = vector.broadcast %13 : vector<1x32xf32> to vector<16x32xf32>
      %15 = arith.addf %12, %14 : vector<16x32xf32>
      %c0_14 = arith.constant 0 : index
      %c0_15 = arith.constant 0 : index
      %16 = vector.load %arg5[%c0_14, %c0_15] : memref<16x32xbf16, #tpu.memory_space<vmem>>, vector<16x32xbf16>
      %17 = arith.extf %16 : vector<16x32xbf16> to vector<16x32xf32>
      %18 = arith.addf %15, %17 : vector<16x32xf32>
      %cst_16 = arith.constant dense<0.000000e+00> : vector<16xf32>
      %19 = vector.multi_reduction <add>, %18, %cst_16 [1] : vector<16x32xf32> to vector<16xf32>
      %20 = vector.shape_cast %19 : vector<16xf32> to vector<16x1xf32>
      %cst_17 = arith.constant 3.200000e+01 : f32
      %21 = vector.broadcast %cst_17 : f32 to vector<16x1xf32>
      %22 = arith.divf %20, %21 : vector<16x1xf32>
      %23 = vector.broadcast %22 : vector<16x1xf32> to vector<16x32xf32>
      %24 = arith.subf %18, %23 : vector<16x32xf32>
      %25 = arith.mulf %24, %24 : vector<16x32xf32>
      %cst_18 = arith.constant dense<0.000000e+00> : vector<16xf32>
      %26 = vector.multi_reduction <add>, %25, %cst_18 [1] : vector<16x32xf32> to vector<16xf32>
      %27 = vector.shape_cast %26 : vector<16xf32> to vector<16x1xf32>
      %cst_19 = arith.constant 3.200000e+01 : f32
      %28 = vector.broadcast %cst_19 : f32 to vector<16x1xf32>
      %29 = arith.divf %27, %28 : vector<16x1xf32>
      %30 = vector.broadcast %22 : vector<16x1xf32> to vector<16x32xf32>
      %31 = arith.subf %18, %30 : vector<16x32xf32>
      %cst_20 = arith.constant 9.99999974E-6 : f32
      %32 = vector.broadcast %cst_20 : f32 to vector<16x1xf32>
      %33 = arith.addf %29, %32 : vector<16x1xf32>
      %34 = math.rsqrt %33 : vector<16x1xf32>
      %35 = vector.broadcast %34 : vector<16x1xf32> to vector<16x32xf32>
      %36 = arith.mulf %31, %35 : vector<16x32xf32>
      %c0_21 = arith.constant 0 : index
      %c0_22 = arith.constant 0 : index
      %37 = vector.load %arg6[%c0_21, %c0_22] : memref<1x32xf32, #tpu.memory_space<vmem>>, vector<1x32xf32>
      %38 = vector.broadcast %37 : vector<1x32xf32> to vector<16x32xf32>
      %39 = arith.mulf %36, %38 : vector<16x32xf32>
      %c0_23 = arith.constant 0 : index
      %c0_24 = arith.constant 0 : index
      %40 = vector.load %arg7[%c0_23, %c0_24] : memref<1x32xf32, #tpu.memory_space<vmem>>, vector<1x32xf32>
      %41 = vector.broadcast %40 : vector<1x32xf32> to vector<16x32xf32>
      %42 = arith.addf %39, %41 : vector<16x32xf32>
      %43 = arith.truncf %42 : vector<16x32xf32> to vector<16x32xbf16>
      %c0_25 = arith.constant 0 : index
      %c0_26 = arith.constant 0 : index
      %44 = vector.load %arg8[%c0_25, %c0_26] : memref<16x32xbf16, #tpu.memory_space<vmem>>, vector<16x32xbf16>
      tpu.vector_store %arg8[%c0_25, %c0_26], %43 {strides = array<i32>} : memref<16x32xbf16, #tpu.memory_space<vmem>>, vector<16x32xbf16>,
    } else {
    }
    return
  }
  func.func @transform_0(%arg0: i32, %arg1: i32) -> (i32, i32) {
    %c0_i32 = arith.constant 0 : i32
    return %arg0, %arg1 : i32, i32
  }
  func.func @transform_1(%arg0: i32, %arg1: i32) -> (i32, i32) {
    %c0_i32 = arith.constant 0 : i32
    %c0_i32_0 = arith.constant 0 : i32
    return %arg1, %c0_i32 : i32, i32
  }
  func.func @transform_2(%arg0: i32, %arg1: i32) -> (i32, i32) {
    %c0_i32 = arith.constant 0 : i32
    %c0_i32_0 = arith.constant 0 : i32
    %c0_i32_1 = arith.constant 0 : i32
    return %c0_i32, %c0_i32_0 : i32, i32
  }
  func.func @transform_3(%arg0: i32, %arg1: i32) -> (i32, i32) {
    %c0_i32 = arith.constant 0 : i32
    %c0_i32_0 = arith.constant 0 : i32
    return %arg0, %c0_i32 : i32, i32
  }
  func.func @transform_4(%arg0: i32, %arg1: i32) -> (i32, i32) {
    %c0_i32 = arith.constant 0 : i32
    %c0_i32_0 = arith.constant 0 : i32
    %c0_i32_1 = arith.constant 0 : i32
    return %c0_i32, %c0_i32_0 : i32, i32
  }
  func.func @transform_5(%arg0: i32, %arg1: i32) -> (i32, i32) {
    %c0_i32 = arith.constant 0 : i32
    %c0_i32_0 = arith.constant 0 : i32
    %c0_i32_1 = arith.constant 0 : i32
    return %c0_i32, %c0_i32_0 : i32, i32
  }
  func.func @transform_6(%arg0: i32, %arg1: i32) -> (i32, i32) {
    %c0_i32 = arith.constant 0 : i32
    %c0_i32_0 = arith.constant 0 : i32
    return %arg0, %c0_i32 : i32, i32
  }
}

module attributes {stable_mosaic.version = 11 : i64} {
  func.func @_self_attn_kernel(%arg0: i32, %arg1: memref<1x8x96xbf16, #tpu.memory_space<vmem>>, %arg2: memref<1x1x8xf32, #tpu.memory_space<vmem>>, %arg3: memref<1x8x32xbf16, #tpu.memory_space<vmem>>) attributes {dimension_semantics = [#tpu.dimension_semantics<parallel>], iteration_bounds = array<i64: 2>, scalar_prefetch = 0 : i64, scratch_operands = 0 : i64, tpu.core_type = #tpu.core_type<tc>, window_params = [{transform_indices = @transform_0, window_bounds = array<i64: 1, 8, 96>}, {transform_indices = @transform_1, window_bounds = array<i64: 1, 1, 8>}, {transform_indices = @transform_2, window_bounds = array<i64: 1, 8, 32>}]} {
    %c0 = arith.constant 0 : index
    %c0_0 = arith.constant 0 : index
    %c0_1 = arith.constant 0 : index
    %0 = vector.load %arg1[%c0, %c0_0, %c0_1] : memref<1x8x96xbf16, #tpu.memory_space<vmem>>, vector<1x8x96xbf16>
    %1 = vector.shape_cast %0 : vector<1x8x96xbf16> to vector<8x96xbf16>
    %c0_2 = arith.constant 0 : index
    %c0_3 = arith.constant 0 : index
    %c0_4 = arith.constant 0 : index
    %2 = vector.load %arg2[%c0_2, %c0_3, %c0_4] : memref<1x1x8xf32, #tpu.memory_space<vmem>>, vector<1x1x8xf32>
    %3 = vector.shape_cast %2 : vector<1x1x8xf32> to vector<1x8xf32>
    %4 = vector.extract_strided_slice %1 {offsets = [0, 0], sizes = [8, 32], strides = [1, 1]} : vector<8x96xbf16> to vector<8x32xbf16>
    %5 = vector.extract_strided_slice %1 {offsets = [0, 32], sizes = [8, 32], strides = [1, 1]} : vector<8x96xbf16> to vector<8x32xbf16>
    %6 = vector.extract_strided_slice %1 {offsets = [0, 64], sizes = [8, 32], strides = [1, 1]} : vector<8x96xbf16> to vector<8x32xbf16>
    %7 = vector.extract_strided_slice %4 {offsets = [0, 0], sizes = [8, 8], strides = [1, 1]} : vector<8x32xbf16> to vector<8x8xbf16>
    %8 = vector.extract_strided_slice %5 {offsets = [0, 0], sizes = [8, 8], strides = [1, 1]} : vector<8x32xbf16> to vector<8x8xbf16>
    %cst = arith.constant dense<0.000000e+00> : vector<8x8xf32>
    %9 = tpu.matmul %7, %8, %cst {dimension_numbers = #tpu.dot_dimension_numbers<[1], [1], [0], [0], [0, 0, 1, 0], [], []>} : vector<8x8xbf16>, vector<8x8xbf16>, vector<8x8xf32> -> vector<8x8xf32>
    %10 = vector.broadcast %3 : vector<1x8xf32> to vector<8x8xf32>
    %11 = arith.addf %9, %10 : vector<8x8xf32>
    %cst_5 = arith.constant dense<0xFF800000> : vector<8xf32>
    %12 = vector.multi_reduction <maximumf>, %11, %cst_5 [1] : vector<8x8xf32> to vector<8xf32>
    %13 = vector.shape_cast %12 : vector<8xf32> to vector<8x1xf32>
    %14 = vector.broadcast %13 : vector<8x1xf32> to vector<8x8xf32>
    %15 = arith.subf %11, %14 : vector<8x8xf32>
    %16 = math.exp %15 : vector<8x8xf32>
    %cst_6 = arith.constant dense<0.000000e+00> : vector<8xf32>
    %17 = vector.multi_reduction <add>, %16, %cst_6 [1] : vector<8x8xf32> to vector<8xf32>
    %18 = vector.shape_cast %17 : vector<8xf32> to vector<8x1xf32>
    %19 = tpu.reciprocal %18 {approx = true} : vector<8x1xf32> -> vector<8x1xf32>
    %20 = vector.broadcast %19 : vector<8x1xf32> to vector<8x8xf32>
    %21 = arith.mulf %16, %20 : vector<8x8xf32>
    %22 = arith.truncf %21 : vector<8x8xf32> to vector<8x8xbf16>
    %23 = vector.extract_strided_slice %6 {offsets = [0, 0], sizes = [8, 8], strides = [1, 1]} : vector<8x32xbf16> to vector<8x8xbf16>
    %cst_7 = arith.constant dense<0.000000e+00> : vector<8x8xf32>
    %24 = tpu.matmul %22, %23, %cst_7 {dimension_numbers = #tpu.dot_dimension_numbers<[1], [0], [0], [1], [0, 0, 1, 1], [], []>} : vector<8x8xbf16>, vector<8x8xbf16>, vector<8x8xf32> -> vector<8x8xf32>
    %25 = arith.truncf %24 : vector<8x8xf32> to vector<8x8xbf16>
    %c0_8 = arith.constant 0 : index
    %c0_9 = arith.constant 0 : index
    %c0_10 = arith.constant 0 : index
    %26 = vector.load %arg3[%c0_8, %c0_9, %c0_10] : memref<1x8x32xbf16, #tpu.memory_space<vmem>>, vector<1x8x8xbf16>
    %27 = vector.shape_cast %26 : vector<1x8x8xbf16> to vector<8x8xbf16>
    %28 = vector.shape_cast %25 : vector<8x8xbf16> to vector<1x8x8xbf16>
    tpu.vector_store %arg3[%c0_8, %c0_9, %c0_10], %28 {strides = array<i32>} : memref<1x8x32xbf16, #tpu.memory_space<vmem>>, vector<1x8x8xbf16>,
    %29 = vector.extract_strided_slice %4 {offsets = [0, 8], sizes = [8, 8], strides = [1, 1]} : vector<8x32xbf16> to vector<8x8xbf16>
    %30 = vector.extract_strided_slice %5 {offsets = [0, 8], sizes = [8, 8], strides = [1, 1]} : vector<8x32xbf16> to vector<8x8xbf16>
    %cst_11 = arith.constant dense<0.000000e+00> : vector<8x8xf32>
    %31 = tpu.matmul %29, %30, %cst_11 {dimension_numbers = #tpu.dot_dimension_numbers<[1], [1], [0], [0], [0, 0, 1, 0], [], []>} : vector<8x8xbf16>, vector<8x8xbf16>, vector<8x8xf32> -> vector<8x8xf32>
    %32 = vector.broadcast %3 : vector<1x8xf32> to vector<8x8xf32>
    %33 = arith.addf %31, %32 : vector<8x8xf32>
    %cst_12 = arith.constant dense<0xFF800000> : vector<8xf32>
    %34 = vector.multi_reduction <maximumf>, %33, %cst_12 [1] : vector<8x8xf32> to vector<8xf32>
    %35 = vector.shape_cast %34 : vector<8xf32> to vector<8x1xf32>
    %36 = vector.broadcast %35 : vector<8x1xf32> to vector<8x8xf32>
    %37 = arith.subf %33, %36 : vector<8x8xf32>
    %38 = math.exp %37 : vector<8x8xf32>
    %cst_13 = arith.constant dense<0.000000e+00> : vector<8xf32>
    %39 = vector.multi_reduction <add>, %38, %cst_13 [1] : vector<8x8xf32> to vector<8xf32>
    %40 = vector.shape_cast %39 : vector<8xf32> to vector<8x1xf32>
    %41 = tpu.reciprocal %40 {approx = true} : vector<8x1xf32> -> vector<8x1xf32>
    %42 = vector.broadcast %41 : vector<8x1xf32> to vector<8x8xf32>
    %43 = arith.mulf %38, %42 : vector<8x8xf32>
    %44 = arith.truncf %43 : vector<8x8xf32> to vector<8x8xbf16>
    %45 = vector.extract_strided_slice %6 {offsets = [0, 8], sizes = [8, 8], strides = [1, 1]} : vector<8x32xbf16> to vector<8x8xbf16>
    %cst_14 = arith.constant dense<0.000000e+00> : vector<8x8xf32>
    %46 = tpu.matmul %44, %45, %cst_14 {dimension_numbers = #tpu.dot_dimension_numbers<[1], [0], [0], [1], [0, 0, 1, 1], [], []>} : vector<8x8xbf16>, vector<8x8xbf16>, vector<8x8xf32> -> vector<8x8xf32>
    %47 = arith.truncf %46 : vector<8x8xf32> to vector<8x8xbf16>
    %c0_15 = arith.constant 0 : index
    %c0_16 = arith.constant 0 : index
    %c8 = arith.constant 8 : index
    %48 = vector.load %arg3[%c0_15, %c0_16, %c8] : memref<1x8x32xbf16, #tpu.memory_space<vmem>>, vector<1x8x8xbf16>
    %49 = vector.shape_cast %48 : vector<1x8x8xbf16> to vector<8x8xbf16>
    %50 = vector.shape_cast %47 : vector<8x8xbf16> to vector<1x8x8xbf16>
    tpu.vector_store %arg3[%c0_15, %c0_16, %c8], %50 {strides = array<i32>} : memref<1x8x32xbf16, #tpu.memory_space<vmem>>, vector<1x8x8xbf16>,
    %51 = vector.extract_strided_slice %4 {offsets = [0, 16], sizes = [8, 8], strides = [1, 1]} : vector<8x32xbf16> to vector<8x8xbf16>
    %52 = vector.extract_strided_slice %5 {offsets = [0, 16], sizes = [8, 8], strides = [1, 1]} : vector<8x32xbf16> to vector<8x8xbf16>
    %cst_17 = arith.constant dense<0.000000e+00> : vector<8x8xf32>
    %53 = tpu.matmul %51, %52, %cst_17 {dimension_numbers = #tpu.dot_dimension_numbers<[1], [1], [0], [0], [0, 0, 1, 0], [], []>} : vector<8x8xbf16>, vector<8x8xbf16>, vector<8x8xf32> -> vector<8x8xf32>
    %54 = vector.broadcast %3 : vector<1x8xf32> to vector<8x8xf32>
    %55 = arith.addf %53, %54 : vector<8x8xf32>
    %cst_18 = arith.constant dense<0xFF800000> : vector<8xf32>
    %56 = vector.multi_reduction <maximumf>, %55, %cst_18 [1] : vector<8x8xf32> to vector<8xf32>
    %57 = vector.shape_cast %56 : vector<8xf32> to vector<8x1xf32>
    %58 = vector.broadcast %57 : vector<8x1xf32> to vector<8x8xf32>
    %59 = arith.subf %55, %58 : vector<8x8xf32>
    %60 = math.exp %59 : vector<8x8xf32>
    %cst_19 = arith.constant dense<0.000000e+00> : vector<8xf32>
    %61 = vector.multi_reduction <add>, %60, %cst_19 [1] : vector<8x8xf32> to vector<8xf32>
    %62 = vector.shape_cast %61 : vector<8xf32> to vector<8x1xf32>
    %63 = tpu.reciprocal %62 {approx = true} : vector<8x1xf32> -> vector<8x1xf32>
    %64 = vector.broadcast %63 : vector<8x1xf32> to vector<8x8xf32>
    %65 = arith.mulf %60, %64 : vector<8x8xf32>
    %66 = arith.truncf %65 : vector<8x8xf32> to vector<8x8xbf16>
    %67 = vector.extract_strided_slice %6 {offsets = [0, 16], sizes = [8, 8], strides = [1, 1]} : vector<8x32xbf16> to vector<8x8xbf16>
    %cst_20 = arith.constant dense<0.000000e+00> : vector<8x8xf32>
    %68 = tpu.matmul %66, %67, %cst_20 {dimension_numbers = #tpu.dot_dimension_numbers<[1], [0], [0], [1], [0, 0, 1, 1], [], []>} : vector<8x8xbf16>, vector<8x8xbf16>, vector<8x8xf32> -> vector<8x8xf32>
    %69 = arith.truncf %68 : vector<8x8xf32> to vector<8x8xbf16>
    %c0_21 = arith.constant 0 : index
    %c0_22 = arith.constant 0 : index
    %c16 = arith.constant 16 : index
    %70 = vector.load %arg3[%c0_21, %c0_22, %c16] : memref<1x8x32xbf16, #tpu.memory_space<vmem>>, vector<1x8x8xbf16>
    %71 = vector.shape_cast %70 : vector<1x8x8xbf16> to vector<8x8xbf16>
    %72 = vector.shape_cast %69 : vector<8x8xbf16> to vector<1x8x8xbf16>
    tpu.vector_store %arg3[%c0_21, %c0_22, %c16], %72 {strides = array<i32>} : memref<1x8x32xbf16, #tpu.memory_space<vmem>>, vector<1x8x8xbf16>,
    %73 = vector.extract_strided_slice %4 {offsets = [0, 24], sizes = [8, 8], strides = [1, 1]} : vector<8x32xbf16> to vector<8x8xbf16>
    %74 = vector.extract_strided_slice %5 {offsets = [0, 24], sizes = [8, 8], strides = [1, 1]} : vector<8x32xbf16> to vector<8x8xbf16>
    %cst_23 = arith.constant dense<0.000000e+00> : vector<8x8xf32>
    %75 = tpu.matmul %73, %74, %cst_23 {dimension_numbers = #tpu.dot_dimension_numbers<[1], [1], [0], [0], [0, 0, 1, 0], [], []>} : vector<8x8xbf16>, vector<8x8xbf16>, vector<8x8xf32> -> vector<8x8xf32>
    %76 = vector.broadcast %3 : vector<1x8xf32> to vector<8x8xf32>
    %77 = arith.addf %75, %76 : vector<8x8xf32>
    %cst_24 = arith.constant dense<0xFF800000> : vector<8xf32>
    %78 = vector.multi_reduction <maximumf>, %77, %cst_24 [1] : vector<8x8xf32> to vector<8xf32>
    %79 = vector.shape_cast %78 : vector<8xf32> to vector<8x1xf32>
    %80 = vector.broadcast %79 : vector<8x1xf32> to vector<8x8xf32>
    %81 = arith.subf %77, %80 : vector<8x8xf32>
    %82 = math.exp %81 : vector<8x8xf32>
    %cst_25 = arith.constant dense<0.000000e+00> : vector<8xf32>
    %83 = vector.multi_reduction <add>, %82, %cst_25 [1] : vector<8x8xf32> to vector<8xf32>
    %84 = vector.shape_cast %83 : vector<8xf32> to vector<8x1xf32>
    %85 = tpu.reciprocal %84 {approx = true} : vector<8x1xf32> -> vector<8x1xf32>
    %86 = vector.broadcast %85 : vector<8x1xf32> to vector<8x8xf32>
    %87 = arith.mulf %82, %86 : vector<8x8xf32>
    %88 = arith.truncf %87 : vector<8x8xf32> to vector<8x8xbf16>
    %89 = vector.extract_strided_slice %6 {offsets = [0, 24], sizes = [8, 8], strides = [1, 1]} : vector<8x32xbf16> to vector<8x8xbf16>
    %cst_26 = arith.constant dense<0.000000e+00> : vector<8x8xf32>
    %90 = tpu.matmul %88, %89, %cst_26 {dimension_numbers = #tpu.dot_dimension_numbers<[1], [0], [0], [1], [0, 0, 1, 1], [], []>} : vector<8x8xbf16>, vector<8x8xbf16>, vector<8x8xf32> -> vector<8x8xf32>
    %91 = arith.truncf %90 : vector<8x8xf32> to vector<8x8xbf16>
    %c0_27 = arith.constant 0 : index
    %c0_28 = arith.constant 0 : index
    %c24 = arith.constant 24 : index
    %92 = vector.load %arg3[%c0_27, %c0_28, %c24] : memref<1x8x32xbf16, #tpu.memory_space<vmem>>, vector<1x8x8xbf16>
    %93 = vector.shape_cast %92 : vector<1x8x8xbf16> to vector<8x8xbf16>
    %94 = vector.shape_cast %91 : vector<8x8xbf16> to vector<1x8x8xbf16>
    tpu.vector_store %arg3[%c0_27, %c0_28, %c24], %94 {strides = array<i32>} : memref<1x8x32xbf16, #tpu.memory_space<vmem>>, vector<1x8x8xbf16>,
    return
  }
  func.func @transform_0(%arg0: i32) -> (i32, i32, i32) {
    %c0_i32 = arith.constant 0 : i32
    %c0_i32_0 = arith.constant 0 : i32
    %c0_i32_1 = arith.constant 0 : i32
    return %arg0, %c0_i32, %c0_i32_0 : i32, i32, i32
  }
  func.func @transform_1(%arg0: i32) -> (i32, i32, i32) {
    %c0_i32 = arith.constant 0 : i32
    %c0_i32_0 = arith.constant 0 : i32
    %c0_i32_1 = arith.constant 0 : i32
    return %arg0, %c0_i32, %c0_i32_0 : i32, i32, i32
  }
  func.func @transform_2(%arg0: i32) -> (i32, i32, i32) {
    %c0_i32 = arith.constant 0 : i32
    %c0_i32_0 = arith.constant 0 : i32
    %c0_i32_1 = arith.constant 0 : i32
    return %arg0, %c0_i32, %c0_i32_0 : i32, i32, i32
  }
}

module attributes {stable_mosaic.version = 11 : i64} {
  func.func @_matmul_kernel(%arg0: i32, %arg1: i32, %arg2: i32, %arg3: memref<16x32xbf16, #tpu.memory_space<vmem>>, %arg4: memref<32x64xbf16, #tpu.memory_space<vmem>>, %arg5: memref<1x64xf32, #tpu.memory_space<vmem>>, %arg6: memref<16x64xbf16, #tpu.memory_space<vmem>>, %arg7: memref<16x64xf32, #tpu.memory_space<vmem>>) attributes {dimension_semantics = [#tpu.dimension_semantics<parallel>, #tpu.dimension_semantics<parallel>, #tpu.dimension_semantics<arbitrary>], iteration_bounds = array<i64: 1, 1, 1>, scalar_prefetch = 0 : i64, scratch_operands = 1 : i64, tpu.core_type = #tpu.core_type<tc>, window_params = [{transform_indices = @transform_0, window_bounds = array<i64: 16, 32>}, {transform_indices = @transform_1, window_bounds = array<i64: 32, 64>}, {transform_indices = @transform_2, window_bounds = array<i64: 1, 64>}, {transform_indices = @transform_3, window_bounds = array<i64: 16, 64>}]} {
    %c0_i32 = arith.constant 0 : i32
    %0 = arith.cmpi eq, %arg2, %c0_i32 : i32
    %1 = arith.extui %0 : i1 to i32
    %c0_i32_0 = arith.constant 0 : i32
    %2 = arith.cmpi ne, %1, %c0_i32_0 : i32
    scf.if %2 {
      %cst_10 = arith.constant 0.000000e+00 : f32
      %12 = vector.broadcast %cst_10 : f32 to vector<16x64xf32>
      %c0_11 = arith.constant 0 : index
      %c0_12 = arith.constant 0 : index
      %13 = vector.load %arg7[%c0_11, %c0_12] : memref<16x64xf32, #tpu.memory_space<vmem>>, vector<16x64xf32>
      tpu.vector_store %arg7[%c0_11, %c0_12], %12 {strides = array<i32>} : memref<16x64xf32, #tpu.memory_space<vmem>>, vector<16x64xf32>,
    } else {
    }
    %c0 = arith.constant 0 : index
    %c0_1 = arith.constant 0 : index
    %3 = vector.load %arg7[%c0, %c0_1] : memref<16x64xf32, #tpu.memory_space<vmem>>, vector<16x64xf32>
    %c0_2 = arith.constant 0 : index
    %c0_3 = arith.constant 0 : index
    %4 = vector.load %arg3[%c0_2, %c0_3] : memref<16x32xbf16, #tpu.memory_space<vmem>>, vector<16x32xbf16>
    %c0_4 = arith.constant 0 : index
    %c0_5 = arith.constant 0 : index
    %5 = vector.load %arg4[%c0_4, %c0_5] : memref<32x64xbf16, #tpu.memory_space<vmem>>, vector<32x64xbf16>
    %cst = arith.constant dense<0.000000e+00> : vector<16x64xf32>
    %6 = tpu.matmul %4, %5, %cst {dimension_numbers = #tpu.dot_dimension_numbers<[1], [0], [0], [1], [0, 0, 1, 1], [], []>} : vector<16x32xbf16>, vector<32x64xbf16>, vector<16x64xf32> -> vector<16x64xf32>
    %7 = arith.addf %3, %6 : vector<16x64xf32>
    %c0_6 = arith.constant 0 : index
    %c0_7 = arith.constant 0 : index
    %8 = vector.load %arg7[%c0_6, %c0_7] : memref<16x64xf32, #tpu.memory_space<vmem>>, vector<16x64xf32>
    tpu.vector_store %arg7[%c0_6, %c0_7], %7 {strides = array<i32>} : memref<16x64xf32, #tpu.memory_space<vmem>>, vector<16x64xf32>,
    %c0_i32_8 = arith.constant 0 : i32
    %9 = arith.cmpi eq, %arg2, %c0_i32_8 : i32
    %10 = arith.extui %9 : i1 to i32
    %c0_i32_9 = arith.constant 0 : i32
    %11 = arith.cmpi ne, %10, %c0_i32_9 : i32
    scf.if %11 {
      %c0_10 = arith.constant 0 : index
      %c0_11 = arith.constant 0 : index
      %12 = vector.load %arg7[%c0_10, %c0_11] : memref<16x64xf32, #tpu.memory_space<vmem>>, vector<16x64xf32>
      %c0_12 = arith.constant 0 : index
      %c0_13 = arith.constant 0 : index
      %13 = vector.load %arg5[%c0_12, %c0_13] : memref<1x64xf32, #tpu.memory_space<vmem>>, vector<1x64xf32>
      %14 = vector.broadcast %13 : vector<1x64xf32> to vector<16x64xf32>
      %15 = arith.addf %12, %14 : vector<16x64xf32>
      %cst_14 = arith.constant 0.000000e+00 : f32
      %16 = vector.broadcast %cst_14 : f32 to vector<16x64xf32>
      %17 = arith.maximumf %15, %16 : vector<16x64xf32>
      %18 = arith.truncf %17 : vector<16x64xf32> to vector<16x64xbf16>
      %c0_15 = arith.constant 0 : index
      %c0_16 = arith.constant 0 : index
      %19 = vector.load %arg6[%c0_15, %c0_16] : memref<16x64xbf16, #tpu.memory_space<vmem>>, vector<16x64xbf16>
      tpu.vector_store %arg6[%c0_15, %c0_16], %18 {strides = array<i32>} : memref<16x64xbf16, #tpu.memory_space<vmem>>, vector<16x64xbf16>,
    } else {
    }
    return
  }
  func.func @transform_0(%arg0: i32, %arg1: i32, %arg2: i32) -> (i32, i32) {
    %c0_i32 = arith.constant 0 : i32
    return %arg0, %arg2 : i32, i32
  }
  func.func @transform_1(%arg0: i32, %arg1: i32, %arg2: i32) -> (i32, i32) {
    %c0_i32 = arith.constant 0 : i32
    return %arg2, %arg1 : i32, i32
  }
  func.func @transform_2(%arg0: i32, %arg1: i32, %arg2: i32) -> (i32, i32) {
    %c0_i32 = arith.constant 0 : i32
    %c0_i32_0 = arith.constant 0 : i32
    return %c0_i32, %arg1 : i32, i32
  }
  func.func @transform_3(%arg0: i32, %arg1: i32, %arg2: i32) -> (i32, i32) {
    %c0_i32 = arith.constant 0 : i32
    return %arg0, %arg1 : i32, i32
  }
}

module attributes {stable_mosaic.version = 11 : i64} {
  func.func @_linear_res_ln_kernel(%arg0: i32, %arg1: i32, %arg2: memref<16x64xbf16, #tpu.memory_space<vmem>>, %arg3: memref<64x32xbf16, #tpu.memory_space<vmem>>, %arg4: memref<1x32xf32, #tpu.memory_space<vmem>>, %arg5: memref<16x32xbf16, #tpu.memory_space<vmem>>, %arg6: memref<1x32xf32, #tpu.memory_space<vmem>>, %arg7: memref<1x32xf32, #tpu.memory_space<vmem>>, %arg8: memref<16x32xbf16, #tpu.memory_space<vmem>>, %arg9: memref<16x32xf32, #tpu.memory_space<vmem>>) attributes {dimension_semantics = [#tpu.dimension_semantics<parallel>, #tpu.dimension_semantics<arbitrary>], iteration_bounds = array<i64: 1, 1>, scalar_prefetch = 0 : i64, scratch_operands = 1 : i64, tpu.core_type = #tpu.core_type<tc>, window_params = [{transform_indices = @transform_0, window_bounds = array<i64: 16, 64>}, {transform_indices = @transform_1, window_bounds = array<i64: 64, 32>}, {pipeline_mode = #tpu.pipeline_mode<synchronous>, transform_indices = @transform_2, window_bounds = array<i64: 1, 32>}, {transform_indices = @transform_3, window_bounds = array<i64: 16, 32>}, {pipeline_mode = #tpu.pipeline_mode<synchronous>, transform_indices = @transform_4, window_bounds = array<i64: 1, 32>}, {pipeline_mode = #tpu.pipeline_mode<synchronous>, transform_indices = @transform_5, window_bounds = array<i64: 1, 32>}, {transform_indices = @transform_6, window_bounds = array<i64: 16, 32>}]} {
    %c0_i32 = arith.constant 0 : i32
    %0 = arith.cmpi eq, %arg1, %c0_i32 : i32
    %1 = arith.extui %0 : i1 to i32
    %c0_i32_0 = arith.constant 0 : i32
    %2 = arith.cmpi ne, %1, %c0_i32_0 : i32
    scf.if %2 {
      %cst_10 = arith.constant 0.000000e+00 : f32
      %12 = vector.broadcast %cst_10 : f32 to vector<16x32xf32>
      %c0_11 = arith.constant 0 : index
      %c0_12 = arith.constant 0 : index
      %13 = vector.load %arg9[%c0_11, %c0_12] : memref<16x32xf32, #tpu.memory_space<vmem>>, vector<16x32xf32>
      tpu.vector_store %arg9[%c0_11, %c0_12], %12 {strides = array<i32>} : memref<16x32xf32, #tpu.memory_space<vmem>>, vector<16x32xf32>,
    } else {
    }
    %c0 = arith.constant 0 : index
    %c0_1 = arith.constant 0 : index
    %3 = vector.load %arg9[%c0, %c0_1] : memref<16x32xf32, #tpu.memory_space<vmem>>, vector<16x32xf32>
    %c0_2 = arith.constant 0 : index
    %c0_3 = arith.constant 0 : index
    %4 = vector.load %arg2[%c0_2, %c0_3] : memref<16x64xbf16, #tpu.memory_space<vmem>>, vector<16x64xbf16>
    %c0_4 = arith.constant 0 : index
    %c0_5 = arith.constant 0 : index
    %5 = vector.load %arg3[%c0_4, %c0_5] : memref<64x32xbf16, #tpu.memory_space<vmem>>, vector<64x32xbf16>
    %cst = arith.constant dense<0.000000e+00> : vector<16x32xf32>
    %6 = tpu.matmul %4, %5, %cst {dimension_numbers = #tpu.dot_dimension_numbers<[1], [0], [0], [1], [0, 0, 1, 1], [], []>} : vector<16x64xbf16>, vector<64x32xbf16>, vector<16x32xf32> -> vector<16x32xf32>
    %7 = arith.addf %3, %6 : vector<16x32xf32>
    %c0_6 = arith.constant 0 : index
    %c0_7 = arith.constant 0 : index
    %8 = vector.load %arg9[%c0_6, %c0_7] : memref<16x32xf32, #tpu.memory_space<vmem>>, vector<16x32xf32>
    tpu.vector_store %arg9[%c0_6, %c0_7], %7 {strides = array<i32>} : memref<16x32xf32, #tpu.memory_space<vmem>>, vector<16x32xf32>,
    %c0_i32_8 = arith.constant 0 : i32
    %9 = arith.cmpi eq, %arg1, %c0_i32_8 : i32
    %10 = arith.extui %9 : i1 to i32
    %c0_i32_9 = arith.constant 0 : i32
    %11 = arith.cmpi ne, %10, %c0_i32_9 : i32
    scf.if %11 {
      %c0_10 = arith.constant 0 : index
      %c0_11 = arith.constant 0 : index
      %12 = vector.load %arg9[%c0_10, %c0_11] : memref<16x32xf32, #tpu.memory_space<vmem>>, vector<16x32xf32>
      %c0_12 = arith.constant 0 : index
      %c0_13 = arith.constant 0 : index
      %13 = vector.load %arg4[%c0_12, %c0_13] : memref<1x32xf32, #tpu.memory_space<vmem>>, vector<1x32xf32>
      %14 = vector.broadcast %13 : vector<1x32xf32> to vector<16x32xf32>
      %15 = arith.addf %12, %14 : vector<16x32xf32>
      %c0_14 = arith.constant 0 : index
      %c0_15 = arith.constant 0 : index
      %16 = vector.load %arg5[%c0_14, %c0_15] : memref<16x32xbf16, #tpu.memory_space<vmem>>, vector<16x32xbf16>
      %17 = arith.extf %16 : vector<16x32xbf16> to vector<16x32xf32>
      %18 = arith.addf %15, %17 : vector<16x32xf32>
      %cst_16 = arith.constant dense<0.000000e+00> : vector<16xf32>
      %19 = vector.multi_reduction <add>, %18, %cst_16 [1] : vector<16x32xf32> to vector<16xf32>
      %20 = vector.shape_cast %19 : vector<16xf32> to vector<16x1xf32>
      %cst_17 = arith.constant 3.200000e+01 : f32
      %21 = vector.broadcast %cst_17 : f32 to vector<16x1xf32>
      %22 = arith.divf %20, %21 : vector<16x1xf32>
      %23 = vector.broadcast %22 : vector<16x1xf32> to vector<16x32xf32>
      %24 = arith.subf %18, %23 : vector<16x32xf32>
      %25 = arith.mulf %24, %24 : vector<16x32xf32>
      %cst_18 = arith.constant dense<0.000000e+00> : vector<16xf32>
      %26 = vector.multi_reduction <add>, %25, %cst_18 [1] : vector<16x32xf32> to vector<16xf32>
      %27 = vector.shape_cast %26 : vector<16xf32> to vector<16x1xf32>
      %cst_19 = arith.constant 3.200000e+01 : f32
      %28 = vector.broadcast %cst_19 : f32 to vector<16x1xf32>
      %29 = arith.divf %27, %28 : vector<16x1xf32>
      %30 = vector.broadcast %22 : vector<16x1xf32> to vector<16x32xf32>
      %31 = arith.subf %18, %30 : vector<16x32xf32>
      %cst_20 = arith.constant 9.99999974E-6 : f32
      %32 = vector.broadcast %cst_20 : f32 to vector<16x1xf32>
      %33 = arith.addf %29, %32 : vector<16x1xf32>
      %34 = math.rsqrt %33 : vector<16x1xf32>
      %35 = vector.broadcast %34 : vector<16x1xf32> to vector<16x32xf32>
      %36 = arith.mulf %31, %35 : vector<16x32xf32>
      %c0_21 = arith.constant 0 : index
      %c0_22 = arith.constant 0 : index
      %37 = vector.load %arg6[%c0_21, %c0_22] : memref<1x32xf32, #tpu.memory_space<vmem>>, vector<1x32xf32>
      %38 = vector.broadcast %37 : vector<1x32xf32> to vector<16x32xf32>
      %39 = arith.mulf %36, %38 : vector<16x32xf32>
      %c0_23 = arith.constant 0 : index
      %c0_24 = arith.constant 0 : index
      %40 = vector.load %arg7[%c0_23, %c0_24] : memref<1x32xf32, #tpu.memory_space<vmem>>, vector<1x32xf32>
      %41 = vector.broadcast %40 : vector<1x32xf32> to vector<16x32xf32>
      %42 = arith.addf %39, %41 : vector<16x32xf32>
      %43 = arith.truncf %42 : vector<16x32xf32> to vector<16x32xbf16>
      %c0_25 = arith.constant 0 : index
      %c0_26 = arith.constant 0 : index
      %44 = vector.load %arg8[%c0_25, %c0_26] : memref<16x32xbf16, #tpu.memory_space<vmem>>, vector<16x32xbf16>
      tpu.vector_store %arg8[%c0_25, %c0_26], %43 {strides = array<i32>} : memref<16x32xbf16, #tpu.memory_space<vmem>>, vector<16x32xbf16>,
    } else {
    }
    return
  }
  func.func @transform_0(%arg0: i32, %arg1: i32) -> (i32, i32) {
    %c0_i32 = arith.constant 0 : i32
    return %arg0, %arg1 : i32, i32
  }
  func.func @transform_1(%arg0: i32, %arg1: i32) -> (i32, i32) {
    %c0_i32 = arith.constant 0 : i32
    %c0_i32_0 = arith.constant 0 : i32
    return %arg1, %c0_i32 : i32, i32
  }
  func.func @transform_2(%arg0: i32, %arg1: i32) -> (i32, i32) {
    %c0_i32 = arith.constant 0 : i32
    %c0_i32_0 = arith.constant 0 : i32
    %c0_i32_1 = arith.constant 0 : i32
    return %c0_i32, %c0_i32_0 : i32, i32
  }
  func.func @transform_3(%arg0: i32, %arg1: i32) -> (i32, i32) {
    %c0_i32 = arith.constant 0 : i32
    %c0_i32_0 = arith.constant 0 : i32
    return %arg0, %c0_i32 : i32, i32
  }
  func.func @transform_4(%arg0: i32, %arg1: i32) -> (i32, i32) {
    %c0_i32 = arith.constant 0 : i32
    %c0_i32_0 = arith.constant 0 : i32
    %c0_i32_1 = arith.constant 0 : i32
    return %c0_i32, %c0_i32_0 : i32, i32
  }
  func.func @transform_5(%arg0: i32, %arg1: i32) -> (i32, i32) {
    %c0_i32 = arith.constant 0 : i32
    %c0_i32_0 = arith.constant 0 : i32
    %c0_i32_1 = arith.constant 0 : i32
    return %c0_i32, %c0_i32_0 : i32, i32
  }
  func.func @transform_6(%arg0: i32, %arg1: i32) -> (i32, i32) {
    %c0_i32 = arith.constant 0 : i32
    %c0_i32_0 = arith.constant 0 : i32
    return %arg0, %c0_i32 : i32, i32
  }
}

module attributes {stable_mosaic.version = 11 : i64} {
  func.func @_ln_kernel(%arg0: i32, %arg1: memref<16x32xbf16, #tpu.memory_space<vmem>>, %arg2: memref<1x32xf32, #tpu.memory_space<vmem>>, %arg3: memref<1x32xf32, #tpu.memory_space<vmem>>, %arg4: memref<16x32xbf16, #tpu.memory_space<vmem>>) attributes {dimension_semantics = [#tpu.dimension_semantics<parallel>], iteration_bounds = array<i64: 1>, scalar_prefetch = 0 : i64, scratch_operands = 0 : i64, tpu.core_type = #tpu.core_type<tc>, window_params = [{transform_indices = @transform_0, window_bounds = array<i64: 16, 32>}, {pipeline_mode = #tpu.pipeline_mode<synchronous>, transform_indices = @transform_1, window_bounds = array<i64: 1, 32>}, {pipeline_mode = #tpu.pipeline_mode<synchronous>, transform_indices = @transform_2, window_bounds = array<i64: 1, 32>}, {transform_indices = @transform_3, window_bounds = array<i64: 16, 32>}]} {
    %c0 = arith.constant 0 : index
    %c0_0 = arith.constant 0 : index
    %0 = vector.load %arg1[%c0, %c0_0] : memref<16x32xbf16, #tpu.memory_space<vmem>>, vector<16x32xbf16>
    %1 = arith.extf %0 : vector<16x32xbf16> to vector<16x32xf32>
    %cst = arith.constant dense<0.000000e+00> : vector<16xf32>
    %2 = vector.multi_reduction <add>, %1, %cst [1] : vector<16x32xf32> to vector<16xf32>
    %3 = vector.shape_cast %2 : vector<16xf32> to vector<16x1xf32>
    %cst_1 = arith.constant 3.200000e+01 : f32
    %4 = vector.broadcast %cst_1 : f32 to vector<16x1xf32>
    %5 = arith.divf %3, %4 : vector<16x1xf32>
    %6 = vector.broadcast %5 : vector<16x1xf32> to vector<16x32xf32>
    %7 = arith.subf %1, %6 : vector<16x32xf32>
    %8 = arith.mulf %7, %7 : vector<16x32xf32>
    %cst_2 = arith.constant dense<0.000000e+00> : vector<16xf32>
    %9 = vector.multi_reduction <add>, %8, %cst_2 [1] : vector<16x32xf32> to vector<16xf32>
    %10 = vector.shape_cast %9 : vector<16xf32> to vector<16x1xf32>
    %cst_3 = arith.constant 3.200000e+01 : f32
    %11 = vector.broadcast %cst_3 : f32 to vector<16x1xf32>
    %12 = arith.divf %10, %11 : vector<16x1xf32>
    %13 = vector.broadcast %5 : vector<16x1xf32> to vector<16x32xf32>
    %14 = arith.subf %1, %13 : vector<16x32xf32>
    %cst_4 = arith.constant 9.99999974E-6 : f32
    %15 = vector.broadcast %cst_4 : f32 to vector<16x1xf32>
    %16 = arith.addf %12, %15 : vector<16x1xf32>
    %17 = math.rsqrt %16 : vector<16x1xf32>
    %18 = vector.broadcast %17 : vector<16x1xf32> to vector<16x32xf32>
    %19 = arith.mulf %14, %18 : vector<16x32xf32>
    %c0_5 = arith.constant 0 : index
    %c0_6 = arith.constant 0 : index
    %20 = vector.load %arg2[%c0_5, %c0_6] : memref<1x32xf32, #tpu.memory_space<vmem>>, vector<1x32xf32>
    %21 = vector.broadcast %20 : vector<1x32xf32> to vector<16x32xf32>
    %22 = arith.mulf %19, %21 : vector<16x32xf32>
    %c0_7 = arith.constant 0 : index
    %c0_8 = arith.constant 0 : index
    %23 = vector.load %arg3[%c0_7, %c0_8] : memref<1x32xf32, #tpu.memory_space<vmem>>, vector<1x32xf32>
    %24 = vector.broadcast %23 : vector<1x32xf32> to vector<16x32xf32>
    %25 = arith.addf %22, %24 : vector<16x32xf32>
    %26 = arith.truncf %25 : vector<16x32xf32> to vector<16x32xbf16>
    %c0_9 = arith.constant 0 : index
    %c0_10 = arith.constant 0 : index
    %27 = vector.load %arg4[%c0_9, %c0_10] : memref<16x32xbf16, #tpu.memory_space<vmem>>, vector<16x32xbf16>
    tpu.vector_store %arg4[%c0_9, %c0_10], %26 {strides = array<i32>} : memref<16x32xbf16, #tpu.memory_space<vmem>>, vector<16x32xbf16>,
    return
  }
  func.func @transform_0(%arg0: i32) -> (i32, i32) {
    %c0_i32 = arith.constant 0 : i32
    %c0_i32_0 = arith.constant 0 : i32
    return %arg0, %c0_i32 : i32, i32
  }
  func.func @transform_1(%arg0: i32) -> (i32, i32) {
    %c0_i32 = arith.constant 0 : i32
    %c0_i32_0 = arith.constant 0 : i32
    %c0_i32_1 = arith.constant 0 : i32
    return %c0_i32, %c0_i32_0 : i32, i32
  }
  func.func @transform_2(%arg0: i32) -> (i32, i32) {
    %c0_i32 = arith.constant 0 : i32
    %c0_i32_0 = arith.constant 0 : i32
    %c0_i32_1 = arith.constant 0 : i32
    return %c0_i32, %c0_i32_0 : i32, i32
  }
  func.func @transform_3(%arg0: i32) -> (i32, i32) {
    %c0_i32 = arith.constant 0 : i32
    %c0_i32_0 = arith.constant 0 : i32
    return %arg0, %c0_i32 : i32, i32
  }
}

module attributes {stable_mosaic.version = 11 : i64} {
  func.func @_matmul_kernel(%arg0: i32, %arg1: i32, %arg2: i32, %arg3: memref<16x32xbf16, #tpu.memory_space<vmem>>, %arg4: memref<32x64xbf16, #tpu.memory_space<vmem>>, %arg5: memref<1x64xf32, #tpu.memory_space<vmem>>, %arg6: memref<16x64xbf16, #tpu.memory_space<vmem>>, %arg7: memref<16x64xf32, #tpu.memory_space<vmem>>) attributes {dimension_semantics = [#tpu.dimension_semantics<parallel>, #tpu.dimension_semantics<parallel>, #tpu.dimension_semantics<arbitrary>], iteration_bounds = array<i64: 1, 1, 1>, scalar_prefetch = 0 : i64, scratch_operands = 1 : i64, tpu.core_type = #tpu.core_type<tc>, window_params = [{transform_indices = @transform_0, window_bounds = array<i64: 16, 32>}, {transform_indices = @transform_1, window_bounds = array<i64: 32, 64>}, {transform_indices = @transform_2, window_bounds = array<i64: 1, 64>}, {transform_indices = @transform_3, window_bounds = array<i64: 16, 64>}]} {
    %c0_i32 = arith.constant 0 : i32
    %0 = arith.cmpi eq, %arg2, %c0_i32 : i32
    %1 = arith.extui %0 : i1 to i32
    %c0_i32_0 = arith.constant 0 : i32
    %2 = arith.cmpi ne, %1, %c0_i32_0 : i32
    scf.if %2 {
      %cst_10 = arith.constant 0.000000e+00 : f32
      %12 = vector.broadcast %cst_10 : f32 to vector<16x64xf32>
      %c0_11 = arith.constant 0 : index
      %c0_12 = arith.constant 0 : index
      %13 = vector.load %arg7[%c0_11, %c0_12] : memref<16x64xf32, #tpu.memory_space<vmem>>, vector<16x64xf32>
      tpu.vector_store %arg7[%c0_11, %c0_12], %12 {strides = array<i32>} : memref<16x64xf32, #tpu.memory_space<vmem>>, vector<16x64xf32>,
    } else {
    }
    %c0 = arith.constant 0 : index
    %c0_1 = arith.constant 0 : index
    %3 = vector.load %arg7[%c0, %c0_1] : memref<16x64xf32, #tpu.memory_space<vmem>>, vector<16x64xf32>
    %c0_2 = arith.constant 0 : index
    %c0_3 = arith.constant 0 : index
    %4 = vector.load %arg3[%c0_2, %c0_3] : memref<16x32xbf16, #tpu.memory_space<vmem>>, vector<16x32xbf16>
    %c0_4 = arith.constant 0 : index
    %c0_5 = arith.constant 0 : index
    %5 = vector.load %arg4[%c0_4, %c0_5] : memref<32x64xbf16, #tpu.memory_space<vmem>>, vector<32x64xbf16>
    %cst = arith.constant dense<0.000000e+00> : vector<16x64xf32>
    %6 = tpu.matmul %4, %5, %cst {dimension_numbers = #tpu.dot_dimension_numbers<[1], [0], [0], [1], [0, 0, 1, 1], [], []>} : vector<16x32xbf16>, vector<32x64xbf16>, vector<16x64xf32> -> vector<16x64xf32>
    %7 = arith.addf %3, %6 : vector<16x64xf32>
    %c0_6 = arith.constant 0 : index
    %c0_7 = arith.constant 0 : index
    %8 = vector.load %arg7[%c0_6, %c0_7] : memref<16x64xf32, #tpu.memory_space<vmem>>, vector<16x64xf32>
    tpu.vector_store %arg7[%c0_6, %c0_7], %7 {strides = array<i32>} : memref<16x64xf32, #tpu.memory_space<vmem>>, vector<16x64xf32>,
    %c0_i32_8 = arith.constant 0 : i32
    %9 = arith.cmpi eq, %arg2, %c0_i32_8 : i32
    %10 = arith.extui %9 : i1 to i32
    %c0_i32_9 = arith.constant 0 : i32
    %11 = arith.cmpi ne, %10, %c0_i32_9 : i32
    scf.if %11 {
      %c0_10 = arith.constant 0 : index
      %c0_11 = arith.constant 0 : index
      %12 = vector.load %arg7[%c0_10, %c0_11] : memref<16x64xf32, #tpu.memory_space<vmem>>, vector<16x64xf32>
      %c0_12 = arith.constant 0 : index
      %c0_13 = arith.constant 0 : index
      %13 = vector.load %arg5[%c0_12, %c0_13] : memref<1x64xf32, #tpu.memory_space<vmem>>, vector<1x64xf32>
      %14 = vector.broadcast %13 : vector<1x64xf32> to vector<16x64xf32>
      %15 = arith.addf %12, %14 : vector<16x64xf32>
      %16 = arith.truncf %15 : vector<16x64xf32> to vector<16x64xbf16>
      %c0_14 = arith.constant 0 : index
      %c0_15 = arith.constant 0 : index
      %17 = vector.load %arg6[%c0_14, %c0_15] : memref<16x64xbf16, #tpu.memory_space<vmem>>, vector<16x64xbf16>
      tpu.vector_store %arg6[%c0_14, %c0_15], %16 {strides = array<i32>} : memref<16x64xbf16, #tpu.memory_space<vmem>>, vector<16x64xbf16>,
    } else {
    }
    return
  }
  func.func @transform_0(%arg0: i32, %arg1: i32, %arg2: i32) -> (i32, i32) {
    %c0_i32 = arith.constant 0 : i32
    return %arg0, %arg2 : i32, i32
  }
  func.func @transform_1(%arg0: i32, %arg1: i32, %arg2: i32) -> (i32, i32) {
    %c0_i32 = arith.constant 0 : i32
    return %arg2, %arg1 : i32, i32
  }
  func.func @transform_2(%arg0: i32, %arg1: i32, %arg2: i32) -> (i32, i32) {
    %c0_i32 = arith.constant 0 : i32
    %c0_i32_0 = arith.constant 0 : i32
    return %c0_i32, %arg1 : i32, i32
  }
  func.func @transform_3(%arg0: i32, %arg1: i32, %arg2: i32) -> (i32, i32) {
    %c0_i32 = arith.constant 0 : i32
    return %arg0, %arg1 : i32, i32
  }
}

module attributes {stable_mosaic.version = 11 : i64} {
  func.func @_self_attn_kernel(%arg0: i32, %arg1: memref<1x8x96xbf16, #tpu.memory_space<vmem>>, %arg2: memref<1x1x8xf32, #tpu.memory_space<vmem>>, %arg3: memref<1x8x32xbf16, #tpu.memory_space<vmem>>) attributes {dimension_semantics = [#tpu.dimension_semantics<parallel>], iteration_bounds = array<i64: 2>, scalar_prefetch = 0 : i64, scratch_operands = 0 : i64, tpu.core_type = #tpu.core_type<tc>, window_params = [{transform_indices = @transform_0, window_bounds = array<i64: 1, 8, 96>}, {transform_indices = @transform_1, window_bounds = array<i64: 1, 1, 8>}, {transform_indices = @transform_2, window_bounds = array<i64: 1, 8, 32>}]} {
    %c0 = arith.constant 0 : index
    %c0_0 = arith.constant 0 : index
    %c0_1 = arith.constant 0 : index
    %0 = vector.load %arg1[%c0, %c0_0, %c0_1] : memref<1x8x96xbf16, #tpu.memory_space<vmem>>, vector<1x8x96xbf16>
    %1 = vector.shape_cast %0 : vector<1x8x96xbf16> to vector<8x96xbf16>
    %c0_2 = arith.constant 0 : index
    %c0_3 = arith.constant 0 : index
    %c0_4 = arith.constant 0 : index
    %2 = vector.load %arg2[%c0_2, %c0_3, %c0_4] : memref<1x1x8xf32, #tpu.memory_space<vmem>>, vector<1x1x8xf32>
    %3 = vector.shape_cast %2 : vector<1x1x8xf32> to vector<1x8xf32>
    %4 = tpu.iota {dimensions = array<i32: 0>} : vector<8x8xi32>
    %5 = tpu.iota {dimensions = array<i32: 1>} : vector<8x8xi32>
    %6 = arith.cmpi sge, %4, %5 : vector<8x8xi32>
    %cst = arith.constant 0.000000e+00 : f32
    %cst_5 = arith.constant -1.000000e+30 : f32
    %7 = vector.broadcast %cst : f32 to vector<8x8xf32>
    %8 = vector.broadcast %cst_5 : f32 to vector<8x8xf32>
    %9 = arith.select %6, %7, %8 : vector<8x8xi1>, vector<8x8xf32>
    %10 = vector.broadcast %3 : vector<1x8xf32> to vector<8x8xf32>
    %11 = arith.addf %10, %9 : vector<8x8xf32>
    %12 = vector.extract_strided_slice %1 {offsets = [0, 0], sizes = [8, 32], strides = [1, 1]} : vector<8x96xbf16> to vector<8x32xbf16>
    %13 = vector.extract_strided_slice %1 {offsets = [0, 32], sizes = [8, 32], strides = [1, 1]} : vector<8x96xbf16> to vector<8x32xbf16>
    %14 = vector.extract_strided_slice %1 {offsets = [0, 64], sizes = [8, 32], strides = [1, 1]} : vector<8x96xbf16> to vector<8x32xbf16>
    %15 = vector.extract_strided_slice %12 {offsets = [0, 0], sizes = [8, 8], strides = [1, 1]} : vector<8x32xbf16> to vector<8x8xbf16>
    %16 = vector.extract_strided_slice %13 {offsets = [0, 0], sizes = [8, 8], strides = [1, 1]} : vector<8x32xbf16> to vector<8x8xbf16>
    %cst_6 = arith.constant dense<0.000000e+00> : vector<8x8xf32>
    %17 = tpu.matmul %15, %16, %cst_6 {dimension_numbers = #tpu.dot_dimension_numbers<[1], [1], [0], [0], [0, 0, 1, 0], [], []>} : vector<8x8xbf16>, vector<8x8xbf16>, vector<8x8xf32> -> vector<8x8xf32>
    %18 = arith.addf %17, %11 : vector<8x8xf32>
    %cst_7 = arith.constant dense<0xFF800000> : vector<8xf32>
    %19 = vector.multi_reduction <maximumf>, %18, %cst_7 [1] : vector<8x8xf32> to vector<8xf32>
    %20 = vector.shape_cast %19 : vector<8xf32> to vector<8x1xf32>
    %21 = vector.broadcast %20 : vector<8x1xf32> to vector<8x8xf32>
    %22 = arith.subf %18, %21 : vector<8x8xf32>
    %23 = math.exp %22 : vector<8x8xf32>
    %cst_8 = arith.constant dense<0.000000e+00> : vector<8xf32>
    %24 = vector.multi_reduction <add>, %23, %cst_8 [1] : vector<8x8xf32> to vector<8xf32>
    %25 = vector.shape_cast %24 : vector<8xf32> to vector<8x1xf32>
    %26 = tpu.reciprocal %25 {approx = true} : vector<8x1xf32> -> vector<8x1xf32>
    %27 = vector.broadcast %26 : vector<8x1xf32> to vector<8x8xf32>
    %28 = arith.mulf %23, %27 : vector<8x8xf32>
    %29 = arith.truncf %28 : vector<8x8xf32> to vector<8x8xbf16>
    %30 = vector.extract_strided_slice %14 {offsets = [0, 0], sizes = [8, 8], strides = [1, 1]} : vector<8x32xbf16> to vector<8x8xbf16>
    %cst_9 = arith.constant dense<0.000000e+00> : vector<8x8xf32>
    %31 = tpu.matmul %29, %30, %cst_9 {dimension_numbers = #tpu.dot_dimension_numbers<[1], [0], [0], [1], [0, 0, 1, 1], [], []>} : vector<8x8xbf16>, vector<8x8xbf16>, vector<8x8xf32> -> vector<8x8xf32>
    %32 = arith.truncf %31 : vector<8x8xf32> to vector<8x8xbf16>
    %c0_10 = arith.constant 0 : index
    %c0_11 = arith.constant 0 : index
    %c0_12 = arith.constant 0 : index
    %33 = vector.load %arg3[%c0_10, %c0_11, %c0_12] : memref<1x8x32xbf16, #tpu.memory_space<vmem>>, vector<1x8x8xbf16>
    %34 = vector.shape_cast %33 : vector<1x8x8xbf16> to vector<8x8xbf16>
    %35 = vector.shape_cast %32 : vector<8x8xbf16> to vector<1x8x8xbf16>
    tpu.vector_store %arg3[%c0_10, %c0_11, %c0_12], %35 {strides = array<i32>} : memref<1x8x32xbf16, #tpu.memory_space<vmem>>, vector<1x8x8xbf16>,
    %36 = vector.extract_strided_slice %12 {offsets = [0, 8], sizes = [8, 8], strides = [1, 1]} : vector<8x32xbf16> to vector<8x8xbf16>
    %37 = vector.extract_strided_slice %13 {offsets = [0, 8], sizes = [8, 8], strides = [1, 1]} : vector<8x32xbf16> to vector<8x8xbf16>
    %cst_13 = arith.constant dense<0.000000e+00> : vector<8x8xf32>
    %38 = tpu.matmul %36, %37, %cst_13 {dimension_numbers = #tpu.dot_dimension_numbers<[1], [1], [0], [0], [0, 0, 1, 0], [], []>} : vector<8x8xbf16>, vector<8x8xbf16>, vector<8x8xf32> -> vector<8x8xf32>
    %39 = arith.addf %38, %11 : vector<8x8xf32>
    %cst_14 = arith.constant dense<0xFF800000> : vector<8xf32>
    %40 = vector.multi_reduction <maximumf>, %39, %cst_14 [1] : vector<8x8xf32> to vector<8xf32>
    %41 = vector.shape_cast %40 : vector<8xf32> to vector<8x1xf32>
    %42 = vector.broadcast %41 : vector<8x1xf32> to vector<8x8xf32>
    %43 = arith.subf %39, %42 : vector<8x8xf32>
    %44 = math.exp %43 : vector<8x8xf32>
    %cst_15 = arith.constant dense<0.000000e+00> : vector<8xf32>
    %45 = vector.multi_reduction <add>, %44, %cst_15 [1] : vector<8x8xf32> to vector<8xf32>
    %46 = vector.shape_cast %45 : vector<8xf32> to vector<8x1xf32>
    %47 = tpu.reciprocal %46 {approx = true} : vector<8x1xf32> -> vector<8x1xf32>
    %48 = vector.broadcast %47 : vector<8x1xf32> to vector<8x8xf32>
    %49 = arith.mulf %44, %48 : vector<8x8xf32>
    %50 = arith.truncf %49 : vector<8x8xf32> to vector<8x8xbf16>
    %51 = vector.extract_strided_slice %14 {offsets = [0, 8], sizes = [8, 8], strides = [1, 1]} : vector<8x32xbf16> to vector<8x8xbf16>
    %cst_16 = arith.constant dense<0.000000e+00> : vector<8x8xf32>
    %52 = tpu.matmul %50, %51, %cst_16 {dimension_numbers = #tpu.dot_dimension_numbers<[1], [0], [0], [1], [0, 0, 1, 1], [], []>} : vector<8x8xbf16>, vector<8x8xbf16>, vector<8x8xf32> -> vector<8x8xf32>
    %53 = arith.truncf %52 : vector<8x8xf32> to vector<8x8xbf16>
    %c0_17 = arith.constant 0 : index
    %c0_18 = arith.constant 0 : index
    %c8 = arith.constant 8 : index
    %54 = vector.load %arg3[%c0_17, %c0_18, %c8] : memref<1x8x32xbf16, #tpu.memory_space<vmem>>, vector<1x8x8xbf16>
    %55 = vector.shape_cast %54 : vector<1x8x8xbf16> to vector<8x8xbf16>
    %56 = vector.shape_cast %53 : vector<8x8xbf16> to vector<1x8x8xbf16>
    tpu.vector_store %arg3[%c0_17, %c0_18, %c8], %56 {strides = array<i32>} : memref<1x8x32xbf16, #tpu.memory_space<vmem>>, vector<1x8x8xbf16>,
    %57 = vector.extract_strided_slice %12 {offsets = [0, 16], sizes = [8, 8], strides = [1, 1]} : vector<8x32xbf16> to vector<8x8xbf16>
    %58 = vector.extract_strided_slice %13 {offsets = [0, 16], sizes = [8, 8], strides = [1, 1]} : vector<8x32xbf16> to vector<8x8xbf16>
    %cst_19 = arith.constant dense<0.000000e+00> : vector<8x8xf32>
    %59 = tpu.matmul %57, %58, %cst_19 {dimension_numbers = #tpu.dot_dimension_numbers<[1], [1], [0], [0], [0, 0, 1, 0], [], []>} : vector<8x8xbf16>, vector<8x8xbf16>, vector<8x8xf32> -> vector<8x8xf32>
    %60 = arith.addf %59, %11 : vector<8x8xf32>
    %cst_20 = arith.constant dense<0xFF800000> : vector<8xf32>
    %61 = vector.multi_reduction <maximumf>, %60, %cst_20 [1] : vector<8x8xf32> to vector<8xf32>
    %62 = vector.shape_cast %61 : vector<8xf32> to vector<8x1xf32>
    %63 = vector.broadcast %62 : vector<8x1xf32> to vector<8x8xf32>
    %64 = arith.subf %60, %63 : vector<8x8xf32>
    %65 = math.exp %64 : vector<8x8xf32>
    %cst_21 = arith.constant dense<0.000000e+00> : vector<8xf32>
    %66 = vector.multi_reduction <add>, %65, %cst_21 [1] : vector<8x8xf32> to vector<8xf32>
    %67 = vector.shape_cast %66 : vector<8xf32> to vector<8x1xf32>
    %68 = tpu.reciprocal %67 {approx = true} : vector<8x1xf32> -> vector<8x1xf32>
    %69 = vector.broadcast %68 : vector<8x1xf32> to vector<8x8xf32>
    %70 = arith.mulf %65, %69 : vector<8x8xf32>
    %71 = arith.truncf %70 : vector<8x8xf32> to vector<8x8xbf16>
    %72 = vector.extract_strided_slice %14 {offsets = [0, 16], sizes = [8, 8], strides = [1, 1]} : vector<8x32xbf16> to vector<8x8xbf16>
    %cst_22 = arith.constant dense<0.000000e+00> : vector<8x8xf32>
    %73 = tpu.matmul %71, %72, %cst_22 {dimension_numbers = #tpu.dot_dimension_numbers<[1], [0], [0], [1], [0, 0, 1, 1], [], []>} : vector<8x8xbf16>, vector<8x8xbf16>, vector<8x8xf32> -> vector<8x8xf32>
    %74 = arith.truncf %73 : vector<8x8xf32> to vector<8x8xbf16>
    %c0_23 = arith.constant 0 : index
    %c0_24 = arith.constant 0 : index
    %c16 = arith.constant 16 : index
    %75 = vector.load %arg3[%c0_23, %c0_24, %c16] : memref<1x8x32xbf16, #tpu.memory_space<vmem>>, vector<1x8x8xbf16>
    %76 = vector.shape_cast %75 : vector<1x8x8xbf16> to vector<8x8xbf16>
    %77 = vector.shape_cast %74 : vector<8x8xbf16> to vector<1x8x8xbf16>
    tpu.vector_store %arg3[%c0_23, %c0_24, %c16], %77 {strides = array<i32>} : memref<1x8x32xbf16, #tpu.memory_space<vmem>>, vector<1x8x8xbf16>,
    %78 = vector.extract_strided_slice %12 {offsets = [0, 24], sizes = [8, 8], strides = [1, 1]} : vector<8x32xbf16> to vector<8x8xbf16>
    %79 = vector.extract_strided_slice %13 {offsets = [0, 24], sizes = [8, 8], strides = [1, 1]} : vector<8x32xbf16> to vector<8x8xbf16>
    %cst_25 = arith.constant dense<0.000000e+00> : vector<8x8xf32>
    %80 = tpu.matmul %78, %79, %cst_25 {dimension_numbers = #tpu.dot_dimension_numbers<[1], [1], [0], [0], [0, 0, 1, 0], [], []>} : vector<8x8xbf16>, vector<8x8xbf16>, vector<8x8xf32> -> vector<8x8xf32>
    %81 = arith.addf %80, %11 : vector<8x8xf32>
    %cst_26 = arith.constant dense<0xFF800000> : vector<8xf32>
    %82 = vector.multi_reduction <maximumf>, %81, %cst_26 [1] : vector<8x8xf32> to vector<8xf32>
    %83 = vector.shape_cast %82 : vector<8xf32> to vector<8x1xf32>
    %84 = vector.broadcast %83 : vector<8x1xf32> to vector<8x8xf32>
    %85 = arith.subf %81, %84 : vector<8x8xf32>
    %86 = math.exp %85 : vector<8x8xf32>
    %cst_27 = arith.constant dense<0.000000e+00> : vector<8xf32>
    %87 = vector.multi_reduction <add>, %86, %cst_27 [1] : vector<8x8xf32> to vector<8xf32>
    %88 = vector.shape_cast %87 : vector<8xf32> to vector<8x1xf32>
    %89 = tpu.reciprocal %88 {approx = true} : vector<8x1xf32> -> vector<8x1xf32>
    %90 = vector.broadcast %89 : vector<8x1xf32> to vector<8x8xf32>
    %91 = arith.mulf %86, %90 : vector<8x8xf32>
    %92 = arith.truncf %91 : vector<8x8xf32> to vector<8x8xbf16>
    %93 = vector.extract_strided_slice %14 {offsets = [0, 24], sizes = [8, 8], strides = [1, 1]} : vector<8x32xbf16> to vector<8x8xbf16>
    %cst_28 = arith.constant dense<0.000000e+00> : vector<8x8xf32>
    %94 = tpu.matmul %92, %93, %cst_28 {dimension_numbers = #tpu.dot_dimension_numbers<[1], [0], [0], [1], [0, 0, 1, 1], [], []>} : vector<8x8xbf16>, vector<8x8xbf16>, vector<8x8xf32> -> vector<8x8xf32>
    %95 = arith.truncf %94 : vector<8x8xf32> to vector<8x8xbf16>
    %c0_29 = arith.constant 0 : index
    %c0_30 = arith.constant 0 : index
    %c24 = arith.constant 24 : index
    %96 = vector.load %arg3[%c0_29, %c0_30, %c24] : memref<1x8x32xbf16, #tpu.memory_space<vmem>>, vector<1x8x8xbf16>
    %97 = vector.shape_cast %96 : vector<1x8x8xbf16> to vector<8x8xbf16>
    %98 = vector.shape_cast %95 : vector<8x8xbf16> to vector<1x8x8xbf16>
    tpu.vector_store %arg3[%c0_29, %c0_30, %c24], %98 {strides = array<i32>} : memref<1x8x32xbf16, #tpu.memory_space<vmem>>, vector<1x8x8xbf16>,
    return
  }
  func.func @transform_0(%arg0: i32) -> (i32, i32, i32) {
    %c0_i32 = arith.constant 0 : i32
    %c0_i32_0 = arith.constant 0 : i32
    %c0_i32_1 = arith.constant 0 : i32
    return %arg0, %c0_i32, %c0_i32_0 : i32, i32, i32
  }
  func.func @transform_1(%arg0: i32) -> (i32, i32, i32) {
    %c0_i32 = arith.constant 0 : i32
    %c0_i32_0 = arith.constant 0 : i32
    %c0_i32_1 = arith.constant 0 : i32
    return %arg0, %c0_i32, %c0_i32_0 : i32, i32, i32
  }
  func.func @transform_2(%arg0: i32) -> (i32, i32, i32) {
    %c0_i32 = arith.constant 0 : i32
    %c0_i32_0 = arith.constant 0 : i32
    %c0_i32_1 = arith.constant 0 : i32
    return %arg0, %c0_i32, %c0_i32_0 : i32, i32, i32
  }
}

module attributes {stable_mosaic.version = 11 : i64} {
  func.func @_cross_attn_kernel(%arg0: i32, %arg1: memref<1x8x32xbf16, #tpu.memory_space<vmem>>, %arg2: memref<1x8x64xbf16, #tpu.memory_space<vmem>>, %arg3: memref<1x1x8xf32, #tpu.memory_space<vmem>>, %arg4: memref<1x8x32xbf16, #tpu.memory_space<vmem>>) attributes {dimension_semantics = [#tpu.dimension_semantics<parallel>], iteration_bounds = array<i64: 2>, scalar_prefetch = 0 : i64, scratch_operands = 0 : i64, tpu.core_type = #tpu.core_type<tc>, window_params = [{transform_indices = @transform_0, window_bounds = array<i64: 1, 8, 32>}, {transform_indices = @transform_1, window_bounds = array<i64: 1, 8, 64>}, {transform_indices = @transform_2, window_bounds = array<i64: 1, 1, 8>}, {transform_indices = @transform_3, window_bounds = array<i64: 1, 8, 32>}]} {
    %c0 = arith.constant 0 : index
    %c0_0 = arith.constant 0 : index
    %c0_1 = arith.constant 0 : index
    %0 = vector.load %arg2[%c0, %c0_0, %c0_1] : memref<1x8x64xbf16, #tpu.memory_space<vmem>>, vector<1x8x64xbf16>
    %1 = vector.shape_cast %0 : vector<1x8x64xbf16> to vector<8x64xbf16>
    %c0_2 = arith.constant 0 : index
    %c0_3 = arith.constant 0 : index
    %c0_4 = arith.constant 0 : index
    %2 = vector.load %arg3[%c0_2, %c0_3, %c0_4] : memref<1x1x8xf32, #tpu.memory_space<vmem>>, vector<1x1x8xf32>
    %3 = vector.shape_cast %2 : vector<1x1x8xf32> to vector<1x8xf32>
    %c0_5 = arith.constant 0 : index
    %c0_6 = arith.constant 0 : index
    %c0_7 = arith.constant 0 : index
    %4 = vector.load %arg1[%c0_5, %c0_6, %c0_7] : memref<1x8x32xbf16, #tpu.memory_space<vmem>>, vector<1x8x32xbf16>
    %5 = vector.shape_cast %4 : vector<1x8x32xbf16> to vector<8x32xbf16>
    %6 = vector.extract_strided_slice %1 {offsets = [0, 0], sizes = [8, 32], strides = [1, 1]} : vector<8x64xbf16> to vector<8x32xbf16>
    %7 = vector.extract_strided_slice %1 {offsets = [0, 32], sizes = [8, 32], strides = [1, 1]} : vector<8x64xbf16> to vector<8x32xbf16>
    %8 = vector.extract_strided_slice %5 {offsets = [0, 0], sizes = [8, 8], strides = [1, 1]} : vector<8x32xbf16> to vector<8x8xbf16>
    %9 = vector.extract_strided_slice %6 {offsets = [0, 0], sizes = [8, 8], strides = [1, 1]} : vector<8x32xbf16> to vector<8x8xbf16>
    %cst = arith.constant dense<0.000000e+00> : vector<8x8xf32>
    %10 = tpu.matmul %8, %9, %cst {dimension_numbers = #tpu.dot_dimension_numbers<[1], [1], [0], [0], [0, 0, 1, 0], [], []>} : vector<8x8xbf16>, vector<8x8xbf16>, vector<8x8xf32> -> vector<8x8xf32>
    %11 = vector.broadcast %3 : vector<1x8xf32> to vector<8x8xf32>
    %12 = arith.addf %10, %11 : vector<8x8xf32>
    %cst_8 = arith.constant dense<0xFF800000> : vector<8xf32>
    %13 = vector.multi_reduction <maximumf>, %12, %cst_8 [1] : vector<8x8xf32> to vector<8xf32>
    %14 = vector.shape_cast %13 : vector<8xf32> to vector<8x1xf32>
    %15 = vector.broadcast %14 : vector<8x1xf32> to vector<8x8xf32>
    %16 = arith.subf %12, %15 : vector<8x8xf32>
    %17 = math.exp %16 : vector<8x8xf32>
    %cst_9 = arith.constant dense<0.000000e+00> : vector<8xf32>
    %18 = vector.multi_reduction <add>, %17, %cst_9 [1] : vector<8x8xf32> to vector<8xf32>
    %19 = vector.shape_cast %18 : vector<8xf32> to vector<8x1xf32>
    %20 = tpu.reciprocal %19 {approx = true} : vector<8x1xf32> -> vector<8x1xf32>
    %21 = vector.broadcast %20 : vector<8x1xf32> to vector<8x8xf32>
    %22 = arith.mulf %17, %21 : vector<8x8xf32>
    %23 = arith.truncf %22 : vector<8x8xf32> to vector<8x8xbf16>
    %24 = vector.extract_strided_slice %7 {offsets = [0, 0], sizes = [8, 8], strides = [1, 1]} : vector<8x32xbf16> to vector<8x8xbf16>
    %cst_10 = arith.constant dense<0.000000e+00> : vector<8x8xf32>
    %25 = tpu.matmul %23, %24, %cst_10 {dimension_numbers = #tpu.dot_dimension_numbers<[1], [0], [0], [1], [0, 0, 1, 1], [], []>} : vector<8x8xbf16>, vector<8x8xbf16>, vector<8x8xf32> -> vector<8x8xf32>
    %26 = arith.truncf %25 : vector<8x8xf32> to vector<8x8xbf16>
    %c0_11 = arith.constant 0 : index
    %c0_12 = arith.constant 0 : index
    %c0_13 = arith.constant 0 : index
    %27 = vector.load %arg4[%c0_11, %c0_12, %c0_13] : memref<1x8x32xbf16, #tpu.memory_space<vmem>>, vector<1x8x8xbf16>
    %28 = vector.shape_cast %27 : vector<1x8x8xbf16> to vector<8x8xbf16>
    %29 = vector.shape_cast %26 : vector<8x8xbf16> to vector<1x8x8xbf16>
    tpu.vector_store %arg4[%c0_11, %c0_12, %c0_13], %29 {strides = array<i32>} : memref<1x8x32xbf16, #tpu.memory_space<vmem>>, vector<1x8x8xbf16>,
    %30 = vector.extract_strided_slice %5 {offsets = [0, 8], sizes = [8, 8], strides = [1, 1]} : vector<8x32xbf16> to vector<8x8xbf16>
    %31 = vector.extract_strided_slice %6 {offsets = [0, 8], sizes = [8, 8], strides = [1, 1]} : vector<8x32xbf16> to vector<8x8xbf16>
    %cst_14 = arith.constant dense<0.000000e+00> : vector<8x8xf32>
    %32 = tpu.matmul %30, %31, %cst_14 {dimension_numbers = #tpu.dot_dimension_numbers<[1], [1], [0], [0], [0, 0, 1, 0], [], []>} : vector<8x8xbf16>, vector<8x8xbf16>, vector<8x8xf32> -> vector<8x8xf32>
    %33 = vector.broadcast %3 : vector<1x8xf32> to vector<8x8xf32>
    %34 = arith.addf %32, %33 : vector<8x8xf32>
    %cst_15 = arith.constant dense<0xFF800000> : vector<8xf32>
    %35 = vector.multi_reduction <maximumf>, %34, %cst_15 [1] : vector<8x8xf32> to vector<8xf32>
    %36 = vector.shape_cast %35 : vector<8xf32> to vector<8x1xf32>
    %37 = vector.broadcast %36 : vector<8x1xf32> to vector<8x8xf32>
    %38 = arith.subf %34, %37 : vector<8x8xf32>
    %39 = math.exp %38 : vector<8x8xf32>
    %cst_16 = arith.constant dense<0.000000e+00> : vector<8xf32>
    %40 = vector.multi_reduction <add>, %39, %cst_16 [1] : vector<8x8xf32> to vector<8xf32>
    %41 = vector.shape_cast %40 : vector<8xf32> to vector<8x1xf32>
    %42 = tpu.reciprocal %41 {approx = true} : vector<8x1xf32> -> vector<8x1xf32>
    %43 = vector.broadcast %42 : vector<8x1xf32> to vector<8x8xf32>
    %44 = arith.mulf %39, %43 : vector<8x8xf32>
    %45 = arith.truncf %44 : vector<8x8xf32> to vector<8x8xbf16>
    %46 = vector.extract_strided_slice %7 {offsets = [0, 8], sizes = [8, 8], strides = [1, 1]} : vector<8x32xbf16> to vector<8x8xbf16>
    %cst_17 = arith.constant dense<0.000000e+00> : vector<8x8xf32>
    %47 = tpu.matmul %45, %46, %cst_17 {dimension_numbers = #tpu.dot_dimension_numbers<[1], [0], [0], [1], [0, 0, 1, 1], [], []>} : vector<8x8xbf16>, vector<8x8xbf16>, vector<8x8xf32> -> vector<8x8xf32>
    %48 = arith.truncf %47 : vector<8x8xf32> to vector<8x8xbf16>
    %c0_18 = arith.constant 0 : index
    %c0_19 = arith.constant 0 : index
    %c8 = arith.constant 8 : index
    %49 = vector.load %arg4[%c0_18, %c0_19, %c8] : memref<1x8x32xbf16, #tpu.memory_space<vmem>>, vector<1x8x8xbf16>
    %50 = vector.shape_cast %49 : vector<1x8x8xbf16> to vector<8x8xbf16>
    %51 = vector.shape_cast %48 : vector<8x8xbf16> to vector<1x8x8xbf16>
    tpu.vector_store %arg4[%c0_18, %c0_19, %c8], %51 {strides = array<i32>} : memref<1x8x32xbf16, #tpu.memory_space<vmem>>, vector<1x8x8xbf16>,
    %52 = vector.extract_strided_slice %5 {offsets = [0, 16], sizes = [8, 8], strides = [1, 1]} : vector<8x32xbf16> to vector<8x8xbf16>
    %53 = vector.extract_strided_slice %6 {offsets = [0, 16], sizes = [8, 8], strides = [1, 1]} : vector<8x32xbf16> to vector<8x8xbf16>
    %cst_20 = arith.constant dense<0.000000e+00> : vector<8x8xf32>
    %54 = tpu.matmul %52, %53, %cst_20 {dimension_numbers = #tpu.dot_dimension_numbers<[1], [1], [0], [0], [0, 0, 1, 0], [], []>} : vector<8x8xbf16>, vector<8x8xbf16>, vector<8x8xf32> -> vector<8x8xf32>
    %55 = vector.broadcast %3 : vector<1x8xf32> to vector<8x8xf32>
    %56 = arith.addf %54, %55 : vector<8x8xf32>
    %cst_21 = arith.constant dense<0xFF800000> : vector<8xf32>
    %57 = vector.multi_reduction <maximumf>, %56, %cst_21 [1] : vector<8x8xf32> to vector<8xf32>
    %58 = vector.shape_cast %57 : vector<8xf32> to vector<8x1xf32>
    %59 = vector.broadcast %58 : vector<8x1xf32> to vector<8x8xf32>
    %60 = arith.subf %56, %59 : vector<8x8xf32>
    %61 = math.exp %60 : vector<8x8xf32>
    %cst_22 = arith.constant dense<0.000000e+00> : vector<8xf32>
    %62 = vector.multi_reduction <add>, %61, %cst_22 [1] : vector<8x8xf32> to vector<8xf32>
    %63 = vector.shape_cast %62 : vector<8xf32> to vector<8x1xf32>
    %64 = tpu.reciprocal %63 {approx = true} : vector<8x1xf32> -> vector<8x1xf32>
    %65 = vector.broadcast %64 : vector<8x1xf32> to vector<8x8xf32>
    %66 = arith.mulf %61, %65 : vector<8x8xf32>
    %67 = arith.truncf %66 : vector<8x8xf32> to vector<8x8xbf16>
    %68 = vector.extract_strided_slice %7 {offsets = [0, 16], sizes = [8, 8], strides = [1, 1]} : vector<8x32xbf16> to vector<8x8xbf16>
    %cst_23 = arith.constant dense<0.000000e+00> : vector<8x8xf32>
    %69 = tpu.matmul %67, %68, %cst_23 {dimension_numbers = #tpu.dot_dimension_numbers<[1], [0], [0], [1], [0, 0, 1, 1], [], []>} : vector<8x8xbf16>, vector<8x8xbf16>, vector<8x8xf32> -> vector<8x8xf32>
    %70 = arith.truncf %69 : vector<8x8xf32> to vector<8x8xbf16>
    %c0_24 = arith.constant 0 : index
    %c0_25 = arith.constant 0 : index
    %c16 = arith.constant 16 : index
    %71 = vector.load %arg4[%c0_24, %c0_25, %c16] : memref<1x8x32xbf16, #tpu.memory_space<vmem>>, vector<1x8x8xbf16>
    %72 = vector.shape_cast %71 : vector<1x8x8xbf16> to vector<8x8xbf16>
    %73 = vector.shape_cast %70 : vector<8x8xbf16> to vector<1x8x8xbf16>
    tpu.vector_store %arg4[%c0_24, %c0_25, %c16], %73 {strides = array<i32>} : memref<1x8x32xbf16, #tpu.memory_space<vmem>>, vector<1x8x8xbf16>,
    %74 = vector.extract_strided_slice %5 {offsets = [0, 24], sizes = [8, 8], strides = [1, 1]} : vector<8x32xbf16> to vector<8x8xbf16>
    %75 = vector.extract_strided_slice %6 {offsets = [0, 24], sizes = [8, 8], strides = [1, 1]} : vector<8x32xbf16> to vector<8x8xbf16>
    %cst_26 = arith.constant dense<0.000000e+00> : vector<8x8xf32>
    %76 = tpu.matmul %74, %75, %cst_26 {dimension_numbers = #tpu.dot_dimension_numbers<[1], [1], [0], [0], [0, 0, 1, 0], [], []>} : vector<8x8xbf16>, vector<8x8xbf16>, vector<8x8xf32> -> vector<8x8xf32>
    %77 = vector.broadcast %3 : vector<1x8xf32> to vector<8x8xf32>
    %78 = arith.addf %76, %77 : vector<8x8xf32>
    %cst_27 = arith.constant dense<0xFF800000> : vector<8xf32>
    %79 = vector.multi_reduction <maximumf>, %78, %cst_27 [1] : vector<8x8xf32> to vector<8xf32>
    %80 = vector.shape_cast %79 : vector<8xf32> to vector<8x1xf32>
    %81 = vector.broadcast %80 : vector<8x1xf32> to vector<8x8xf32>
    %82 = arith.subf %78, %81 : vector<8x8xf32>
    %83 = math.exp %82 : vector<8x8xf32>
    %cst_28 = arith.constant dense<0.000000e+00> : vector<8xf32>
    %84 = vector.multi_reduction <add>, %83, %cst_28 [1] : vector<8x8xf32> to vector<8xf32>
    %85 = vector.shape_cast %84 : vector<8xf32> to vector<8x1xf32>
    %86 = tpu.reciprocal %85 {approx = true} : vector<8x1xf32> -> vector<8x1xf32>
    %87 = vector.broadcast %86 : vector<8x1xf32> to vector<8x8xf32>
    %88 = arith.mulf %83, %87 : vector<8x8xf32>
    %89 = arith.truncf %88 : vector<8x8xf32> to vector<8x8xbf16>
    %90 = vector.extract_strided_slice %7 {offsets = [0, 24], sizes = [8, 8], strides = [1, 1]} : vector<8x32xbf16> to vector<8x8xbf16>
    %cst_29 = arith.constant dense<0.000000e+00> : vector<8x8xf32>
    %91 = tpu.matmul %89, %90, %cst_29 {dimension_numbers = #tpu.dot_dimension_numbers<[1], [0], [0], [1], [0, 0, 1, 1], [], []>} : vector<8x8xbf16>, vector<8x8xbf16>, vector<8x8xf32> -> vector<8x8xf32>
    %92 = arith.truncf %91 : vector<8x8xf32> to vector<8x8xbf16>
    %c0_30 = arith.constant 0 : index
    %c0_31 = arith.constant 0 : index
    %c24 = arith.constant 24 : index
    %93 = vector.load %arg4[%c0_30, %c0_31, %c24] : memref<1x8x32xbf16, #tpu.memory_space<vmem>>, vector<1x8x8xbf16>
    %94 = vector.shape_cast %93 : vector<1x8x8xbf16> to vector<8x8xbf16>
    %95 = vector.shape_cast %92 : vector<8x8xbf16> to vector<1x8x8xbf16>
    tpu.vector_store %arg4[%c0_30, %c0_31, %c24], %95 {strides = array<i32>} : memref<1x8x32xbf16, #tpu.memory_space<vmem>>, vector<1x8x8xbf16>,
    return
  }
  func.func @transform_0(%arg0: i32) -> (i32, i32, i32) {
    %c0_i32 = arith.constant 0 : i32
    %c0_i32_0 = arith.constant 0 : i32
    %c0_i32_1 = arith.constant 0 : i32
    return %arg0, %c0_i32, %c0_i32_0 : i32, i32, i32
  }
  func.func @transform_1(%arg0: i32) -> (i32, i32, i32) {
    %c0_i32 = arith.constant 0 : i32
    %c0_i32_0 = arith.constant 0 : i32
    %c0_i32_1 = arith.constant 0 : i32
    return %arg0, %c0_i32, %c0_i32_0 : i32, i32, i32
  }
  func.func @transform_2(%arg0: i32) -> (i32, i32, i32) {
    %c0_i32 = arith.constant 0 : i32
    %c0_i32_0 = arith.constant 0 : i32
    %c0_i32_1 = arith.constant 0 : i32
    return %arg0, %c0_i32, %c0_i32_0 : i32, i32, i32
  }
  func.func @transform_3(%arg0: i32) -> (i32, i32, i32) {
    %c0_i32 = arith.constant 0 : i32
    %c0_i32_0 = arith.constant 0 : i32
    %c0_i32_1 = arith.constant 0 : i32
    return %arg0, %c0_i32, %c0_i32_0 : i32, i32, i32
  }
}

module attributes {stable_mosaic.version = 11 : i64} {
  func.func @_matmul_kernel(%arg0: i32, %arg1: i32, %arg2: i32, %arg3: memref<16x32xbf16, #tpu.memory_space<vmem>>, %arg4: memref<32x32xbf16, #tpu.memory_space<vmem>>, %arg5: memref<1x32xf32, #tpu.memory_space<vmem>>, %arg6: memref<16x32xbf16, #tpu.memory_space<vmem>>, %arg7: memref<16x32xf32, #tpu.memory_space<vmem>>) attributes {dimension_semantics = [#tpu.dimension_semantics<parallel>, #tpu.dimension_semantics<parallel>, #tpu.dimension_semantics<arbitrary>], iteration_bounds = array<i64: 1, 1, 1>, scalar_prefetch = 0 : i64, scratch_operands = 1 : i64, tpu.core_type = #tpu.core_type<tc>, window_params = [{transform_indices = @transform_0, window_bounds = array<i64: 16, 32>}, {transform_indices = @transform_1, window_bounds = array<i64: 32, 32>}, {transform_indices = @transform_2, window_bounds = array<i64: 1, 32>}, {transform_indices = @transform_3, window_bounds = array<i64: 16, 32>}]} {
    %c0_i32 = arith.constant 0 : i32
    %0 = arith.cmpi eq, %arg2, %c0_i32 : i32
    %1 = arith.extui %0 : i1 to i32
    %c0_i32_0 = arith.constant 0 : i32
    %2 = arith.cmpi ne, %1, %c0_i32_0 : i32
    scf.if %2 {
      %cst_10 = arith.constant 0.000000e+00 : f32
      %12 = vector.broadcast %cst_10 : f32 to vector<16x32xf32>
      %c0_11 = arith.constant 0 : index
      %c0_12 = arith.constant 0 : index
      %13 = vector.load %arg7[%c0_11, %c0_12] : memref<16x32xf32, #tpu.memory_space<vmem>>, vector<16x32xf32>
      tpu.vector_store %arg7[%c0_11, %c0_12], %12 {strides = array<i32>} : memref<16x32xf32, #tpu.memory_space<vmem>>, vector<16x32xf32>,
    } else {
    }
    %c0 = arith.constant 0 : index
    %c0_1 = arith.constant 0 : index
    %3 = vector.load %arg7[%c0, %c0_1] : memref<16x32xf32, #tpu.memory_space<vmem>>, vector<16x32xf32>
    %c0_2 = arith.constant 0 : index
    %c0_3 = arith.constant 0 : index
    %4 = vector.load %arg3[%c0_2, %c0_3] : memref<16x32xbf16, #tpu.memory_space<vmem>>, vector<16x32xbf16>
    %c0_4 = arith.constant 0 : index
    %c0_5 = arith.constant 0 : index
    %5 = vector.load %arg4[%c0_4, %c0_5] : memref<32x32xbf16, #tpu.memory_space<vmem>>, vector<32x32xbf16>
    %cst = arith.constant dense<0.000000e+00> : vector<16x32xf32>
    %6 = tpu.matmul %4, %5, %cst {dimension_numbers = #tpu.dot_dimension_numbers<[1], [0], [0], [1], [0, 0, 1, 1], [], []>} : vector<16x32xbf16>, vector<32x32xbf16>, vector<16x32xf32> -> vector<16x32xf32>
    %7 = arith.addf %3, %6 : vector<16x32xf32>
    %c0_6 = arith.constant 0 : index
    %c0_7 = arith.constant 0 : index
    %8 = vector.load %arg7[%c0_6, %c0_7] : memref<16x32xf32, #tpu.memory_space<vmem>>, vector<16x32xf32>
    tpu.vector_store %arg7[%c0_6, %c0_7], %7 {strides = array<i32>} : memref<16x32xf32, #tpu.memory_space<vmem>>, vector<16x32xf32>,
    %c0_i32_8 = arith.constant 0 : i32
    %9 = arith.cmpi eq, %arg2, %c0_i32_8 : i32
    %10 = arith.extui %9 : i1 to i32
    %c0_i32_9 = arith.constant 0 : i32
    %11 = arith.cmpi ne, %10, %c0_i32_9 : i32
    scf.if %11 {
      %c0_10 = arith.constant 0 : index
      %c0_11 = arith.constant 0 : index
      %12 = vector.load %arg7[%c0_10, %c0_11] : memref<16x32xf32, #tpu.memory_space<vmem>>, vector<16x32xf32>
      %c0_12 = arith.constant 0 : index
      %c0_13 = arith.constant 0 : index
      %13 = vector.load %arg5[%c0_12, %c0_13] : memref<1x32xf32, #tpu.memory_space<vmem>>, vector<1x32xf32>
      %14 = vector.broadcast %13 : vector<1x32xf32> to vector<16x32xf32>
      %15 = arith.addf %12, %14 : vector<16x32xf32>
      %16 = arith.truncf %15 : vector<16x32xf32> to vector<16x32xbf16>
      %c0_14 = arith.constant 0 : index
      %c0_15 = arith.constant 0 : index
      %17 = vector.load %arg6[%c0_14, %c0_15] : memref<16x32xbf16, #tpu.memory_space<vmem>>, vector<16x32xbf16>
      tpu.vector_store %arg6[%c0_14, %c0_15], %16 {strides = array<i32>} : memref<16x32xbf16, #tpu.memory_space<vmem>>, vector<16x32xbf16>,
    } else {
    }
    return
  }
  func.func @transform_0(%arg0: i32, %arg1: i32, %arg2: i32) -> (i32, i32) {
    %c0_i32 = arith.constant 0 : i32
    return %arg0, %arg2 : i32, i32
  }
  func.func @transform_1(%arg0: i32, %arg1: i32, %arg2: i32) -> (i32, i32) {
    %c0_i32 = arith.constant 0 : i32
    return %arg2, %arg1 : i32, i32
  }
  func.func @transform_2(%arg0: i32, %arg1: i32, %arg2: i32) -> (i32, i32) {
    %c0_i32 = arith.constant 0 : i32
    %c0_i32_0 = arith.constant 0 : i32
    return %c0_i32, %arg1 : i32, i32
  }
  func.func @transform_3(%arg0: i32, %arg1: i32, %arg2: i32) -> (i32, i32) {
    %c0_i32 = arith.constant 0 : i32
    return %arg0, %arg1 : i32, i32
  }
}

module attributes {stable_mosaic.version = 11 : i64} {
  func.func @_vocab_logits_kernel(%arg0: i32, %arg1: i32, %arg2: memref<16x32xbf16, #tpu.memory_space<vmem>>, %arg3: memref<32x64xbf16, #tpu.memory_space<vmem>>, %arg4: memref<1x64xf32, #tpu.memory_space<vmem>>, %arg5: memref<16x64xf32, #tpu.memory_space<vmem>>, %arg6: memref<16x1xf32, #tpu.memory_space<vmem>>, %arg7: memref<16x1xf32, #tpu.memory_space<vmem>>) attributes {dimension_semantics = [#tpu.dimension_semantics<parallel>, #tpu.dimension_semantics<arbitrary>], iteration_bounds = array<i64: 1, 1>, scalar_prefetch = 0 : i64, scratch_operands = 0 : i64, tpu.core_type = #tpu.core_type<tc>, window_params = [{transform_indices = @transform_0, window_bounds = array<i64: 16, 32>}, {transform_indices = @transform_1, window_bounds = array<i64: 32, 64>}, {transform_indices = @transform_2, window_bounds = array<i64: 1, 64>}, {transform_indices = @transform_3, window_bounds = array<i64: 16, 64>}, {transform_indices = @transform_4, window_bounds = array<i64: 16, 1>}, {transform_indices = @transform_5, window_bounds = array<i64: 16, 1>}]} {
    %c0_i32 = arith.constant 0 : i32
    %0 = arith.cmpi eq, %arg1, %c0_i32 : i32
    %1 = arith.extui %0 : i1 to i32
    %c0_i32_0 = arith.constant 0 : i32
    %2 = arith.cmpi ne, %1, %c0_i32_0 : i32
    scf.if %2 {
      %cst_18 = arith.constant -1.000000e+30 : f32
      %26 = vector.broadcast %cst_18 : f32 to vector<16x1xf32>
      %c0_19 = arith.constant 0 : index
      %c0_20 = arith.constant 0 : index
      %27 = vector.load %arg6[%c0_19, %c0_20] : memref<16x1xf32, #tpu.memory_space<vmem>>, vector<16x1xf32>
      tpu.vector_store %arg6[%c0_19, %c0_20], %26 {strides = array<i32>} : memref<16x1xf32, #tpu.memory_space<vmem>>, vector<16x1xf32>,
      %cst_21 = arith.constant 0.000000e+00 : f32
      %28 = vector.broadcast %cst_21 : f32 to vector<16x1xf32>
      %c0_22 = arith.constant 0 : index
      %c0_23 = arith.constant 0 : index
      %29 = vector.load %arg7[%c0_22, %c0_23] : memref<16x1xf32, #tpu.memory_space<vmem>>, vector<16x1xf32>
      tpu.vector_store %arg7[%c0_22, %c0_23], %28 {strides = array<i32>} : memref<16x1xf32, #tpu.memory_space<vmem>>, vector<16x1xf32>,
    } else {
    }
    %c0 = arith.constant 0 : index
    %c0_1 = arith.constant 0 : index
    %3 = vector.load %arg2[%c0, %c0_1] : memref<16x32xbf16, #tpu.memory_space<vmem>>, vector<16x32xbf16>
    %c0_2 = arith.constant 0 : index
    %c0_3 = arith.constant 0 : index
    %4 = vector.load %arg3[%c0_2, %c0_3] : memref<32x64xbf16, #tpu.memory_space<vmem>>, vector<32x64xbf16>
    %cst = arith.constant dense<0.000000e+00> : vector<16x64xf32>
    %5 = tpu.matmul %3, %4, %cst {dimension_numbers = #tpu.dot_dimension_numbers<[1], [0], [0], [1], [0, 0, 1, 1], [], []>} : vector<16x32xbf16>, vector<32x64xbf16>, vector<16x64xf32> -> vector<16x64xf32>
    %c0_4 = arith.constant 0 : index
    %c0_5 = arith.constant 0 : index
    %6 = vector.load %arg4[%c0_4, %c0_5] : memref<1x64xf32, #tpu.memory_space<vmem>>, vector<1x64xf32>
    %7 = vector.broadcast %6 : vector<1x64xf32> to vector<16x64xf32>
    %8 = arith.addf %5, %7 : vector<16x64xf32>
    %c0_6 = arith.constant 0 : index
    %c0_7 = arith.constant 0 : index
    %9 = vector.load %arg5[%c0_6, %c0_7] : memref<16x64xf32, #tpu.memory_space<vmem>>, vector<16x64xf32>
    tpu.vector_store %arg5[%c0_6, %c0_7], %8 {strides = array<i32>} : memref<16x64xf32, #tpu.memory_space<vmem>>, vector<16x64xf32>,
    %c0_8 = arith.constant 0 : index
    %c0_9 = arith.constant 0 : index
    %10 = vector.load %arg6[%c0_8, %c0_9] : memref<16x1xf32, #tpu.memory_space<vmem>>, vector<16x1xf32>
    %cst_10 = arith.constant dense<0xFF800000> : vector<16xf32>
    %11 = vector.multi_reduction <maximumf>, %8, %cst_10 [1] : vector<16x64xf32> to vector<16xf32>
    %12 = vector.shape_cast %11 : vector<16xf32> to vector<16x1xf32>
    %13 = arith.maximumf %10, %12 : vector<16x1xf32>
    %c0_11 = arith.constant 0 : index
    %c0_12 = arith.constant 0 : index
    %14 = vector.load %arg7[%c0_11, %c0_12] : memref<16x1xf32, #tpu.memory_space<vmem>>, vector<16x1xf32>
    %15 = arith.subf %10, %13 : vector<16x1xf32>
    %16 = math.exp %15 : vector<16x1xf32>
    %17 = arith.mulf %14, %16 : vector<16x1xf32>
    %18 = vector.broadcast %13 : vector<16x1xf32> to vector<16x64xf32>
    %19 = arith.subf %8, %18 : vector<16x64xf32>
    %20 = math.exp %19 : vector<16x64xf32>
    %cst_13 = arith.constant dense<0.000000e+00> : vector<16xf32>
    %21 = vector.multi_reduction <add>, %20, %cst_13 [1] : vector<16x64xf32> to vector<16xf32>
    %22 = vector.shape_cast %21 : vector<16xf32> to vector<16x1xf32>
    %23 = arith.addf %17, %22 : vector<16x1xf32>
    %c0_14 = arith.constant 0 : index
    %c0_15 = arith.constant 0 : index
    %24 = vector.load %arg7[%c0_14, %c0_15] : memref<16x1xf32, #tpu.memory_space<vmem>>, vector<16x1xf32>
    tpu.vector_store %arg7[%c0_14, %c0_15], %23 {strides = array<i32>} : memref<16x1xf32, #tpu.memory_space<vmem>>, vector<16x1xf32>,
    %c0_16 = arith.constant 0 : index
    %c0_17 = arith.constant 0 : index
    %25 = vector.load %arg6[%c0_16, %c0_17] : memref<16x1xf32, #tpu.memory_space<vmem>>, vector<16x1xf32>
    tpu.vector_store %arg6[%c0_16, %c0_17], %13 {strides = array<i32>} : memref<16x1xf32, #tpu.memory_space<vmem>>, vector<16x1xf32>,
    return
  }
  func.func @transform_0(%arg0: i32, %arg1: i32) -> (i32, i32) {
    %c0_i32 = arith.constant 0 : i32
    %c0_i32_0 = arith.constant 0 : i32
    return %arg0, %c0_i32 : i32, i32
  }
  func.func @transform_1(%arg0: i32, %arg1: i32) -> (i32, i32) {
    %c0_i32 = arith.constant 0 : i32
    %c0_i32_0 = arith.constant 0 : i32
    return %c0_i32, %arg1 : i32, i32
  }
  func.func @transform_2(%arg0: i32, %arg1: i32) -> (i32, i32) {
    %c0_i32 = arith.constant 0 : i32
    %c0_i32_0 = arith.constant 0 : i32
    return %c0_i32, %arg1 : i32, i32
  }
  func.func @transform_3(%arg0: i32, %arg1: i32) -> (i32, i32) {
    %c0_i32 = arith.constant 0 : i32
    return %arg0, %arg1 : i32, i32
  }
  func.func @transform_4(%arg0: i32, %arg1: i32) -> (i32, i32) {
    %c0_i32 = arith.constant 0 : i32
    %c0_i32_0 = arith.constant 0 : i32
    return %arg0, %c0_i32 : i32, i32
  }
  func.func @transform_5(%arg0: i32, %arg1: i32) -> (i32, i32) {
    %c0_i32 = arith.constant 0 : i32
    %c0_i32_0 = arith.constant 0 : i32
    return %arg0, %c0_i32 : i32, i32
  }
}

module attributes {stable_mosaic.version = 11 : i64} {
  func.func @_logsoftmax_apply_kernel(%arg0: i32, %arg1: i32, %arg2: memref<16x64xf32, #tpu.memory_space<vmem>>, %arg3: memref<16x1xf32, #tpu.memory_space<vmem>>, %arg4: memref<16x1xf32, #tpu.memory_space<vmem>>, %arg5: memref<16x64xf32, #tpu.memory_space<vmem>>) attributes {dimension_semantics = [#tpu.dimension_semantics<parallel>, #tpu.dimension_semantics<parallel>], iteration_bounds = array<i64: 1, 1>, scalar_prefetch = 0 : i64, scratch_operands = 0 : i64, tpu.core_type = #tpu.core_type<tc>, window_params = [{transform_indices = @transform_0, window_bounds = array<i64: 16, 64>}, {transform_indices = @transform_1, window_bounds = array<i64: 16, 1>}, {transform_indices = @transform_2, window_bounds = array<i64: 16, 1>}, {transform_indices = @transform_3, window_bounds = array<i64: 16, 64>}]} {
    %c0 = arith.constant 0 : index
    %c0_0 = arith.constant 0 : index
    %0 = vector.load %arg2[%c0, %c0_0] : memref<16x64xf32, #tpu.memory_space<vmem>>, vector<16x64xf32>
    %c0_1 = arith.constant 0 : index
    %c0_2 = arith.constant 0 : index
    %1 = vector.load %arg3[%c0_1, %c0_2] : memref<16x1xf32, #tpu.memory_space<vmem>>, vector<16x1xf32>
    %c0_3 = arith.constant 0 : index
    %c0_4 = arith.constant 0 : index
    %2 = vector.load %arg4[%c0_3, %c0_4] : memref<16x1xf32, #tpu.memory_space<vmem>>, vector<16x1xf32>
    %3 = math.log %2 : vector<16x1xf32>
    %4 = arith.addf %1, %3 : vector<16x1xf32>
    %5 = vector.broadcast %4 : vector<16x1xf32> to vector<16x64xf32>
    %6 = arith.subf %0, %5 : vector<16x64xf32>
    %c0_5 = arith.constant 0 : index
    %c0_6 = arith.constant 0 : index
    %7 = vector.load %arg5[%c0_5, %c0_6] : memref<16x64xf32, #tpu.memory_space<vmem>>, vector<16x64xf32>
    tpu.vector_store %arg5[%c0_5, %c0_6], %6 {strides = array<i32>} : memref<16x64xf32, #tpu.memory_space<vmem>>, vector<16x64xf32>,
    return
  }
  func.func @transform_0(%arg0: i32, %arg1: i32) -> (i32, i32) {
    %c0_i32 = arith.constant 0 : i32
    return %arg0, %arg1 : i32, i32
  }
  func.func @transform_1(%arg0: i32, %arg1: i32) -> (i32, i32) {
    %c0_i32 = arith.constant 0 : i32
    %c0_i32_0 = arith.constant 0 : i32
    return %arg0, %c0_i32 : i32, i32
  }
  func.func @transform_2(%arg0: i32, %arg1: i32) -> (i32, i32) {
    %c0_i32 = arith.constant 0 : i32
    %c0_i32_0 = arith.constant 0 : i32
    return %arg0, %c0_i32 : i32, i32
  }
  func.func @transform_3(%arg0: i32, %arg1: i32) -> (i32, i32) {
    %c0_i32 = arith.constant 0 : i32
    return %arg0, %arg1 : i32, i32
  }
}

module attributes {stable_mosaic.version = 11 : i64} {
  func.func @_matmul_kernel(%arg0: i32, %arg1: i32, %arg2: i32, %arg3: memref<2x32xbf16, #tpu.memory_space<vmem>>, %arg4: memref<32x32xbf16, #tpu.memory_space<vmem>>, %arg5: memref<1x32xf32, #tpu.memory_space<vmem>>, %arg6: memref<2x32xbf16, #tpu.memory_space<vmem>>, %arg7: memref<2x32xf32, #tpu.memory_space<vmem>>) attributes {dimension_semantics = [#tpu.dimension_semantics<parallel>, #tpu.dimension_semantics<parallel>, #tpu.dimension_semantics<arbitrary>], iteration_bounds = array<i64: 1, 1, 1>, scalar_prefetch = 0 : i64, scratch_operands = 1 : i64, tpu.core_type = #tpu.core_type<tc>, window_params = [{transform_indices = @transform_0, window_bounds = array<i64: 2, 32>}, {transform_indices = @transform_1, window_bounds = array<i64: 32, 32>}, {transform_indices = @transform_2, window_bounds = array<i64: 1, 32>}, {transform_indices = @transform_3, window_bounds = array<i64: 2, 32>}]} {
    %c0_i32 = arith.constant 0 : i32
    %0 = arith.cmpi eq, %arg2, %c0_i32 : i32
    %1 = arith.extui %0 : i1 to i32
    %c0_i32_0 = arith.constant 0 : i32
    %2 = arith.cmpi ne, %1, %c0_i32_0 : i32
    scf.if %2 {
      %cst_10 = arith.constant 0.000000e+00 : f32
      %12 = vector.broadcast %cst_10 : f32 to vector<2x32xf32>
      %c0_11 = arith.constant 0 : index
      %c0_12 = arith.constant 0 : index
      %13 = vector.load %arg7[%c0_11, %c0_12] : memref<2x32xf32, #tpu.memory_space<vmem>>, vector<2x32xf32>
      tpu.vector_store %arg7[%c0_11, %c0_12], %12 {strides = array<i32>} : memref<2x32xf32, #tpu.memory_space<vmem>>, vector<2x32xf32>,
    } else {
    }
    %c0 = arith.constant 0 : index
    %c0_1 = arith.constant 0 : index
    %3 = vector.load %arg7[%c0, %c0_1] : memref<2x32xf32, #tpu.memory_space<vmem>>, vector<2x32xf32>
    %c0_2 = arith.constant 0 : index
    %c0_3 = arith.constant 0 : index
    %4 = vector.load %arg3[%c0_2, %c0_3] : memref<2x32xbf16, #tpu.memory_space<vmem>>, vector<2x32xbf16>
    %c0_4 = arith.constant 0 : index
    %c0_5 = arith.constant 0 : index
    %5 = vector.load %arg4[%c0_4, %c0_5] : memref<32x32xbf16, #tpu.memory_space<vmem>>, vector<32x32xbf16>
    %cst = arith.constant dense<0.000000e+00> : vector<2x32xf32>
    %6 = tpu.matmul %4, %5, %cst {dimension_numbers = #tpu.dot_dimension_numbers<[1], [0], [0], [1], [0, 0, 1, 1], [], []>} : vector<2x32xbf16>, vector<32x32xbf16>, vector<2x32xf32> -> vector<2x32xf32>
    %7 = arith.addf %3, %6 : vector<2x32xf32>
    %c0_6 = arith.constant 0 : index
    %c0_7 = arith.constant 0 : index
    %8 = vector.load %arg7[%c0_6, %c0_7] : memref<2x32xf32, #tpu.memory_space<vmem>>, vector<2x32xf32>
    tpu.vector_store %arg7[%c0_6, %c0_7], %7 {strides = array<i32>} : memref<2x32xf32, #tpu.memory_space<vmem>>, vector<2x32xf32>,
    %c0_i32_8 = arith.constant 0 : i32
    %9 = arith.cmpi eq, %arg2, %c0_i32_8 : i32
    %10 = arith.extui %9 : i1 to i32
    %c0_i32_9 = arith.constant 0 : i32
    %11 = arith.cmpi ne, %10, %c0_i32_9 : i32
    scf.if %11 {
      %c0_10 = arith.constant 0 : index
      %c0_11 = arith.constant 0 : index
      %12 = vector.load %arg7[%c0_10, %c0_11] : memref<2x32xf32, #tpu.memory_space<vmem>>, vector<2x32xf32>
      %c0_12 = arith.constant 0 : index
      %c0_13 = arith.constant 0 : index
      %13 = vector.load %arg5[%c0_12, %c0_13] : memref<1x32xf32, #tpu.memory_space<vmem>>, vector<1x32xf32>
      %14 = vector.broadcast %13 : vector<1x32xf32> to vector<2x32xf32>
      %15 = arith.addf %12, %14 : vector<2x32xf32>
      %16 = math.tanh %15 : vector<2x32xf32>
      %17 = arith.truncf %16 : vector<2x32xf32> to vector<2x32xbf16>
      %c0_14 = arith.constant 0 : index
      %c0_15 = arith.constant 0 : index
      %18 = vector.load %arg6[%c0_14, %c0_15] : memref<2x32xbf16, #tpu.memory_space<vmem>>, vector<2x32xbf16>
      tpu.vector_store %arg6[%c0_14, %c0_15], %17 {strides = array<i32>} : memref<2x32xbf16, #tpu.memory_space<vmem>>, vector<2x32xbf16>,
    } else {
    }
    return
  }
  func.func @transform_0(%arg0: i32, %arg1: i32, %arg2: i32) -> (i32, i32) {
    %c0_i32 = arith.constant 0 : i32
    return %arg0, %arg2 : i32, i32
  }
  func.func @transform_1(%arg0: i32, %arg1: i32, %arg2: i32) -> (i32, i32) {
    %c0_i32 = arith.constant 0 : i32
    return %arg2, %arg1 : i32, i32
  }
  func.func @transform_2(%arg0: i32, %arg1: i32, %arg2: i32) -> (i32, i32) {
    %c0_i32 = arith.constant 0 : i32
    %c0_i32_0 = arith.constant 0 : i32
    return %c0_i32, %arg1 : i32, i32
  }
  func.func @transform_3(%arg0: i32, %arg1: i32, %arg2: i32) -> (i32, i32) {
    %c0_i32 = arith.constant 0 : i32
    return %arg0, %arg1 : i32, i32
  }
}

module attributes {stable_mosaic.version = 11 : i64} {
  func.func @_matmul_kernel(%arg0: i32, %arg1: i32, %arg2: i32, %arg3: memref<2x32xbf16, #tpu.memory_space<vmem>>, %arg4: memref<32x8xbf16, #tpu.memory_space<vmem>>, %arg5: memref<1x8xf32, #tpu.memory_space<vmem>>, %arg6: memref<2x8xf32, #tpu.memory_space<vmem>>, %arg7: memref<2x8xf32, #tpu.memory_space<vmem>>) attributes {dimension_semantics = [#tpu.dimension_semantics<parallel>, #tpu.dimension_semantics<parallel>, #tpu.dimension_semantics<arbitrary>], iteration_bounds = array<i64: 1, 1, 1>, scalar_prefetch = 0 : i64, scratch_operands = 1 : i64, tpu.core_type = #tpu.core_type<tc>, window_params = [{transform_indices = @transform_0, window_bounds = array<i64: 2, 32>}, {transform_indices = @transform_1, window_bounds = array<i64: 32, 8>}, {transform_indices = @transform_2, window_bounds = array<i64: 1, 8>}, {transform_indices = @transform_3, window_bounds = array<i64: 2, 8>}]} {
    %c0_i32 = arith.constant 0 : i32
    %0 = arith.cmpi eq, %arg2, %c0_i32 : i32
    %1 = arith.extui %0 : i1 to i32
    %c0_i32_0 = arith.constant 0 : i32
    %2 = arith.cmpi ne, %1, %c0_i32_0 : i32
    scf.if %2 {
      %cst_10 = arith.constant 0.000000e+00 : f32
      %12 = vector.broadcast %cst_10 : f32 to vector<2x8xf32>
      %c0_11 = arith.constant 0 : index
      %c0_12 = arith.constant 0 : index
      %13 = vector.load %arg7[%c0_11, %c0_12] : memref<2x8xf32, #tpu.memory_space<vmem>>, vector<2x8xf32>
      tpu.vector_store %arg7[%c0_11, %c0_12], %12 {strides = array<i32>} : memref<2x8xf32, #tpu.memory_space<vmem>>, vector<2x8xf32>,
    } else {
    }
    %c0 = arith.constant 0 : index
    %c0_1 = arith.constant 0 : index
    %3 = vector.load %arg7[%c0, %c0_1] : memref<2x8xf32, #tpu.memory_space<vmem>>, vector<2x8xf32>
    %c0_2 = arith.constant 0 : index
    %c0_3 = arith.constant 0 : index
    %4 = vector.load %arg3[%c0_2, %c0_3] : memref<2x32xbf16, #tpu.memory_space<vmem>>, vector<2x32xbf16>
    %c0_4 = arith.constant 0 : index
    %c0_5 = arith.constant 0 : index
    %5 = vector.load %arg4[%c0_4, %c0_5] : memref<32x8xbf16, #tpu.memory_space<vmem>>, vector<32x8xbf16>
    %cst = arith.constant dense<0.000000e+00> : vector<2x8xf32>
    %6 = tpu.matmul %4, %5, %cst {dimension_numbers = #tpu.dot_dimension_numbers<[1], [0], [0], [1], [0, 0, 1, 1], [], []>} : vector<2x32xbf16>, vector<32x8xbf16>, vector<2x8xf32> -> vector<2x8xf32>
    %7 = arith.addf %3, %6 : vector<2x8xf32>
    %c0_6 = arith.constant 0 : index
    %c0_7 = arith.constant 0 : index
    %8 = vector.load %arg7[%c0_6, %c0_7] : memref<2x8xf32, #tpu.memory_space<vmem>>, vector<2x8xf32>
    tpu.vector_store %arg7[%c0_6, %c0_7], %7 {strides = array<i32>} : memref<2x8xf32, #tpu.memory_space<vmem>>, vector<2x8xf32>,
    %c0_i32_8 = arith.constant 0 : i32
    %9 = arith.cmpi eq, %arg2, %c0_i32_8 : i32
    %10 = arith.extui %9 : i1 to i32
    %c0_i32_9 = arith.constant 0 : i32
    %11 = arith.cmpi ne, %10, %c0_i32_9 : i32
    scf.if %11 {
      %c0_10 = arith.constant 0 : index
      %c0_11 = arith.constant 0 : index
      %12 = vector.load %arg7[%c0_10, %c0_11] : memref<2x8xf32, #tpu.memory_space<vmem>>, vector<2x8xf32>
      %c0_12 = arith.constant 0 : index
      %c0_13 = arith.constant 0 : index
      %13 = vector.load %arg5[%c0_12, %c0_13] : memref<1x8xf32, #tpu.memory_space<vmem>>, vector<1x8xf32>
      %14 = vector.broadcast %13 : vector<1x8xf32> to vector<2x8xf32>
      %15 = arith.addf %12, %14 : vector<2x8xf32>
      %c0_14 = arith.constant 0 : index
      %c0_15 = arith.constant 0 : index
      %16 = vector.load %arg6[%c0_14, %c0_15] : memref<2x8xf32, #tpu.memory_space<vmem>>, vector<2x8xf32>
      tpu.vector_store %arg6[%c0_14, %c0_15], %15 {strides = array<i32>} : memref<2x8xf32, #tpu.memory_space<vmem>>, vector<2x8xf32>,
    } else {
    }
    return
  }
  func.func @transform_0(%arg0: i32, %arg1: i32, %arg2: i32) -> (i32, i32) {
    %c0_i32 = arith.constant 0 : i32
    return %arg0, %arg2 : i32, i32
  }
  func.func @transform_1(%arg0: i32, %arg1: i32, %arg2: i32) -> (i32, i32) {
    %c0_i32 = arith.constant 0 : i32
    return %arg2, %arg1 : i32, i32
  }
  func.func @transform_2(%arg0: i32, %arg1: i32, %arg2: i32) -> (i32, i32) {
    %c0_i32 = arith.constant 0 : i32
    %c0_i32_0 = arith.constant 0 : i32
    return %c0_i32, %arg1 : i32, i32
  }
  func.func @transform_3(%arg0: i32, %arg1: i32, %arg2: i32) -> (i32, i32) {
    %c0_i32 = arith.constant 0 : i32
    return %arg0, %arg1 : i32, i32
  }
}

</mosaic_0001>

<llo_original>
// kernel: transformer_forward.37
$region0: #{transformer_forward.37}
  #allocation0 [shape = 'u32[]', space=smem, size = 0x4, offset = 0x4, fixed_abs, tag = 'smem constant byte address 0x4 - core index']
  #allocation1 [shape = 'u32[144,128]{1,0:T(1,128)}', space=vmem, size = 0x12000, scoped, tag = 'internal scratch']
  #allocation2 [shape = 'f32[16,64]{1,0:T(8,128)}', space=vmem, size = 0x2000, scoped, tag = 'scratch operand']
  %s0 = inlined_call_operand.vmem [shape: bf16[16,32], index: 0, kind: input, shape index: {}]
  %s1 = inlined_call_operand.vmem [shape: bf16[32,64], index: 1, kind: input, shape index: {}]
  %s2 = inlined_call_operand.vmem [shape: f32[1,64], index: 2, kind: input, shape index: {}]
  %s3 = inlined_call_operand.vmem [shape: bf16[16,64], index: 3, kind: output, shape index: {}]
  %s4 = sld [smem:[#allocation0]]
  $region30: #{transformer_forward.37} parent=0
    _
  %s6 = ssub.s32 1, %s4
  %s7 = scalar_select 0, %s6, %s4
  // Predicated region
  $region2: #{transformer_forward.37} parent=0 // pred_check
    _
  $region3: #{transformer_forward.37} parent=0 // pred_check_branch
    %9 = sbr.rel (0) target = $region5
  $region4: #{transformer_forward.37} parent=0 // pred_region
    _
  $region5: #{transformer_forward.37} parent=0 // pred_fallthru
    _
  // Predicated region
  $region6: #{transformer_forward.37} parent=0 // pred_check
    _
  $region7: #{transformer_forward.37} parent=0 // pred_check_branch
    %11 = sbr.rel (0) target = $region9
  $region8: #{transformer_forward.37} parent=0 // pred_region
    _
  $region9: #{transformer_forward.37} parent=0 // pred_fallthru
    _
  // Predicated region
  $region10: #{transformer_forward.37} parent=0 // pred_check
    _
  $region11: #{transformer_forward.37} parent=0 // pred_check_branch
    %13 = sbr.rel (0) target = $region13
  $region12: #{transformer_forward.37} parent=0 // pred_region
    _
  $region13: #{transformer_forward.37} parent=0 // pred_fallthru
    _
  %p15 = scmp.eq.s32.totalorder 0, 0
  // Predicated region
  $region14: #{transformer_forward.37} parent=0 // pred_check
    %p16 = pneg %p15
  $region15: #{transformer_forward.37} parent=0 // pred_check_branch
    %18 = sbr.rel (%p16) target = $region17
  $region16: #{transformer_forward.37} parent=0 // pred_region
    %vm19 = vcmask 523264
    %20 = vst.msk [vmem:[#allocation2] sm:$0xff] %vm19, 0.0
    %21 = vst.msk [vmem:[#allocation2 + $0x8] sm:$0xff] %vm19, 0.0
  $region17: #{transformer_forward.37} parent=0 // pred_fallthru
    _
  %v22 = vld [vmem:[#allocation2] sm:$0xff]
  %v23 = vld [vmem:[#allocation2 + $0x8] sm:$0xff]
  %v24 = vld [vmem:[%s0] sm:$0xf]
  %v25 = vld [vmem:[%s0 + $0x4] sm:$0xf]
  %v26 = vld [vmem:[%s1] sm:$0xf]
  %v27 = vld [vmem:[%s1 + $0x4] sm:$0xf]
  %v28 = vld [vmem:[%s1 + $0x8] sm:$0xf]
  %v29 = vld [vmem:[%s1 + $0xc] sm:$0xf]
  %v32 = vunpack.c.l.b16 %v24
  %v33 = vunpack.c.l.b16 %v25
  %v34 = vpack.c.b16 %v33, %v32
  %v39 = vunpack.c.l.b16 %v26
  %v40 = vunpack.c.l.b16 %v27
  %v41 = vunpack.c.l.b16 %v28
  %v42 = vunpack.c.l.b16 %v29
  %v43 = vpack.c.b16 %v40, %v39
  %v44 = vpack.c.b16 %v42, %v41
  %vm47 = vcmask 261120
  %v49 = vsel %vm47, %v34, 0
  %51 = vmatprep.subr.bf16.mxu0 0
  %52 = vmatpush1.bf16.msra.mxu0 %v43
  %53 = vmatprep.subr.bf16.mxu0 0
  %54 = vmatpush1.bf16.msra.mxu0 %v44
  %55 = vmatprep.subr.bf16.mxu0 0
  %56 = vmatpush1.bf16.msra.mxu0 0
  %57 = vmatprep.subr.bf16.mxu0 0
  %58 = vmatpush1.bf16.msra.mxu0 0
  %59 = vmatprep.subr.bf16.mxu0 0
  %60 = vmatpush1.bf16.msra.mxu0 0
  %61 = vmatprep.subr.bf16.mxu0 0
  %62 = vmatpush1.bf16.msra.mxu0 0
  %63 = vmatprep.subr.bf16.mxu0 0
  %64 = vmatpush1.bf16.msra.mxu0 0
  %65 = vmatprep.subr.bf16.mxu0 0
  %66 = vmatpush1.bf16.msra.mxu0 0
  %67 = vmatprep.subr.bf16.mxu0 0
  %68 = vmatpush1.bf16.msra.mxu0 0
  %69 = vmatprep.subr.bf16.mxu0 0
  %70 = vmatpush1.bf16.msra.mxu0 0
  %71 = vmatprep.subr.bf16.mxu0 0
  %72 = vmatpush1.bf16.msra.mxu0 0
  %73 = vmatprep.subr.bf16.mxu0 0
  %74 = vmatpush1.bf16.msra.mxu0 0
  %75 = vmatprep.subr.bf16.mxu0 0
  %76 = vmatpush1.bf16.msra.mxu0 0
  %77 = vmatprep.subr.bf16.mxu0 0
  %78 = vmatpush1.bf16.msra.mxu0 0
  %79 = vmatprep.subr.bf16.mxu0 0
  %80 = vmatpush1.bf16.msra.mxu0 0
  %81 = vmatprep.subr.bf16.mxu0 0
  %82 = vmatpush1.bf16.msra.mxu0 0
  %83 = vmatprep.mubr.bf16.mxu0 0
  %84 = vmatmul.mubr.bf16.gmra.mrb[0].mxu0 %v49
  %v85 = vpop.f32.mrb[0].mxu0
  %v86 = vadd.f32 0.0, %v85
  %v87 = vpop.f32.mrb[0].mxu0
  %v88 = vpop.f32.mrb[0].mxu0
  %v89 = vadd.f32 0.0, %v88
  %v90 = vpop.f32.mrb[0].mxu0
  %91 = vdwg.mxu0
  %v92 = vadd.f32 %v22, %v86
  %v93 = vadd.f32 %v23, %v89
  %vm94 = vcmask 523264
  %95 = vst.msk [vmem:[#allocation2] sm:$0xff] %vm94, %v92
  %96 = vst.msk [vmem:[#allocation2 + $0x8] sm:$0xff] %vm94, %v93
  // Predicated region
  $region18: #{transformer_forward.37} parent=0 // pred_check
    %p97 = pneg %p15
  $region19: #{transformer_forward.37} parent=0 // pred_check_branch
    %99 = sbr.rel (%p97) target = $region21
  $region20: #{transformer_forward.37} parent=0 // pred_region
    %v100 = vld [vmem:[#allocation2] sm:$0xff]
    %v101 = vld [vmem:[#allocation2 + $0x8] sm:$0xff]
    %v102 = vld [vmem:[%s2] sm:$0x1]
    %v104 = vlaneseq
    %v105 = vshrl.u32 %v104, 7
    %v106 = vsub.s32 0, %v105
    %v107 = vrot.slane %v102, %v106
    %v109 = vadd.f32 %v100, %v107
    %v110 = vadd.f32 %v101, %v107
    %v111 = vmax.f32 %v109, 0.0
    %v112 = vmax.f32 %v110, 0.0
    %v113 = vpack.c.bf16 %v112, %v111
    %v115 = vunpack.c.l.b16 %v113
    %v116 = vunpack.c.h.b16 %v113
    %v117 = vpack.c.b16 %v115, %v115
    %v118 = vpack.c.b16 %v116, %v116
    %vm121 = vcmask 519168
    %122 = vst.msk [vmem:[%s3] sm:$0xf] %vm121, %v117
    %123 = vst.msk [vmem:[%s3 + $0x4] sm:$0xf] %vm121, %v118
  $region21: #{transformer_forward.37} parent=0 // pred_fallthru
    _
  // Predicated region
  $region22: #{transformer_forward.37} parent=0 // pred_check
    _
  $region23: #{transformer_forward.37} parent=0 // pred_check_branch
    %125 = sbr.rel (0) target = $region25
  $region24: #{transformer_forward.37} parent=0 // pred_region
    _
  $region25: #{transformer_forward.37} parent=0 // pred_fallthru
    _
  // Predicated region
  $region26: #{transformer_forward.37} parent=0 // pred_check
    _
  $region27: #{transformer_forward.37} parent=0 // pred_check_branch
    %127 = sbr.rel (0) target = $region29
  $region28: #{transformer_forward.37} parent=0 // pred_region
    _
  $region29: #{transformer_forward.37} parent=0 // pred_fallthru
    _

// kernel: transformer_forward.36
$region0: #{transformer_forward.36}
  #allocation0 [shape = 'u32[]', space=smem, size = 0x4, offset = 0x4, fixed_abs, tag = 'smem constant byte address 0x4 - core index']
  #allocation1 [shape = 'u32[144,128]{1,0:T(1,128)}', space=vmem, size = 0x12000, scoped, tag = 'internal scratch']
  #allocation2 [shape = 'f32[16,32]{1,0:T(8,128)}', space=vmem, size = 0x2000, scoped, tag = 'scratch operand']
  %s0 = inlined_call_operand.vmem [shape: bf16[16,32], index: 0, kind: input, shape index: {}]
  %s1 = inlined_call_operand.vmem [shape: bf16[32,32], index: 1, kind: input, shape index: {}]
  %s2 = inlined_call_operand.vmem [shape: f32[1,32], index: 2, kind: input, shape index: {}]
  %s3 = inlined_call_operand.vmem [shape: bf16[16,32], index: 3, kind: input, shape index: {}]
  %s4 = inlined_call_operand.vmem [shape: f32[1,32], index: 4, kind: input, shape index: {}]
  %s5 = inlined_call_operand.vmem [shape: f32[1,32], index: 5, kind: input, shape index: {}]
  %s6 = inlined_call_operand.vmem [shape: bf16[16,32], index: 6, kind: output, shape index: {}]
  %s7 = sld [smem:[#allocation0]]
  $region42: #{transformer_forward.36} parent=0
    _
  %s9 = ssub.s32 1, %s7
  %s10 = scalar_select 0, %s9, %s7
  // Predicated region
  $region2: #{transformer_forward.36} parent=0 // pred_check
    _
  $region3: #{transformer_forward.36} parent=0 // pred_check_branch
    %12 = sbr.rel (0) target = $region5
  $region4: #{transformer_forward.36} parent=0 // pred_region
    _
  $region5: #{transformer_forward.36} parent=0 // pred_fallthru
    _
  // Predicated region
  $region6: #{transformer_forward.36} parent=0 // pred_check
    _
  $region7: #{transformer_forward.36} parent=0 // pred_check_branch
    %14 = sbr.rel (0) target = $region9
  $region8: #{transformer_forward.36} parent=0 // pred_region
    _
  $region9: #{transformer_forward.36} parent=0 // pred_fallthru
    _
  // Predicated region
  $region10: #{transformer_forward.36} parent=0 // pred_check
    _
  $region11: #{transformer_forward.36} parent=0 // pred_check_branch
    %16 = sbr.rel (0) target = $region13
  $region12: #{transformer_forward.36} parent=0 // pred_region
    _
  $region13: #{transformer_forward.36} parent=0 // pred_fallthru
    _
  // Predicated region
  $region14: #{transformer_forward.36} parent=0 // pred_check
    _
  $region15: #{transformer_forward.36} parent=0 // pred_check_branch
    %18 = sbr.rel (0) target = $region17
  $region16: #{transformer_forward.36} parent=0 // pred_region
    _
  $region17: #{transformer_forward.36} parent=0 // pred_fallthru
    _
  // Predicated region
  $region18: #{transformer_forward.36} parent=0 // pred_check
    _
  $region19: #{transformer_forward.36} parent=0 // pred_check_branch
    %20 = sbr.rel (0) target = $region21
  $region20: #{transformer_forward.36} parent=0 // pred_region
    _
  $region21: #{transformer_forward.36} parent=0 // pred_fallthru
    _
  // Predicated region
  $region22: #{transformer_forward.36} parent=0 // pred_check
    _
  $region23: #{transformer_forward.36} parent=0 // pred_check_branch
    %22 = sbr.rel (0) target = $region25
  $region24: #{transformer_forward.36} parent=0 // pred_region
    _
  $region25: #{transformer_forward.36} parent=0 // pred_fallthru
    _
  %p24 = scmp.eq.s32.totalorder 0, 0
  // Predicated region
  $region26: #{transformer_forward.36} parent=0 // pred_check
    %p25 = pneg %p24
  $region27: #{transformer_forward.36} parent=0 // pred_check_branch
    %27 = sbr.rel (%p25) target = $region29
  $region28: #{transformer_forward.36} parent=0 // pred_region
    %vm28 = vcmask 261120
    %29 = vst.msk [vmem:[#allocation2] sm:$0xff] %vm28, 0.0
    %30 = vst.msk [vmem:[#allocation2 + $0x8] sm:$0xff] %vm28, 0.0
  $region29: #{transformer_forward.36} parent=0 // pred_fallthru
    _
  %v31 = vld [vmem:[#allocation2] sm:$0xff]
  %v32 = vld [vmem:[#allocation2 + $0x8] sm:$0xff]
  %v33 = vld [vmem:[%s0] sm:$0xf]
  %v34 = vld [vmem:[%s0 + $0x4] sm:$0xf]
  %v35 = vld [vmem:[%s1] sm:$0xf]
  %v36 = vld [vmem:[%s1 + $0x4] sm:$0xf]
  %v37 = vld [vmem:[%s1 + $0x8] sm:$0xf]
  %v38 = vld [vmem:[%s1 + $0xc] sm:$0xf]
  %v41 = vunpack.c.l.b16 %v33
  %v42 = vunpack.c.l.b16 %v34
  %v43 = vpack.c.b16 %v42, %v41
  %v48 = vunpack.c.l.b16 %v35
  %v49 = vunpack.c.l.b16 %v36
  %v50 = vunpack.c.l.b16 %v37
  %v51 = vunpack.c.l.b16 %v38
  %v52 = vpack.c.b16 %v49, %v48
  %v53 = vpack.c.b16 %v51, %v50
  %vm56 = vcmask 261120
  %v58 = vsel %vm56, %v43, 0
  %60 = vmatprep.subr.bf16.mxu0 0
  %61 = vmatpush1.bf16.msra.mxu0 %v52
  %62 = vmatprep.subr.bf16.mxu0 0
  %63 = vmatpush1.bf16.msra.mxu0 %v53
  %64 = vmatprep.subr.bf16.mxu0 0
  %65 = vmatpush1.bf16.msra.mxu0 0
  %66 = vmatprep.subr.bf16.mxu0 0
  %67 = vmatpush1.bf16.msra.mxu0 0
  %68 = vmatprep.subr.bf16.mxu0 0
  %69 = vmatpush1.bf16.msra.mxu0 0
  %70 = vmatprep.subr.bf16.mxu0 0
  %71 = vmatpush1.bf16.msra.mxu0 0
  %72 = vmatprep.subr.bf16.mxu0 0
  %73 = vmatpush1.bf16.msra.mxu0 0
  %74 = vmatprep.subr.bf16.mxu0 0
  %75 = vmatpush1.bf16.msra.mxu0 0
  %76 = vmatprep.subr.bf16.mxu0 0
  %77 = vmatpush1.bf16.msra.mxu0 0
  %78 = vmatprep.subr.bf16.mxu0 0
  %79 = vmatpush1.bf16.msra.mxu0 0
  %80 = vmatprep.subr.bf16.mxu0 0
  %81 = vmatpush1.bf16.msra.mxu0 0
  %82 = vmatprep.subr.bf16.mxu0 0
  %83 = vmatpush1.bf16.msra.mxu0 0
  %84 = vmatprep.subr.bf16.mxu0 0
  %85 = vmatpush1.bf16.msra.mxu0 0
  %86 = vmatprep.subr.bf16.mxu0 0
  %87 = vmatpush1.bf16.msra.mxu0 0
  %88 = vmatprep.subr.bf16.mxu0 0
  %89 = vmatpush1.bf16.msra.mxu0 0
  %90 = vmatprep.subr.bf16.mxu0 0
  %91 = vmatpush1.bf16.msra.mxu0 0
  %92 = vmatprep.mubr.bf16.mxu0 0
  %93 = vmatmul.mubr.bf16.gmra.mrb[0].mxu0 %v58
  %v94 = vpop.f32.mrb[0].mxu0
  %v95 = vadd.f32 0.0, %v94
  %v96 = vpop.f32.mrb[0].mxu0
  %v97 = vpop.f32.mrb[0].mxu0
  %v98 = vadd.f32 0.0, %v97
  %v99 = vpop.f32.mrb[0].mxu0
  %100 = vdwg.mxu0
  %v101 = vadd.f32 %v31, %v95
  %v102 = vadd.f32 %v32, %v98
  %103 = vst.msk [vmem:[#allocation2] sm:$0xff] %vm56, %v101
  %104 = vst.msk [vmem:[#allocation2 + $0x8] sm:$0xff] %vm56, %v102
  // Predicated region
  $region30: #{transformer_forward.36} parent=0 // pred_check
    %p105 = pneg %p24
  $region31: #{transformer_forward.36} parent=0 // pred_check_branch
    %107 = sbr.rel (%p105) target = $region33
  $region32: #{transformer_forward.36} parent=0 // pred_region
    %v108 = vld [vmem:[#allocation2] sm:$0xff]
    %v109 = vld [vmem:[#allocation2 + $0x8] sm:$0xff]
    %v110 = vld [vmem:[%s2] sm:$0x1]
    %v112 = vlaneseq
    %v113 = vshrl.u32 %v112, 7
    %v114 = vsub.s32 0, %v113
    %v115 = vrot.slane %v110, %v114
    %v117 = vadd.f32 %v108, %v115
    %v118 = vadd.f32 %v109, %v115
    %v119 = vld [vmem:[%s3] sm:$0xf]
    %v120 = vld [vmem:[%s3 + $0x4] sm:$0xf]
    %v121 = vunpack.c.l.bf16 %v119
    %v122 = vunpack.c.l.bf16 %v120
    %v123 = vadd.f32 %v117, %v121
    %v124 = vadd.f32 %v118, %v122
    %v125 = vsel %vm56, %v123, 0.0
    %126 = vadd.xlane.f32.xlu0 %v125
    %v127 = vpop.xlane.xlu0 %126
    %v128 = vsel %vm56, %v124, 0.0
    %129 = vadd.xlane.f32.xlu0 %v128
    %v130 = vpop.xlane.xlu0 %129
    %v131 = vrcp.pop 32.0
    %v132 = vmul.f32 %v127, %v131
    %v133 = vmul.f32 %v130, %v131
    %v134 = vsub.f32 %v123, %v132
    %v135 = vsub.f32 %v124, %v133
    %v136 = vmul.f32 %v134, %v134
    %v137 = vmul.f32 %v135, %v135
    %v138 = vsel %vm56, %v136, 0.0
    %139 = vadd.xlane.f32.xlu0 %v138
    %v140 = vpop.xlane.xlu0 %139
    %v141 = vsel %vm56, %v137, 0.0
    %142 = vadd.xlane.f32.xlu0 %v141
    %v143 = vpop.xlane.xlu0 %142
    %v144 = vmul.f32 %v140, %v131
    %v145 = vmul.f32 %v143, %v131
    %v146 = vadd.f32 %v144, 1e-05
    %v147 = vadd.f32 %v145, 1e-05
    %v148 = vrsqrt.pop %v146
    %v149 = vrsqrt.pop %v147
    %v150 = vmul.f32 %v134, %v148
    %v151 = vmul.f32 %v135, %v149
    %v152 = vld [vmem:[%s4] sm:$0x1]
    %v154 = vlaneseq
    %v155 = vshrl.u32 %v154, 7
    %v156 = vsub.s32 0, %v155
    %v157 = vrot.slane %v152, %v156
    %v159 = vmul.f32 %v150, %v157
    %v160 = vmul.f32 %v151, %v157
    %v161 = vld [vmem:[%s5] sm:$0x1]
    %v163 = vlaneseq
    %v164 = vshrl.u32 %v163, 7
    %v165 = vsub.s32 0, %v164
    %v166 = vrot.slane %v161, %v165
    %v168 = vadd.f32 %v159, %v166
    %v169 = vadd.f32 %v160, %v166
    %v170 = vpack.c.bf16 %v169, %v168
    %v172 = vunpack.c.l.b16 %v170
    %v173 = vunpack.c.h.b16 %v170
    %v174 = vpack.c.b16 %v172, %v172
    %v175 = vpack.c.b16 %v173, %v173
    %vm178 = vcmask 257024
    %179 = vst.msk [vmem:[%s6] sm:$0xf] %vm178, %v174
    %180 = vst.msk [vmem:[%s6 + $0x4] sm:$0xf] %vm178, %v175
  $region33: #{transformer_forward.36} parent=0 // pred_fallthru
    _
  // Predicated region
  $region34: #{transformer_forward.36} parent=0 // pred_check
    _
  $region35: #{transformer_forward.36} parent=0 // pred_check_branch
    %182 = sbr.rel (0) target = $region37
  $region36: #{transformer_forward.36} parent=0 // pred_region
    _
  $region37: #{transformer_forward.36} parent=0 // pred_fallthru
    _
  // Predicated region
  $region38: #{transformer_forward.36} parent=0 // pred_check
    _
  $region39: #{transformer_forward.36} parent=0 // pred_check_branch
    %184 = sbr.rel (0) target = $region41
  $region40: #{transformer_forward.36} parent=0 // pred_region
    _
  $region41: #{transformer_forward.36} parent=0 // pred_fallthru
    _

// kernel: transformer_forward.34
$region0: #{transformer_forward.34}
  #allocation0 [shape = 'u32[]', space=smem, size = 0x4, offset = 0x4, fixed_abs, tag = 'smem constant byte address 0x4 - core index']
  #allocation1 [shape = 'u32[144,128]{1,0:T(1,128)}', space=vmem, size = 0x12000, scoped, tag = 'internal scratch']
  #allocation2 [shape = 'f32[16,96]{1,0:T(8,128)}', space=vmem, size = 0x2000, scoped, tag = 'scratch operand']
  %s0 = inlined_call_operand.vmem [shape: bf16[16,32], index: 0, kind: input, shape index: {}]
  %s1 = inlined_call_operand.vmem [shape: bf16[32,96], index: 1, kind: input, shape index: {}]
  %s2 = inlined_call_operand.vmem [shape: f32[1,96], index: 2, kind: input, shape index: {}]
  %s3 = inlined_call_operand.vmem [shape: bf16[16,96], index: 3, kind: output, shape index: {}]
  %s4 = sld [smem:[#allocation0]]
  $region30: #{transformer_forward.34} parent=0
    _
  %s6 = ssub.s32 1, %s4
  %s7 = scalar_select 0, %s6, %s4
  // Predicated region
  $region2: #{transformer_forward.34} parent=0 // pred_check
    _
  $region3: #{transformer_forward.34} parent=0 // pred_check_branch
    %9 = sbr.rel (0) target = $region5
  $region4: #{transformer_forward.34} parent=0 // pred_region
    _
  $region5: #{transformer_forward.34} parent=0 // pred_fallthru
    _
  // Predicated region
  $region6: #{transformer_forward.34} parent=0 // pred_check
    _
  $region7: #{transformer_forward.34} parent=0 // pred_check_branch
    %11 = sbr.rel (0) target = $region9
  $region8: #{transformer_forward.34} parent=0 // pred_region
    _
  $region9: #{transformer_forward.34} parent=0 // pred_fallthru
    _
  // Predicated region
  $region10: #{transformer_forward.34} parent=0 // pred_check
    _
  $region11: #{transformer_forward.34} parent=0 // pred_check_branch
    %13 = sbr.rel (0) target = $region13
  $region12: #{transformer_forward.34} parent=0 // pred_region
    _
  $region13: #{transformer_forward.34} parent=0 // pred_fallthru
    _
  %p15 = scmp.eq.s32.totalorder 0, 0
  // Predicated region
  $region14: #{transformer_forward.34} parent=0 // pred_check
    %p16 = pneg %p15
  $region15: #{transformer_forward.34} parent=0 // pred_check_branch
    %18 = sbr.rel (%p16) target = $region17
  $region16: #{transformer_forward.34} parent=0 // pred_region
    %vm19 = vcmask 785408
    %20 = vst.msk [vmem:[#allocation2] sm:$0xff] %vm19, 0.0
    %21 = vst.msk [vmem:[#allocation2 + $0x8] sm:$0xff] %vm19, 0.0
  $region17: #{transformer_forward.34} parent=0 // pred_fallthru
    _
  %v22 = vld [vmem:[#allocation2] sm:$0xff]
  %v23 = vld [vmem:[#allocation2 + $0x8] sm:$0xff]
  %v24 = vld [vmem:[%s0] sm:$0xf]
  %v25 = vld [vmem:[%s0 + $0x4] sm:$0xf]
  %v26 = vld [vmem:[%s1] sm:$0xf]
  %v27 = vld [vmem:[%s1 + $0x4] sm:$0xf]
  %v28 = vld [vmem:[%s1 + $0x8] sm:$0xf]
  %v29 = vld [vmem:[%s1 + $0xc] sm:$0xf]
  %v32 = vunpack.c.l.b16 %v24
  %v33 = vunpack.c.l.b16 %v25
  %v34 = vpack.c.b16 %v33, %v32
  %v39 = vunpack.c.l.b16 %v26
  %v40 = vunpack.c.l.b16 %v27
  %v41 = vunpack.c.l.b16 %v28
  %v42 = vunpack.c.l.b16 %v29
  %v43 = vpack.c.b16 %v40, %v39
  %v44 = vpack.c.b16 %v42, %v41
  %vm47 = vcmask 261120
  %v49 = vsel %vm47, %v34, 0
  %51 = vmatprep.subr.bf16.mxu0 0
  %52 = vmatpush1.bf16.msra.mxu0 %v43
  %53 = vmatprep.subr.bf16.mxu0 0
  %54 = vmatpush1.bf16.msra.mxu0 %v44
  %55 = vmatprep.subr.bf16.mxu0 0
  %56 = vmatpush1.bf16.msra.mxu0 0
  %57 = vmatprep.subr.bf16.mxu0 0
  %58 = vmatpush1.bf16.msra.mxu0 0
  %59 = vmatprep.subr.bf16.mxu0 0
  %60 = vmatpush1.bf16.msra.mxu0 0
  %61 = vmatprep.subr.bf16.mxu0 0
  %62 = vmatpush1.bf16.msra.mxu0 0
  %63 = vmatprep.subr.bf16.mxu0 0
  %64 = vmatpush1.bf16.msra.mxu0 0
  %65 = vmatprep.subr.bf16.mxu0 0
  %66 = vmatpush1.bf16.msra.mxu0 0
  %67 = vmatprep.subr.bf16.mxu0 0
  %68 = vmatpush1.bf16.msra.mxu0 0
  %69 = vmatprep.subr.bf16.mxu0 0
  %70 = vmatpush1.bf16.msra.mxu0 0
  %71 = vmatprep.subr.bf16.mxu0 0
  %72 = vmatpush1.bf16.msra.mxu0 0
  %73 = vmatprep.subr.bf16.mxu0 0
  %74 = vmatpush1.bf16.msra.mxu0 0
  %75 = vmatprep.subr.bf16.mxu0 0
  %76 = vmatpush1.bf16.msra.mxu0 0
  %77 = vmatprep.subr.bf16.mxu0 0
  %78 = vmatpush1.bf16.msra.mxu0 0
  %79 = vmatprep.subr.bf16.mxu0 0
  %80 = vmatpush1.bf16.msra.mxu0 0
  %81 = vmatprep.subr.bf16.mxu0 0
  %82 = vmatpush1.bf16.msra.mxu0 0
  %83 = vmatprep.mubr.bf16.mxu0 0
  %84 = vmatmul.mubr.bf16.gmra.mrb[0].mxu0 %v49
  %v85 = vpop.f32.mrb[0].mxu0
  %v86 = vadd.f32 0.0, %v85
  %v87 = vpop.f32.mrb[0].mxu0
  %v88 = vpop.f32.mrb[0].mxu0
  %v89 = vadd.f32 0.0, %v88
  %v90 = vpop.f32.mrb[0].mxu0
  %91 = vdwg.mxu0
  %v92 = vadd.f32 %v22, %v86
  %v93 = vadd.f32 %v23, %v89
  %vm94 = vcmask 785408
  %95 = vst.msk [vmem:[#allocation2] sm:$0xff] %vm94, %v92
  %96 = vst.msk [vmem:[#allocation2 + $0x8] sm:$0xff] %vm94, %v93
  // Predicated region
  $region18: #{transformer_forward.34} parent=0 // pred_check
    %p97 = pneg %p15
  $region19: #{transformer_forward.34} parent=0 // pred_check_branch
    %99 = sbr.rel (%p97) target = $region21
  $region20: #{transformer_forward.34} parent=0 // pred_region
    %v100 = vld [vmem:[#allocation2] sm:$0xff]
    %v101 = vld [vmem:[#allocation2 + $0x8] sm:$0xff]
    %v102 = vld [vmem:[%s2] sm:$0x1]
    %v104 = vlaneseq
    %v105 = vshrl.u32 %v104, 7
    %v106 = vsub.s32 0, %v105
    %v107 = vrot.slane %v102, %v106
    %v109 = vadd.f32 %v100, %v107
    %v110 = vadd.f32 %v101, %v107
    %v111 = vpack.c.bf16 %v110, %v109
    %v113 = vunpack.c.l.b16 %v111
    %v114 = vunpack.c.h.b16 %v111
    %v115 = vpack.c.b16 %v113, %v113
    %v116 = vpack.c.b16 %v114, %v114
    %vm119 = vcmask 781312
    %120 = vst.msk [vmem:[%s3] sm:$0xf] %vm119, %v115
    %121 = vst.msk [vmem:[%s3 + $0x4] sm:$0xf] %vm119, %v116
  $region21: #{transformer_forward.34} parent=0 // pred_fallthru
    _
  // Predicated region
  $region22: #{transformer_forward.34} parent=0 // pred_check
    _
  $region23: #{transformer_forward.34} parent=0 // pred_check_branch
    %123 = sbr.rel (0) target = $region25
  $region24: #{transformer_forward.34} parent=0 // pred_region
    _
  $region25: #{transformer_forward.34} parent=0 // pred_fallthru
    _
  // Predicated region
  $region26: #{transformer_forward.34} parent=0 // pred_check
    _
  $region27: #{transformer_forward.34} parent=0 // pred_check_branch
    %125 = sbr.rel (0) target = $region29
  $region28: #{transformer_forward.34} parent=0 // pred_region
    _
  $region29: #{transformer_forward.34} parent=0 // pred_fallthru
    _

// kernel: transformer_forward.35
$region0: #{transformer_forward.35}
  #allocation0 [shape = 'u32[]', space=smem, size = 0x4, offset = 0x4, fixed_abs, tag = 'smem constant byte address 0x4 - core index']
  #allocation1 [shape = 'u32[144,128]{1,0:T(1,128)}', space=vmem, size = 0x12000, scoped, tag = 'internal scratch']
  %s0 = inlined_call_operand.vmem [shape: bf16[2,8,96], index: 0, kind: input, shape index: {}]
  %s1 = inlined_call_operand.vmem [shape: f32[2,1,8], index: 1, kind: input, shape index: {}]
  %s2 = inlined_call_operand.vmem [shape: bf16[2,8,32], index: 2, kind: output, shape index: {}]
  %s3 = sld [smem:[#allocation0]]
  $region41: #{transformer_forward.35} parent=0
    _
  %s5 = ssub.s32 1, %s3
  %s6 = scalar_select 0, %s5, %s3
  loop: start=0, step=1, limit=4
  $region2: #{transformer_forward.35} parent=0 // loop_pre_header
    _
  $region3: #{transformer_forward.35} parent=0 // loop_header
    %s8 = sphi 0, %s12
    %p9 = scmp.ge.s32.totalorder %s8, 4
    %s18 = sphi 0, %s20
    %s21 = sphi 0, %s18
    %s22 = sphi 0, %s21
    %s38 = sphi 0, %s22
    %s44 = sphi 0, %s46
    %s47 = sphi 0, %s44
    %s48 = sphi 0, %s47
    %s64 = sphi 0, %s48
    %s70 = sphi 0, %s72
    %s73 = sphi 0, %s70
    %s74 = sphi 0, %s73
    %s90 = sphi 0, %s74
  $region4: #{transformer_forward.35} parent=0 // loop_header_branch
    %11 = sbr.rel (%p9) target = $region8
  $region5: #{transformer_forward.35} parent=0 // loop_body
    %s13 = ssub.s32 %s8, 1
    %s14 = ssub.s32 %s8, 2
    %s15 = sadd.s32 %s8, 1
    %s16 = ssub.s32 %s8, %s15
    %p17 = scmp.eq.s32.totalorder %s16, 0
    %s19 = sadd.s32 %s18, 1
    %s20 = scalar_select %p17, %s18, %s19
    %p23 = pneg %p17
    %p24 = scmp.eq.s32.totalorder %s8, 1
    %p25 = por %p23, %p24
    %p26 = scmp.ne.s32.totalorder %s18, %s21
    %p27 = scmp.eq.s32.totalorder %s8, 0
    %p28 = por %p26, %p27
    %p29 = scmp.ne.s32.totalorder %s18, %s21
    %p30 = scmp.eq.s32.totalorder %s13, 1
    %p31 = por %p29, %p30
    %p32 = scmp.ne.s32.totalorder %s21, %s22
    %p33 = scmp.eq.s32.totalorder %s13, 0
    %p34 = por %p32, %p33
    %p35 = scmp.ne.s32.totalorder %s21, %s22
    %p36 = scmp.eq.s32.totalorder %s14, 1
    %p37 = por %p35, %p36
    %p39 = scmp.ne.s32.totalorder %s22, %s38
    %p40 = scmp.eq.s32.totalorder %s14, 0
    %p41 = por %p39, %p40
    %s42 = ssub.s32 %s8, %s15
    %p43 = scmp.eq.s32.totalorder %s42, 0
    %s45 = sadd.s32 %s44, 1
    %s46 = scalar_select %p43, %s44, %s45
    %p49 = pneg %p43
    %p50 = scmp.eq.s32.totalorder %s8, 1
    %p51 = por %p49, %p50
    %p52 = scmp.ne.s32.totalorder %s44, %s47
    %p53 = scmp.eq.s32.totalorder %s8, 0
    %p54 = por %p52, %p53
    %p55 = scmp.ne.s32.totalorder %s44, %s47
    %p56 = scmp.eq.s32.totalorder %s13, 1
    %p57 = por %p55, %p56
    %p58 = scmp.ne.s32.totalorder %s47, %s48
    %p59 = scmp.eq.s32.totalorder %s13, 0
    %p60 = por %p58, %p59
    %p61 = scmp.ne.s32.totalorder %s47, %s48
    %p62 = scmp.eq.s32.totalorder %s14, 1
    %p63 = por %p61, %p62
    %p65 = scmp.ne.s32.totalorder %s48, %s64
    %p66 = scmp.eq.s32.totalorder %s14, 0
    %p67 = por %p65, %p66
    %s68 = ssub.s32 %s8, %s15
    %p69 = scmp.eq.s32.totalorder %s68, 0
    %s71 = sadd.s32 %s70, 1
    %s72 = scalar_select %p69, %s70, %s71
    %p75 = pneg %p69
    %p76 = scmp.eq.s32.totalorder %s8, 1
    %p77 = por %p75, %p76
    %p78 = scmp.ne.s32.totalorder %s70, %s73
    %p79 = scmp.eq.s32.totalorder %s8, 0
    %p80 = por %p78, %p79
    %p81 = scmp.ne.s32.totalorder %s70, %s73
    %p82 = scmp.eq.s32.totalorder %s13, 1
    %p83 = por %p81, %p82
    %p84 = scmp.ne.s32.totalorder %s73, %s74
    %p85 = scmp.eq.s32.totalorder %s13, 0
    %p86 = por %p84, %p85
    %p87 = scmp.ne.s32.totalorder %s73, %s74
    %p88 = scmp.eq.s32.totalorder %s14, 1
    %p89 = por %p87, %p88
    %p91 = scmp.ne.s32.totalorder %s74, %s90
    %p92 = scmp.eq.s32.totalorder %s14, 0
    %p93 = por %p91, %p92
    %p94 = scmp.le.s32.totalorder 1, %s8
    %p95 = scmp.lt.s32.totalorder %s8, 3
    %p96 = pnand %p94, %p95
    %p97 = pneg %p96
    // Predicated region
    $region9: #{transformer_forward.35} parent=5 // pred_check
      _
    $region10: #{transformer_forward.35} parent=5 // pred_check_branch
      %99 = sbr.rel (%p96) target = $region12
    $region11: #{transformer_forward.35} parent=5 // pred_region
      %s100 = ssub.s32 %s8, 1
    $region12: #{transformer_forward.35} parent=5 // pred_fallthru
      _
    %p101 = scmp.lt.s32.totalorder %s8, 2
    // Predicated region
    $region13: #{transformer_forward.35} parent=5 // pred_check
      %p102 = pneg %p101
    $region14: #{transformer_forward.35} parent=5 // pred_check_branch
      %104 = sbr.rel (%p102) target = $region16
    $region15: #{transformer_forward.35} parent=5 // pred_region
      // Predicated region
      $region17: #{transformer_forward.35} parent=15 // pred_check
        %p105 = pneg %p28
      $region18: #{transformer_forward.35} parent=15 // pred_check_branch
        %107 = sbr.rel (%p105) target = $region20
      $region19: #{transformer_forward.35} parent=15 // pred_region
        %p108 = scmp.lt.s32.totalorder %s8, 1
        %s109 = scalar_select %p108, %s8, 1
        %s110 = smul.addr %s109, 4
        %s111 = scalar_lea.vmem %s0, %s110
      $region20: #{transformer_forward.35} parent=15 // pred_fallthru
        _
      // Predicated region
      $region21: #{transformer_forward.35} parent=15 // pred_check
        %p112 = pneg %p54
      $region22: #{transformer_forward.35} parent=15 // pred_check_branch
        %114 = sbr.rel (%p112) target = $region24
      $region23: #{transformer_forward.35} parent=15 // pred_region
        %p115 = scmp.lt.s32.totalorder %s8, 1
        %s116 = scalar_select %p115, %s8, 1
        %s117 = scalar_lea.vmem %s1, %s116
      $region24: #{transformer_forward.35} parent=15 // pred_fallthru
        _
    $region16: #{transformer_forward.35} parent=5 // pred_fallthru
      _
    %p118 = scmp.le.s32.totalorder 1, %s8
    %p119 = scmp.lt.s32.totalorder %s8, 3
    %p120 = pnand %p118, %p119
    %p121 = pneg %p120
    // Predicated region
    $region25: #{transformer_forward.35} parent=5 // pred_check
      _
    $region26: #{transformer_forward.35} parent=5 // pred_check_branch
      %123 = sbr.rel (%p120) target = $region28
    $region27: #{transformer_forward.35} parent=5 // pred_region
      %s124 = ssub.s32 %s8, 1
      %p125 = scmp.lt.s32.totalorder %s13, 1
      %s126 = scalar_select %p125, %s13, 1
      %s127 = smul.addr %s126, 4
      %s128 = scalar_lea.vmem %s0, %s127
      %p129 = pneg %p34
      %p130 = pneg %p31
      %p131 = scmp.lt.s32.totalorder %s13, 1
      %s132 = scalar_select %p131, %s13, 1
      %s133 = scalar_lea.vmem %s1, %s132
      %p134 = pneg %p60
      %p135 = pneg %p57
      %p136 = pneg %p86
      %p137 = pneg %p83
      %p138 = scmp.lt.s32.totalorder %s13, 1
      %s139 = scalar_select %p138, %s13, 1
      %s140 = smul.addr %s139, 4
      %s141 = scalar_lea.vmem %s2, %s140
      %p142 = scmp.lt.s32.totalorder %s13, 1
      %s143 = scalar_select %p142, %s13, 1
      %s144 = smul.addr %s143, 4
      %s145 = scalar_lea.vmem %s0, %s144
      %p146 = scmp.lt.s32.totalorder %s13, 1
      %s147 = scalar_select %p146, %s13, 1
      %s148 = scalar_lea.vmem %s1, %s147
      %p149 = scmp.lt.s32.totalorder %s13, 1
      %s150 = scalar_select %p149, %s13, 1
      %s151 = smul.addr %s150, 4
      %s152 = scalar_lea.vmem %s2, %s151
      %v154 = vld [vmem:[%s145] sm:$0xf]
      %v155 = vld [vmem:[%s148] sm:$0x1]
      %v157 = vlaneseq
      %v158 = vshrl.u32 %v157, 7
      %v159 = vsub.s32 0, %v158
      %v160 = vrot.slane %v155, %v159
      %v163 = vunpack.c.l.b16 %v154
      %v164 = vpack.c.b16 %v163, %v163
      %165 = vrot.lane.b32.xlu0 %v164, 96
      %v166 = vpop.permute.xlu0 %165
      %vm167 = vcmask 64512
      %v169 = vsel %vm167, %v154, 0
      %v172 = vsel %vm167, %v166, 0
      %174 = vmatprep.subr.bf16.mxu0 0
      %175 = vmatpush1.bf16.xpose.msra.mxu0 %v172
      %176 = vmatprep.subr.bf16.mxu0 0
      %177 = vmatpush1.bf16.xpose.msra.mxu0 0
      %178 = vmatprep.subr.bf16.mxu0 0
      %179 = vmatpush1.bf16.xpose.msra.mxu0 0
      %180 = vmatprep.subr.bf16.mxu0 0
      %181 = vmatpush1.bf16.xpose.msra.mxu0 0
      %182 = vmatprep.subr.bf16.mxu0 0
      %183 = vmatpush1.bf16.xpose.msra.mxu0 0
      %184 = vmatprep.subr.bf16.mxu0 0
      %185 = vmatpush1.bf16.xpose.msra.mxu0 0
      %186 = vmatprep.subr.bf16.mxu0 0
      %187 = vmatpush1.bf16.xpose.msra.mxu0 0
      %188 = vmatprep.subr.bf16.mxu0 0
      %189 = vmatpush1.bf16.xpose.msra.mxu0 0
      %190 = vmatprep.subr.bf16.mxu0 0
      %191 = vmatpush1.bf16.xpose.msra.mxu0 0
      %192 = vmatprep.subr.bf16.mxu0 0
      %193 = vmatpush1.bf16.xpose.msra.mxu0 0
      %194 = vmatprep.subr.bf16.mxu0 0
      %195 = vmatpush1.bf16.xpose.msra.mxu0 0
      %196 = vmatprep.subr.bf16.mxu0 0
      %197 = vmatpush1.bf16.xpose.msra.mxu0 0
      %198 = vmatprep.subr.bf16.mxu0 0
      %199 = vmatpush1.bf16.xpose.msra.mxu0 0
      %200 = vmatprep.subr.bf16.mxu0 0
      %201 = vmatpush1.bf16.xpose.msra.mxu0 0
      %202 = vmatprep.subr.bf16.mxu0 0
      %203 = vmatpush1.bf16.xpose.msra.mxu0 0
      %204 = vmatprep.subr.bf16.mxu0 0
      %205 = vmatpush1.bf16.xpose.msra.mxu0 0
      %206 = vmatprep.mubr.bf16.mxu0 0
      %207 = vmatmul.mubr.bf16.gmra.mrb[0].mxu0 %v169
      %v208 = vpop.f32.mrb[0].mxu0
      %v209 = vadd.f32 %v160, %v208
      %v210 = vpop.f32.mrb[0].mxu0
      %v211 = vpop.f32.mrb[0].mxu0
      %v212 = vpop.f32.mrb[0].mxu0
      %213 = vdwg.mxu0
      %v214 = vsel %vm167, %v209, -inf
      %215 = vmax.xlane.f32.xlu0 %v214
      %v216 = vpop.xlane.xlu0 %215
      %v217 = vsub.f32 %v209, %v216
      %v218 = vmul.f32 %v217, 1.442695
      %v219 = vpow.pop %v218
      %v220 = vsel %vm167, %v219, 0.0
      %221 = vadd.xlane.f32.xlu0 %v220
      %v222 = vpop.xlane.xlu0 %221
      %v223 = vrcp.pop %v222
      %v224 = vmul.f32 %v219, %v223
      %v225 = vpack.c.bf16 %v224, %v224
      %226 = vrot.lane.b32.xlu0 %v164, 64
      %v227 = vpop.permute.xlu0 %226
      %v229 = vsel %vm167, %v225, 0
      %vm231 = vcmask 1043456
      %v233 = vsel %vm231, %v227, 0
      %235 = vmatprep.subr.bf16.mxu0 0
      %236 = vmatpush1.bf16.msra.mxu0 %v233
      %237 = vmatprep.subr.bf16.mxu0 0
      %238 = vmatpush1.bf16.msra.mxu0 0
      %239 = vmatprep.subr.bf16.mxu0 0
      %240 = vmatpush1.bf16.msra.mxu0 0
      %241 = vmatprep.subr.bf16.mxu0 0
      %242 = vmatpush1.bf16.msra.mxu0 0
      %243 = vmatprep.subr.bf16.mxu0 0
      %244 = vmatpush1.bf16.msra.mxu0 0
      %245 = vmatprep.subr.bf16.mxu0 0
      %246 = vmatpush1.bf16.msra.mxu0 0
      %247 = vmatprep.subr.bf16.mxu0 0
      %248 = vmatpush1.bf16.msra.mxu0 0
      %249 = vmatprep.subr.bf16.mxu0 0
      %250 = vmatpush1.bf16.msra.mxu0 0
      %251 = vmatprep.subr.bf16.mxu0 0
      %252 = vmatpush1.bf16.msra.mxu0 0
      %253 = vmatprep.subr.bf16.mxu0 0
      %254 = vmatpush1.bf16.msra.mxu0 0
      %255 = vmatprep.subr.bf16.mxu0 0
      %256 = vmatpush1.bf16.msra.mxu0 0
      %257 = vmatprep.subr.bf16.mxu0 0
      %258 = vmatpush1.bf16.msra.mxu0 0
      %259 = vmatprep.subr.bf16.mxu0 0
      %260 = vmatpush1.bf16.msra.mxu0 0
      %261 = vmatprep.subr.bf16.mxu0 0
      %262 = vmatpush1.bf16.msra.mxu0 0
      %263 = vmatprep.subr.bf16.mxu0 0
      %264 = vmatpush1.bf16.msra.mxu0 0
      %265 = vmatprep.subr.bf16.mxu0 0
      %266 = vmatpush1.bf16.msra.mxu0 0
      %267 = vmatprep.mubr.bf16.mxu0 0
      %268 = vmatmul.mubr.bf16.gmra.mrb[0].mxu0 %v229
      %v269 = vpop.f32.mrb[0].mxu0
      %v270 = vadd.f32 0.0, %v269
      %v271 = vpop.f32.mrb[0].mxu0
      %v272 = vpop.f32.mrb[0].mxu0
      %v273 = vpop.f32.mrb[0].mxu0
      %274 = vdwg.mxu0
      %v275 = vpack.c.bf16 %v270, %v270
      %vm276 = vcmask 60416
      %277 = vst.msk [vmem:[%s152] sm:$0xf] %vm276, %v275
      %278 = vrot.lane.b32.xlu0 %v164, 120
      %v279 = vpop.permute.xlu0 %278
      %280 = vrot.lane.b32.xlu0 %v164, 88
      %v281 = vpop.permute.xlu0 %280
      %v283 = vsel %vm167, %v279, 0
      %v286 = vsel %vm167, %v281, 0
      %288 = vmatprep.subr.bf16.mxu0 0
      %289 = vmatpush1.bf16.xpose.msra.mxu0 %v286
      %290 = vmatprep.subr.bf16.mxu0 0
      %291 = vmatpush1.bf16.xpose.msra.mxu0 0
      %292 = vmatprep.subr.bf16.mxu0 0
      %293 = vmatpush1.bf16.xpose.msra.mxu0 0
      %294 = vmatprep.subr.bf16.mxu0 0
      %295 = vmatpush1.bf16.xpose.msra.mxu0 0
      %296 = vmatprep.subr.bf16.mxu0 0
      %297 = vmatpush1.bf16.xpose.msra.mxu0 0
      %298 = vmatprep.subr.bf16.mxu0 0
      %299 = vmatpush1.bf16.xpose.msra.mxu0 0
      %300 = vmatprep.subr.bf16.mxu0 0
      %301 = vmatpush1.bf16.xpose.msra.mxu0 0
      %302 = vmatprep.subr.bf16.mxu0 0
      %303 = vmatpush1.bf16.xpose.msra.mxu0 0
      %304 = vmatprep.subr.bf16.mxu0 0
      %305 = vmatpush1.bf16.xpose.msra.mxu0 0
      %306 = vmatprep.subr.bf16.mxu0 0
      %307 = vmatpush1.bf16.xpose.msra.mxu0 0
      %308 = vmatprep.subr.bf16.mxu0 0
      %309 = vmatpush1.bf16.xpose.msra.mxu0 0
      %310 = vmatprep.subr.bf16.mxu0 0
      %311 = vmatpush1.bf16.xpose.msra.mxu0 0
      %312 = vmatprep.subr.bf16.mxu0 0
      %313 = vmatpush1.bf16.xpose.msra.mxu0 0
      %314 = vmatprep.subr.bf16.mxu0 0
      %315 = vmatpush1.bf16.xpose.msra.mxu0 0
      %316 = vmatprep.subr.bf16.mxu0 0
      %317 = vmatpush1.bf16.xpose.msra.mxu0 0
      %318 = vmatprep.subr.bf16.mxu0 0
      %319 = vmatpush1.bf16.xpose.msra.mxu0 0
      %320 = vmatprep.mubr.bf16.mxu0 0
      %321 = vmatmul.mubr.bf16.gmra.mrb[0].mxu0 %v283
      %v322 = vpop.f32.mrb[0].mxu0
      %v323 = vadd.f32 %v160, %v322
      %v324 = vpop.f32.mrb[0].mxu0
      %v325 = vpop.f32.mrb[0].mxu0
      %v326 = vpop.f32.mrb[0].mxu0
      %327 = vdwg.mxu0
      %v328 = vsel %vm167, %v323, -inf
      %329 = vmax.xlane.f32.xlu0 %v328
      %v330 = vpop.xlane.xlu0 %329
      %v331 = vsub.f32 %v323, %v330
      %v332 = vmul.f32 %v331, 1.442695
      %v333 = vpow.pop %v332
      %v334 = vsel %vm167, %v333, 0.0
      %335 = vadd.xlane.f32.xlu0 %v334
      %v336 = vpop.xlane.xlu0 %335
      %v337 = vrcp.pop %v336
      %v338 = vmul.f32 %v333, %v337
      %v339 = vpack.c.bf16 %v338, %v338
      %340 = vrot.lane.b32.xlu0 %v164, 56
      %v341 = vpop.permute.xlu0 %340
      %v343 = vsel %vm167, %v339, 0
      %v346 = vsel %vm231, %v341, 0
      %348 = vmatprep.subr.bf16.mxu0 0
      %349 = vmatpush1.bf16.msra.mxu0 %v346
      %350 = vmatprep.subr.bf16.mxu0 0
      %351 = vmatpush1.bf16.msra.mxu0 0
      %352 = vmatprep.subr.bf16.mxu0 0
      %353 = vmatpush1.bf16.msra.mxu0 0
      %354 = vmatprep.subr.bf16.mxu0 0
      %355 = vmatpush1.bf16.msra.mxu0 0
      %356 = vmatprep.subr.bf16.mxu0 0
      %357 = vmatpush1.bf16.msra.mxu0 0
      %358 = vmatprep.subr.bf16.mxu0 0
      %359 = vmatpush1.bf16.msra.mxu0 0
      %360 = vmatprep.subr.bf16.mxu0 0
      %361 = vmatpush1.bf16.msra.mxu0 0
      %362 = vmatprep.subr.bf16.mxu0 0
      %363 = vmatpush1.bf16.msra.mxu0 0
      %364 = vmatprep.subr.bf16.mxu0 0
      %365 = vmatpush1.bf16.msra.mxu0 0
      %366 = vmatprep.subr.bf16.mxu0 0
      %367 = vmatpush1.bf16.msra.mxu0 0
      %368 = vmatprep.subr.bf16.mxu0 0
      %369 = vmatpush1.bf16.msra.mxu0 0
      %370 = vmatprep.subr.bf16.mxu0 0
      %371 = vmatpush1.bf16.msra.mxu0 0
      %372 = vmatprep.subr.bf16.mxu0 0
      %373 = vmatpush1.bf16.msra.mxu0 0
      %374 = vmatprep.subr.bf16.mxu0 0
      %375 = vmatpush1.bf16.msra.mxu0 0
      %376 = vmatprep.subr.bf16.mxu0 0
      %377 = vmatpush1.bf16.msra.mxu0 0
      %378 = vmatprep.subr.bf16.mxu0 0
      %379 = vmatpush1.bf16.msra.mxu0 0
      %380 = vmatprep.mubr.bf16.mxu0 0
      %381 = vmatmul.mubr.bf16.gmra.mrb[0].mxu0 %v343
      %v382 = vpop.f32.mrb[0].mxu0
      %v383 = vadd.f32 0.0, %v382
      %v384 = vpop.f32.mrb[0].mxu0
      %v385 = vpop.f32.mrb[0].mxu0
      %v386 = vpop.f32.mrb[0].mxu0
      %387 = vdwg.mxu0
      %v388 = vpack.c.bf16 %v383, %v383
      %v390 = vunpack.c.l.b16 %v388
      %v391 = vpack.c.b16 %v390, %v390
      %392 = vrot.lane.b32.xlu0 %v391, 8
      %v393 = vpop.permute.xlu0 %392
      %vm395 = vcmask 126016
      %396 = vst.msk [vmem:[%s152] sm:$0xf] %vm395, %v393
      %397 = vrot.lane.b32.xlu0 %v164, 112
      %v398 = vpop.permute.xlu0 %397
      %399 = vrot.lane.b32.xlu0 %v164, 80
      %v400 = vpop.permute.xlu0 %399
      %v402 = vsel %vm167, %v398, 0
      %v405 = vsel %vm167, %v400, 0
      %407 = vmatprep.subr.bf16.mxu0 0
      %408 = vmatpush1.bf16.xpose.msra.mxu0 %v405
      %409 = vmatprep.subr.bf16.mxu0 0
      %410 = vmatpush1.bf16.xpose.msra.mxu0 0
      %411 = vmatprep.subr.bf16.mxu0 0
      %412 = vmatpush1.bf16.xpose.msra.mxu0 0
      %413 = vmatprep.subr.bf16.mxu0 0
      %414 = vmatpush1.bf16.xpose.msra.mxu0 0
      %415 = vmatprep.subr.bf16.mxu0 0
      %416 = vmatpush1.bf16.xpose.msra.mxu0 0
      %417 = vmatprep.subr.bf16.mxu0 0
      %418 = vmatpush1.bf16.xpose.msra.mxu0 0
      %419 = vmatprep.subr.bf16.mxu0 0
      %420 = vmatpush1.bf16.xpose.msra.mxu0 0
      %421 = vmatprep.subr.bf16.mxu0 0
      %422 = vmatpush1.bf16.xpose.msra.mxu0 0
      %423 = vmatprep.subr.bf16.mxu0 0
      %424 = vmatpush1.bf16.xpose.msra.mxu0 0
      %425 = vmatprep.subr.bf16.mxu0 0
      %426 = vmatpush1.bf16.xpose.msra.mxu0 0
      %427 = vmatprep.subr.bf16.mxu0 0
      %428 = vmatpush1.bf16.xpose.msra.mxu0 0
      %429 = vmatprep.subr.bf16.mxu0 0
      %430 = vmatpush1.bf16.xpose.msra.mxu0 0
      %431 = vmatprep.subr.bf16.mxu0 0
      %432 = vmatpush1.bf16.xpose.msra.mxu0 0
      %433 = vmatprep.subr.bf16.mxu0 0
      %434 = vmatpush1.bf16.xpose.msra.mxu0 0
      %435 = vmatprep.subr.bf16.mxu0 0
      %436 = vmatpush1.bf16.xpose.msra.mxu0 0
      %437 = vmatprep.subr.bf16.mxu0 0
      %438 = vmatpush1.bf16.xpose.msra.mxu0 0
      %439 = vmatprep.mubr.bf16.mxu0 0
      %440 = vmatmul.mubr.bf16.gmra.mrb[0].mxu0 %v402
      %v441 = vpop.f32.mrb[0].mxu0
      %v442 = vadd.f32 %v160, %v441
      %v443 = vpop.f32.mrb[0].mxu0
      %v444 = vpop.f32.mrb[0].mxu0
      %v445 = vpop.f32.mrb[0].mxu0
      %446 = vdwg.mxu0
      %v447 = vsel %vm167, %v442, -inf
      %448 = vmax.xlane.f32.xlu0 %v447
      %v449 = vpop.xlane.xlu0 %448
      %v450 = vsub.f32 %v442, %v449
      %v451 = vmul.f32 %v450, 1.442695
      %v452 = vpow.pop %v451
      %v453 = vsel %vm167, %v452, 0.0
      %454 = vadd.xlane.f32.xlu0 %v453
      %v455 = vpop.xlane.xlu0 %454
      %v456 = vrcp.pop %v455
      %v457 = vmul.f32 %v452, %v456
      %v458 = vpack.c.bf16 %v457, %v457
      %459 = vrot.lane.b32.xlu0 %v164, 48
      %v460 = vpop.permute.xlu0 %459
      %v462 = vsel %vm167, %v458, 0
      %v465 = vsel %vm231, %v460, 0
      %467 = vmatprep.subr.bf16.mxu0 0
      %468 = vmatpush1.bf16.msra.mxu0 %v465
      %469 = vmatprep.subr.bf16.mxu0 0
      %470 = vmatpush1.bf16.msra.mxu0 0
      %471 = vmatprep.subr.bf16.mxu0 0
      %472 = vmatpush1.bf16.msra.mxu0 0
      %473 = vmatprep.subr.bf16.mxu0 0
      %474 = vmatpush1.bf16.msra.mxu0 0
      %475 = vmatprep.subr.bf16.mxu0 0
      %476 = vmatpush1.bf16.msra.mxu0 0
      %477 = vmatprep.subr.bf16.mxu0 0
      %478 = vmatpush1.bf16.msra.mxu0 0
      %479 = vmatprep.subr.bf16.mxu0 0
      %480 = vmatpush1.bf16.msra.mxu0 0
      %481 = vmatprep.subr.bf16.mxu0 0
      %482 = vmatpush1.bf16.msra.mxu0 0
      %483 = vmatprep.subr.bf16.mxu0 0
      %484 = vmatpush1.bf16.msra.mxu0 0
      %485 = vmatprep.subr.bf16.mxu0 0
      %486 = vmatpush1.bf16.msra.mxu0 0
      %487 = vmatprep.subr.bf16.mxu0 0
      %488 = vmatpush1.bf16.msra.mxu0 0
      %489 = vmatprep.subr.bf16.mxu0 0
      %490 = vmatpush1.bf16.msra.mxu0 0
      %491 = vmatprep.subr.bf16.mxu0 0
      %492 = vmatpush1.bf16.msra.mxu0 0
      %493 = vmatprep.subr.bf16.mxu0 0
      %494 = vmatpush1.bf16.msra.mxu0 0
      %495 = vmatprep.subr.bf16.mxu0 0
      %496 = vmatpush1.bf16.msra.mxu0 0
      %497 = vmatprep.subr.bf16.mxu0 0
      %498 = vmatpush1.bf16.msra.mxu0 0
      %499 = vmatprep.mubr.bf16.mxu0 0
      %500 = vmatmul.mubr.bf16.gmra.mrb[0].mxu0 %v462
      %v501 = vpop.f32.mrb[0].mxu0
      %v502 = vadd.f32 0.0, %v501
      %v503 = vpop.f32.mrb[0].mxu0
      %v504 = vpop.f32.mrb[0].mxu0
      %v505 = vpop.f32.mrb[0].mxu0
      %506 = vdwg.mxu0
      %v507 = vpack.c.bf16 %v502, %v502
      %v509 = vunpack.c.l.b16 %v507
      %v510 = vpack.c.b16 %v509, %v509
      %511 = vrot.lane.b32.xlu0 %v510, 16
      %v512 = vpop.permute.xlu0 %511
      %vm514 = vcmask 191616
      %515 = vst.msk [vmem:[%s152] sm:$0xf] %vm514, %v512
      %516 = vrot.lane.b32.xlu0 %v164, 104
      %v517 = vpop.permute.xlu0 %516
      %518 = vrot.lane.b32.xlu0 %v164, 72
      %v519 = vpop.permute.xlu0 %518
      %v521 = vsel %vm167, %v517, 0
      %v524 = vsel %vm167, %v519, 0
      %526 = vmatprep.subr.bf16.mxu0 0
      %527 = vmatpush1.bf16.xpose.msra.mxu0 %v524
      %528 = vmatprep.subr.bf16.mxu0 0
      %529 = vmatpush1.bf16.xpose.msra.mxu0 0
      %530 = vmatprep.subr.bf16.mxu0 0
      %531 = vmatpush1.bf16.xpose.msra.mxu0 0
      %532 = vmatprep.subr.bf16.mxu0 0
      %533 = vmatpush1.bf16.xpose.msra.mxu0 0
      %534 = vmatprep.subr.bf16.mxu0 0
      %535 = vmatpush1.bf16.xpose.msra.mxu0 0
      %536 = vmatprep.subr.bf16.mxu0 0
      %537 = vmatpush1.bf16.xpose.msra.mxu0 0
      %538 = vmatprep.subr.bf16.mxu0 0
      %539 = vmatpush1.bf16.xpose.msra.mxu0 0
      %540 = vmatprep.subr.bf16.mxu0 0
      %541 = vmatpush1.bf16.xpose.msra.mxu0 0
      %542 = vmatprep.subr.bf16.mxu0 0
      %543 = vmatpush1.bf16.xpose.msra.mxu0 0
      %544 = vmatprep.subr.bf16.mxu0 0
      %545 = vmatpush1.bf16.xpose.msra.mxu0 0
      %546 = vmatprep.subr.bf16.mxu0 0
      %547 = vmatpush1.bf16.xpose.msra.mxu0 0
      %548 = vmatprep.subr.bf16.mxu0 0
      %549 = vmatpush1.bf16.xpose.msra.mxu0 0
      %550 = vmatprep.subr.bf16.mxu0 0
      %551 = vmatpush1.bf16.xpose.msra.mxu0 0
      %552 = vmatprep.subr.bf16.mxu0 0
      %553 = vmatpush1.bf16.xpose.msra.mxu0 0
      %554 = vmatprep.subr.bf16.mxu0 0
      %555 = vmatpush1.bf16.xpose.msra.mxu0 0
      %556 = vmatprep.subr.bf16.mxu0 0
      %557 = vmatpush1.bf16.xpose.msra.mxu0 0
      %558 = vmatprep.mubr.bf16.mxu0 0
      %559 = vmatmul.mubr.bf16.gmra.mrb[0].mxu0 %v521
      %v560 = vpop.f32.mrb[0].mxu0
      %v561 = vadd.f32 %v160, %v560
      %v562 = vpop.f32.mrb[0].mxu0
      %v563 = vpop.f32.mrb[0].mxu0
      %v564 = vpop.f32.mrb[0].mxu0
      %565 = vdwg.mxu0
      %v566 = vsel %vm167, %v561, -inf
      %567 = vmax.xlane.f32.xlu0 %v566
      %v568 = vpop.xlane.xlu0 %567
      %v569 = vsub.f32 %v561, %v568
      %v570 = vmul.f32 %v569, 1.442695
      %v571 = vpow.pop %v570
      %v572 = vsel %vm167, %v571, 0.0
      %573 = vadd.xlane.f32.xlu0 %v572
      %v574 = vpop.xlane.xlu0 %573
      %v575 = vrcp.pop %v574
      %v576 = vmul.f32 %v571, %v575
      %v577 = vpack.c.bf16 %v576, %v576
      %578 = vrot.lane.b32.xlu0 %v164, 40
      %v579 = vpop.permute.xlu0 %578
      %v581 = vsel %vm167, %v577, 0
      %v584 = vsel %vm231, %v579, 0
      %586 = vmatprep.subr.bf16.mxu0 0
      %587 = vmatpush1.bf16.msra.mxu0 %v584
      %588 = vmatprep.subr.bf16.mxu0 0
      %589 = vmatpush1.bf16.msra.mxu0 0
      %590 = vmatprep.subr.bf16.mxu0 0
      %591 = vmatpush1.bf16.msra.mxu0 0
      %592 = vmatprep.subr.bf16.mxu0 0
      %593 = vmatpush1.bf16.msra.mxu0 0
      %594 = vmatprep.subr.bf16.mxu0 0
      %595 = vmatpush1.bf16.msra.mxu0 0
      %596 = vmatprep.subr.bf16.mxu0 0
      %597 = vmatpush1.bf16.msra.mxu0 0
      %598 = vmatprep.subr.bf16.mxu0 0
      %599 = vmatpush1.bf16.msra.mxu0 0
      %600 = vmatprep.subr.bf16.mxu0 0
      %601 = vmatpush1.bf16.msra.mxu0 0
      %602 = vmatprep.subr.bf16.mxu0 0
      %603 = vmatpush1.bf16.msra.mxu0 0
      %604 = vmatprep.subr.bf16.mxu0 0
      %605 = vmatpush1.bf16.msra.mxu0 0
      %606 = vmatprep.subr.bf16.mxu0 0
      %607 = vmatpush1.bf16.msra.mxu0 0
      %608 = vmatprep.subr.bf16.mxu0 0
      %609 = vmatpush1.bf16.msra.mxu0 0
      %610 = vmatprep.subr.bf16.mxu0 0
      %611 = vmatpush1.bf16.msra.mxu0 0
      %612 = vmatprep.subr.bf16.mxu0 0
      %613 = vmatpush1.bf16.msra.mxu0 0
      %614 = vmatprep.subr.bf16.mxu0 0
      %615 = vmatpush1.bf16.msra.mxu0 0
      %616 = vmatprep.subr.bf16.mxu0 0
      %617 = vmatpush1.bf16.msra.mxu0 0
      %618 = vmatprep.mubr.bf16.mxu0 0
      %619 = vmatmul.mubr.bf16.gmra.mrb[0].mxu0 %v581
      %v620 = vpop.f32.mrb[0].mxu0
      %v621 = vadd.f32 0.0, %v620
      %v622 = vpop.f32.mrb[0].mxu0
      %v623 = vpop.f32.mrb[0].mxu0
      %v624 = vpop.f32.mrb[0].mxu0
      %625 = vdwg.mxu0
      %v626 = vpack.c.bf16 %v621, %v621
      %v628 = vunpack.c.l.b16 %v626
      %v629 = vpack.c.b16 %v628, %v628
      %630 = vrot.lane.b32.xlu0 %v629, 24
      %v631 = vpop.permute.xlu0 %630
      %vm633 = vcmask 257216
      %634 = vst.msk [vmem:[%s152] sm:$0xf] %vm633, %v631
      %p635 = scmp.lt.s32.totalorder %s13, 1
      %s636 = scalar_select %p635, %s13, 1
      %s637 = smul.addr %s636, 4
      %s638 = scalar_lea.vmem %s2, %s637
      // Predicated region
      $region29: #{transformer_forward.35} parent=27 // pred_check
        %p639 = pneg %p83
      $region30: #{transformer_forward.35} parent=27 // pred_check_branch
        %641 = sbr.rel (%p639) target = $region32
      $region31: #{transformer_forward.35} parent=27 // pred_region
        _
      $region32: #{transformer_forward.35} parent=27 // pred_fallthru
        _
    $region28: #{transformer_forward.35} parent=5 // pred_fallthru
      _
    %p642 = scmp.le.s32.totalorder 2, %s8
    // Predicated region
    $region33: #{transformer_forward.35} parent=5 // pred_check
      %p643 = pneg %p642
    $region34: #{transformer_forward.35} parent=5 // pred_check_branch
      %645 = sbr.rel (%p643) target = $region36
    $region35: #{transformer_forward.35} parent=5 // pred_region
      %s646 = ssub.s32 %s8, 2
      // Predicated region
      $region37: #{transformer_forward.35} parent=35 // pred_check
        %p647 = pneg %p89
      $region38: #{transformer_forward.35} parent=35 // pred_check_branch
        %649 = sbr.rel (%p647) target = $region40
      $region39: #{transformer_forward.35} parent=35 // pred_region
        %p650 = scmp.lt.s32.totalorder %s14, 1
        %s651 = scalar_select %p650, %s14, 1
        %s652 = smul.addr %s651, 4
        %s653 = scalar_lea.vmem %s2, %s652
      $region40: #{transformer_forward.35} parent=35 // pred_fallthru
        _
    $region36: #{transformer_forward.35} parent=5 // pred_fallthru
      _
  $region6: #{transformer_forward.35} parent=0 // loop_footer
    %s12 = sadd.s32 1, %s8
  $region7: #{transformer_forward.35} parent=0 // loop_footer_branch
    %7 = sbr.rel target = $region3
  $region8: #{transformer_forward.35} parent=0 // loop_exit
    _

// kernel: transformer_forward.44
$region0: #{transformer_forward.44}
  #allocation0 [shape = 'u32[]', space=smem, size = 0x4, offset = 0x4, fixed_abs, tag = 'smem constant byte address 0x4 - core index']
  #allocation1 [shape = 'u32[144,128]{1,0:T(1,128)}', space=vmem, size = 0x12000, scoped, tag = 'internal scratch']
  %s0 = inlined_call_operand.vmem [shape: bf16[16,32], index: 0, kind: input, shape index: {}]
  %s1 = inlined_call_operand.vmem [shape: f32[1,32], index: 1, kind: input, shape index: {}]
  %s2 = inlined_call_operand.vmem [shape: f32[1,32], index: 2, kind: input, shape index: {}]
  %s3 = inlined_call_operand.vmem [shape: bf16[16,32], index: 3, kind: output, shape index: {}]
  %s4 = sld [smem:[#allocation0]]
  $region22: #{transformer_forward.44} parent=0
    _
  %s6 = ssub.s32 1, %s4
  %s7 = scalar_select 0, %s6, %s4
  // Predicated region
  $region2: #{transformer_forward.44} parent=0 // pred_check
    _
  $region3: #{transformer_forward.44} parent=0 // pred_check_branch
    %9 = sbr.rel (0) target = $region5
  $region4: #{transformer_forward.44} parent=0 // pred_region
    _
  $region5: #{transformer_forward.44} parent=0 // pred_fallthru
    _
  // Predicated region
  $region6: #{transformer_forward.44} parent=0 // pred_check
    _
  $region7: #{transformer_forward.44} parent=0 // pred_check_branch
    %11 = sbr.rel (0) target = $region9
  $region8: #{transformer_forward.44} parent=0 // pred_region
    _
  $region9: #{transformer_forward.44} parent=0 // pred_fallthru
    _
  // Predicated region
  $region10: #{transformer_forward.44} parent=0 // pred_check
    _
  $region11: #{transformer_forward.44} parent=0 // pred_check_branch
    %13 = sbr.rel (0) target = $region13
  $region12: #{transformer_forward.44} parent=0 // pred_region
    _
  $region13: #{transformer_forward.44} parent=0 // pred_fallthru
    _
  %v14 = vld [vmem:[%s0] sm:$0xf]
  %v15 = vld [vmem:[%s0 + $0x4] sm:$0xf]
  %v16 = vunpack.c.l.bf16 %v14
  %v17 = vunpack.c.l.bf16 %v15
  %vm18 = vcmask 261120
  %v19 = vsel %vm18, %v16, 0.0
  %20 = vadd.xlane.f32.xlu0 %v19
  %v21 = vpop.xlane.xlu0 %20
  %v22 = vsel %vm18, %v17, 0.0
  %23 = vadd.xlane.f32.xlu0 %v22
  %v24 = vpop.xlane.xlu0 %23
  %v25 = vrcp.pop 32.0
  %v26 = vmul.f32 %v21, %v25
  %v27 = vmul.f32 %v24, %v25
  %v28 = vsub.f32 %v16, %v26
  %v29 = vsub.f32 %v17, %v27
  %v30 = vmul.f32 %v28, %v28
  %v31 = vmul.f32 %v29, %v29
  %v32 = vsel %vm18, %v30, 0.0
  %33 = vadd.xlane.f32.xlu0 %v32
  %v34 = vpop.xlane.xlu0 %33
  %v35 = vsel %vm18, %v31, 0.0
  %36 = vadd.xlane.f32.xlu0 %v35
  %v37 = vpop.xlane.xlu0 %36
  %v38 = vmul.f32 %v34, %v25
  %v39 = vmul.f32 %v37, %v25
  %v40 = vadd.f32 %v38, 1e-05
  %v41 = vadd.f32 %v39, 1e-05
  %v42 = vrsqrt.pop %v40
  %v43 = vrsqrt.pop %v41
  %v44 = vmul.f32 %v28, %v42
  %v45 = vmul.f32 %v29, %v43
  %v46 = vld [vmem:[%s1] sm:$0x1]
  %v48 = vlaneseq
  %v49 = vshrl.u32 %v48, 7
  %v50 = vsub.s32 0, %v49
  %v51 = vrot.slane %v46, %v50
  %v53 = vmul.f32 %v44, %v51
  %v54 = vmul.f32 %v45, %v51
  %v55 = vld [vmem:[%s2] sm:$0x1]
  %v57 = vlaneseq
  %v58 = vshrl.u32 %v57, 7
  %v59 = vsub.s32 0, %v58
  %v60 = vrot.slane %v55, %v59
  %v62 = vadd.f32 %v53, %v60
  %v63 = vadd.f32 %v54, %v60
  %v64 = vpack.c.bf16 %v63, %v62
  %v66 = vunpack.c.l.b16 %v64
  %v67 = vunpack.c.h.b16 %v64
  %v68 = vpack.c.b16 %v66, %v66
  %v69 = vpack.c.b16 %v67, %v67
  %vm72 = vcmask 257024
  %73 = vst.msk [vmem:[%s3] sm:$0xf] %vm72, %v68
  %74 = vst.msk [vmem:[%s3 + $0x4] sm:$0xf] %vm72, %v69
  // Predicated region
  $region14: #{transformer_forward.44} parent=0 // pred_check
    _
  $region15: #{transformer_forward.44} parent=0 // pred_check_branch
    %76 = sbr.rel (0) target = $region17
  $region16: #{transformer_forward.44} parent=0 // pred_region
    _
  $region17: #{transformer_forward.44} parent=0 // pred_fallthru
    _
  // Predicated region
  $region18: #{transformer_forward.44} parent=0 // pred_check
    _
  $region19: #{transformer_forward.44} parent=0 // pred_check_branch
    %78 = sbr.rel (0) target = $region21
  $region20: #{transformer_forward.44} parent=0 // pred_region
    _
  $region21: #{transformer_forward.44} parent=0 // pred_fallthru
    _

// kernel: transformer_forward.49
$region0: #{transformer_forward.49}
  #allocation0 [shape = 'u32[]', space=smem, size = 0x4, offset = 0x4, fixed_abs, tag = 'smem constant byte address 0x4 - core index']
  #allocation1 [shape = 'u32[144,128]{1,0:T(1,128)}', space=vmem, size = 0x12000, scoped, tag = 'internal scratch']
  #allocation2 [shape = 'f32[16,64]{1,0:T(8,128)}', space=vmem, size = 0x2000, scoped, tag = 'scratch operand']
  %s0 = inlined_call_operand.vmem [shape: bf16[16,32], index: 0, kind: input, shape index: {}]
  %s1 = inlined_call_operand.vmem [shape: bf16[32,64], index: 1, kind: input, shape index: {}]
  %s2 = inlined_call_operand.vmem [shape: f32[1,64], index: 2, kind: input, shape index: {}]
  %s3 = inlined_call_operand.vmem [shape: bf16[16,64], index: 3, kind: output, shape index: {}]
  %s4 = sld [smem:[#allocation0]]
  $region30: #{transformer_forward.49} parent=0
    _
  %s6 = ssub.s32 1, %s4
  %s7 = scalar_select 0, %s6, %s4
  // Predicated region
  $region2: #{transformer_forward.49} parent=0 // pred_check
    _
  $region3: #{transformer_forward.49} parent=0 // pred_check_branch
    %9 = sbr.rel (0) target = $region5
  $region4: #{transformer_forward.49} parent=0 // pred_region
    _
  $region5: #{transformer_forward.49} parent=0 // pred_fallthru
    _
  // Predicated region
  $region6: #{transformer_forward.49} parent=0 // pred_check
    _
  $region7: #{transformer_forward.49} parent=0 // pred_check_branch
    %11 = sbr.rel (0) target = $region9
  $region8: #{transformer_forward.49} parent=0 // pred_region
    _
  $region9: #{transformer_forward.49} parent=0 // pred_fallthru
    _
  // Predicated region
  $region10: #{transformer_forward.49} parent=0 // pred_check
    _
  $region11: #{transformer_forward.49} parent=0 // pred_check_branch
    %13 = sbr.rel (0) target = $region13
  $region12: #{transformer_forward.49} parent=0 // pred_region
    _
  $region13: #{transformer_forward.49} parent=0 // pred_fallthru
    _
  %p15 = scmp.eq.s32.totalorder 0, 0
  // Predicated region
  $region14: #{transformer_forward.49} parent=0 // pred_check
    %p16 = pneg %p15
  $region15: #{transformer_forward.49} parent=0 // pred_check_branch
    %18 = sbr.rel (%p16) target = $region17
  $region16: #{transformer_forward.49} parent=0 // pred_region
    %vm19 = vcmask 523264
    %20 = vst.msk [vmem:[#allocation2] sm:$0xff] %vm19, 0.0
    %21 = vst.msk [vmem:[#allocation2 + $0x8] sm:$0xff] %vm19, 0.0
  $region17: #{transformer_forward.49} parent=0 // pred_fallthru
    _
  %v22 = vld [vmem:[#allocation2] sm:$0xff]
  %v23 = vld [vmem:[#allocation2 + $0x8] sm:$0xff]
  %v24 = vld [vmem:[%s0] sm:$0xf]
  %v25 = vld [vmem:[%s0 + $0x4] sm:$0xf]
  %v26 = vld [vmem:[%s1] sm:$0xf]
  %v27 = vld [vmem:[%s1 + $0x4] sm:$0xf]
  %v28 = vld [vmem:[%s1 + $0x8] sm:$0xf]
  %v29 = vld [vmem:[%s1 + $0xc] sm:$0xf]
  %v32 = vunpack.c.l.b16 %v24
  %v33 = vunpack.c.l.b16 %v25
  %v34 = vpack.c.b16 %v33, %v32
  %v39 = vunpack.c.l.b16 %v26
  %v40 = vunpack.c.l.b16 %v27
  %v41 = vunpack.c.l.b16 %v28
  %v42 = vunpack.c.l.b16 %v29
  %v43 = vpack.c.b16 %v40, %v39
  %v44 = vpack.c.b16 %v42, %v41
  %vm47 = vcmask 261120
  %v49 = vsel %vm47, %v34, 0
  %51 = vmatprep.subr.bf16.mxu0 0
  %52 = vmatpush1.bf16.msra.mxu0 %v43
  %53 = vmatprep.subr.bf16.mxu0 0
  %54 = vmatpush1.bf16.msra.mxu0 %v44
  %55 = vmatprep.subr.bf16.mxu0 0
  %56 = vmatpush1.bf16.msra.mxu0 0
  %57 = vmatprep.subr.bf16.mxu0 0
  %58 = vmatpush1.bf16.msra.mxu0 0
  %59 = vmatprep.subr.bf16.mxu0 0
  %60 = vmatpush1.bf16.msra.mxu0 0
  %61 = vmatprep.subr.bf16.mxu0 0
  %62 = vmatpush1.bf16.msra.mxu0 0
  %63 = vmatprep.subr.bf16.mxu0 0
  %64 = vmatpush1.bf16.msra.mxu0 0
  %65 = vmatprep.subr.bf16.mxu0 0
  %66 = vmatpush1.bf16.msra.mxu0 0
  %67 = vmatprep.subr.bf16.mxu0 0
  %68 = vmatpush1.bf16.msra.mxu0 0
  %69 = vmatprep.subr.bf16.mxu0 0
  %70 = vmatpush1.bf16.msra.mxu0 0
  %71 = vmatprep.subr.bf16.mxu0 0
  %72 = vmatpush1.bf16.msra.mxu0 0
  %73 = vmatprep.subr.bf16.mxu0 0
  %74 = vmatpush1.bf16.msra.mxu0 0
  %75 = vmatprep.subr.bf16.mxu0 0
  %76 = vmatpush1.bf16.msra.mxu0 0
  %77 = vmatprep.subr.bf16.mxu0 0
  %78 = vmatpush1.bf16.msra.mxu0 0
  %79 = vmatprep.subr.bf16.mxu0 0
  %80 = vmatpush1.bf16.msra.mxu0 0
  %81 = vmatprep.subr.bf16.mxu0 0
  %82 = vmatpush1.bf16.msra.mxu0 0
  %83 = vmatprep.mubr.bf16.mxu0 0
  %84 = vmatmul.mubr.bf16.gmra.mrb[0].mxu0 %v49
  %v85 = vpop.f32.mrb[0].mxu0
  %v86 = vadd.f32 0.0, %v85
  %v87 = vpop.f32.mrb[0].mxu0
  %v88 = vpop.f32.mrb[0].mxu0
  %v89 = vadd.f32 0.0, %v88
  %v90 = vpop.f32.mrb[0].mxu0
  %91 = vdwg.mxu0
  %v92 = vadd.f32 %v22, %v86
  %v93 = vadd.f32 %v23, %v89
  %vm94 = vcmask 523264
  %95 = vst.msk [vmem:[#allocation2] sm:$0xff] %vm94, %v92
  %96 = vst.msk [vmem:[#allocation2 + $0x8] sm:$0xff] %vm94, %v93
  // Predicated region
  $region18: #{transformer_forward.49} parent=0 // pred_check
    %p97 = pneg %p15
  $region19: #{transformer_forward.49} parent=0 // pred_check_branch
    %99 = sbr.rel (%p97) target = $region21
  $region20: #{transformer_forward.49} parent=0 // pred_region
    %v100 = vld [vmem:[#allocation2] sm:$0xff]
    %v101 = vld [vmem:[#allocation2 + $0x8] sm:$0xff]
    %v102 = vld [vmem:[%s2] sm:$0x1]
    %v104 = vlaneseq
    %v105 = vshrl.u32 %v104, 7
    %v106 = vsub.s32 0, %v105
    %v107 = vrot.slane %v102, %v106
    %v109 = vadd.f32 %v100, %v107
    %v110 = vadd.f32 %v101, %v107
    %v111 = vpack.c.bf16 %v110, %v109
    %v113 = vunpack.c.l.b16 %v111
    %v114 = vunpack.c.h.b16 %v111
    %v115 = vpack.c.b16 %v113, %v113
    %v116 = vpack.c.b16 %v114, %v114
    %vm119 = vcmask 519168
    %120 = vst.msk [vmem:[%s3] sm:$0xf] %vm119, %v115
    %121 = vst.msk [vmem:[%s3 + $0x4] sm:$0xf] %vm119, %v116
  $region21: #{transformer_forward.49} parent=0 // pred_fallthru
    _
  // Predicated region
  $region22: #{transformer_forward.49} parent=0 // pred_check
    _
  $region23: #{transformer_forward.49} parent=0 // pred_check_branch
    %123 = sbr.rel (0) target = $region25
  $region24: #{transformer_forward.49} parent=0 // pred_region
    _
  $region25: #{transformer_forward.49} parent=0 // pred_fallthru
    _
  // Predicated region
  $region26: #{transformer_forward.49} parent=0 // pred_check
    _
  $region27: #{transformer_forward.49} parent=0 // pred_check_branch
    %125 = sbr.rel (0) target = $region29
  $region28: #{transformer_forward.49} parent=0 // pred_region
    _
  $region29: #{transformer_forward.49} parent=0 // pred_fallthru
    _

// kernel: transformer_forward.38
$region0: #{transformer_forward.38}
  #allocation0 [shape = 'u32[]', space=smem, size = 0x4, offset = 0x4, fixed_abs, tag = 'smem constant byte address 0x4 - core index']
  #allocation1 [shape = 'u32[144,128]{1,0:T(1,128)}', space=vmem, size = 0x12000, scoped, tag = 'internal scratch']
  #allocation2 [shape = 'f32[16,32]{1,0:T(8,128)}', space=vmem, size = 0x2000, scoped, tag = 'scratch operand']
  %s0 = inlined_call_operand.vmem [shape: bf16[16,64], index: 0, kind: input, shape index: {}]
  %s1 = inlined_call_operand.vmem [shape: bf16[64,32], index: 1, kind: input, shape index: {}]
  %s2 = inlined_call_operand.vmem [shape: f32[1,32], index: 2, kind: input, shape index: {}]
  %s3 = inlined_call_operand.vmem [shape: bf16[16,32], index: 3, kind: input, shape index: {}]
  %s4 = inlined_call_operand.vmem [shape: f32[1,32], index: 4, kind: input, shape index: {}]
  %s5 = inlined_call_operand.vmem [shape: f32[1,32], index: 5, kind: input, shape index: {}]
  %s6 = inlined_call_operand.vmem [shape: bf16[16,32], index: 6, kind: output, shape index: {}]
  %s7 = sld [smem:[#allocation0]]
  $region42: #{transformer_forward.38} parent=0
    _
  %s9 = ssub.s32 1, %s7
  %s10 = scalar_select 0, %s9, %s7
  // Predicated region
  $region2: #{transformer_forward.38} parent=0 // pred_check
    _
  $region3: #{transformer_forward.38} parent=0 // pred_check_branch
    %12 = sbr.rel (0) target = $region5
  $region4: #{transformer_forward.38} parent=0 // pred_region
    _
  $region5: #{transformer_forward.38} parent=0 // pred_fallthru
    _
  // Predicated region
  $region6: #{transformer_forward.38} parent=0 // pred_check
    _
  $region7: #{transformer_forward.38} parent=0 // pred_check_branch
    %14 = sbr.rel (0) target = $region9
  $region8: #{transformer_forward.38} parent=0 // pred_region
    _
  $region9: #{transformer_forward.38} parent=0 // pred_fallthru
    _
  // Predicated region
  $region10: #{transformer_forward.38} parent=0 // pred_check
    _
  $region11: #{transformer_forward.38} parent=0 // pred_check_branch
    %16 = sbr.rel (0) target = $region13
  $region12: #{transformer_forward.38} parent=0 // pred_region
    _
  $region13: #{transformer_forward.38} parent=0 // pred_fallthru
    _
  // Predicated region
  $region14: #{transformer_forward.38} parent=0 // pred_check
    _
  $region15: #{transformer_forward.38} parent=0 // pred_check_branch
    %18 = sbr.rel (0) target = $region17
  $region16: #{transformer_forward.38} parent=0 // pred_region
    _
  $region17: #{transformer_forward.38} parent=0 // pred_fallthru
    _
  // Predicated region
  $region18: #{transformer_forward.38} parent=0 // pred_check
    _
  $region19: #{transformer_forward.38} parent=0 // pred_check_branch
    %20 = sbr.rel (0) target = $region21
  $region20: #{transformer_forward.38} parent=0 // pred_region
    _
  $region21: #{transformer_forward.38} parent=0 // pred_fallthru
    _
  // Predicated region
  $region22: #{transformer_forward.38} parent=0 // pred_check
    _
  $region23: #{transformer_forward.38} parent=0 // pred_check_branch
    %22 = sbr.rel (0) target = $region25
  $region24: #{transformer_forward.38} parent=0 // pred_region
    _
  $region25: #{transformer_forward.38} parent=0 // pred_fallthru
    _
  %p24 = scmp.eq.s32.totalorder 0, 0
  // Predicated region
  $region26: #{transformer_forward.38} parent=0 // pred_check
    %p25 = pneg %p24
  $region27: #{transformer_forward.38} parent=0 // pred_check_branch
    %27 = sbr.rel (%p25) target = $region29
  $region28: #{transformer_forward.38} parent=0 // pred_region
    %vm28 = vcmask 261120
    %29 = vst.msk [vmem:[#allocation2] sm:$0xff] %vm28, 0.0
    %30 = vst.msk [vmem:[#allocation2 + $0x8] sm:$0xff] %vm28, 0.0
  $region29: #{transformer_forward.38} parent=0 // pred_fallthru
    _
  %v31 = vld [vmem:[#allocation2] sm:$0xff]
  %v32 = vld [vmem:[#allocation2 + $0x8] sm:$0xff]
  %v33 = vld [vmem:[%s0] sm:$0xf]
  %v34 = vld [vmem:[%s0 + $0x4] sm:$0xf]
  %v35 = vld [vmem:[%s1] sm:$0xf]
  %v36 = vld [vmem:[%s1 + $0x4] sm:$0xf]
  %v37 = vld [vmem:[%s1 + $0x8] sm:$0xf]
  %v38 = vld [vmem:[%s1 + $0xc] sm:$0xf]
  %v39 = vld [vmem:[%s1 + $0x10] sm:$0xf]
  %v40 = vld [vmem:[%s1 + $0x14] sm:$0xf]
  %v41 = vld [vmem:[%s1 + $0x18] sm:$0xf]
  %v42 = vld [vmem:[%s1 + $0x1c] sm:$0xf]
  %v45 = vunpack.c.l.b16 %v33
  %v46 = vunpack.c.l.b16 %v34
  %v47 = vpack.c.b16 %v46, %v45
  %v56 = vunpack.c.l.b16 %v35
  %v57 = vunpack.c.l.b16 %v36
  %v58 = vunpack.c.l.b16 %v37
  %v59 = vunpack.c.l.b16 %v38
  %v60 = vunpack.c.l.b16 %v39
  %v61 = vunpack.c.l.b16 %v40
  %v62 = vunpack.c.l.b16 %v41
  %v63 = vunpack.c.l.b16 %v42
  %v64 = vpack.c.b16 %v57, %v56
  %v65 = vpack.c.b16 %v59, %v58
  %v66 = vpack.c.b16 %v61, %v60
  %v67 = vpack.c.b16 %v63, %v62
  %vm72 = vcmask 523264
  %v74 = vsel %vm72, %v47, 0
  %76 = vmatprep.subr.bf16.mxu0 0
  %77 = vmatpush1.bf16.msra.mxu0 %v64
  %78 = vmatprep.subr.bf16.mxu0 0
  %79 = vmatpush1.bf16.msra.mxu0 %v65
  %80 = vmatprep.subr.bf16.mxu0 0
  %81 = vmatpush1.bf16.msra.mxu0 %v66
  %82 = vmatprep.subr.bf16.mxu0 0
  %83 = vmatpush1.bf16.msra.mxu0 %v67
  %84 = vmatprep.subr.bf16.mxu0 0
  %85 = vmatpush1.bf16.msra.mxu0 0
  %86 = vmatprep.subr.bf16.mxu0 0
  %87 = vmatpush1.bf16.msra.mxu0 0
  %88 = vmatprep.subr.bf16.mxu0 0
  %89 = vmatpush1.bf16.msra.mxu0 0
  %90 = vmatprep.subr.bf16.mxu0 0
  %91 = vmatpush1.bf16.msra.mxu0 0
  %92 = vmatprep.subr.bf16.mxu0 0
  %93 = vmatpush1.bf16.msra.mxu0 0
  %94 = vmatprep.subr.bf16.mxu0 0
  %95 = vmatpush1.bf16.msra.mxu0 0
  %96 = vmatprep.subr.bf16.mxu0 0
  %97 = vmatpush1.bf16.msra.mxu0 0
  %98 = vmatprep.subr.bf16.mxu0 0
  %99 = vmatpush1.bf16.msra.mxu0 0
  %100 = vmatprep.subr.bf16.mxu0 0
  %101 = vmatpush1.bf16.msra.mxu0 0
  %102 = vmatprep.subr.bf16.mxu0 0
  %103 = vmatpush1.bf16.msra.mxu0 0
  %104 = vmatprep.subr.bf16.mxu0 0
  %105 = vmatpush1.bf16.msra.mxu0 0
  %106 = vmatprep.subr.bf16.mxu0 0
  %107 = vmatpush1.bf16.msra.mxu0 0
  %108 = vmatprep.mubr.bf16.mxu0 0
  %109 = vmatmul.mubr.bf16.gmra.mrb[0].mxu0 %v74
  %v110 = vpop.f32.mrb[0].mxu0
  %v111 = vadd.f32 0.0, %v110
  %v112 = vpop.f32.mrb[0].mxu0
  %v113 = vpop.f32.mrb[0].mxu0
  %v114 = vadd.f32 0.0, %v113
  %v115 = vpop.f32.mrb[0].mxu0
  %116 = vdwg.mxu0
  %v117 = vadd.f32 %v31, %v111
  %v118 = vadd.f32 %v32, %v114
  %vm119 = vcmask 261120
  %120 = vst.msk [vmem:[#allocation2] sm:$0xff] %vm119, %v117
  %121 = vst.msk [vmem:[#allocation2 + $0x8] sm:$0xff] %vm119, %v118
  // Predicated region
  $region30: #{transformer_forward.38} parent=0 // pred_check
    %p122 = pneg %p24
  $region31: #{transformer_forward.38} parent=0 // pred_check_branch
    %124 = sbr.rel (%p122) target = $region33
  $region32: #{transformer_forward.38} parent=0 // pred_region
    %v125 = vld [vmem:[#allocation2] sm:$0xff]
    %v126 = vld [vmem:[#allocation2 + $0x8] sm:$0xff]
    %v127 = vld [vmem:[%s2] sm:$0x1]
    %v129 = vlaneseq
    %v130 = vshrl.u32 %v129, 7
    %v131 = vsub.s32 0, %v130
    %v132 = vrot.slane %v127, %v131
    %v134 = vadd.f32 %v125, %v132
    %v135 = vadd.f32 %v126, %v132
    %v136 = vld [vmem:[%s3] sm:$0xf]
    %v137 = vld [vmem:[%s3 + $0x4] sm:$0xf]
    %v138 = vunpack.c.l.bf16 %v136
    %v139 = vunpack.c.l.bf16 %v137
    %v140 = vadd.f32 %v134, %v138
    %v141 = vadd.f32 %v135, %v139
    %v142 = vsel %vm119, %v140, 0.0
    %143 = vadd.xlane.f32.xlu0 %v142
    %v144 = vpop.xlane.xlu0 %143
    %v145 = vsel %vm119, %v141, 0.0
    %146 = vadd.xlane.f32.xlu0 %v145
    %v147 = vpop.xlane.xlu0 %146
    %v148 = vrcp.pop 32.0
    %v149 = vmul.f32 %v144, %v148
    %v150 = vmul.f32 %v147, %v148
    %v151 = vsub.f32 %v140, %v149
    %v152 = vsub.f32 %v141, %v150
    %v153 = vmul.f32 %v151, %v151
    %v154 = vmul.f32 %v152, %v152
    %v155 = vsel %vm119, %v153, 0.0
    %156 = vadd.xlane.f32.xlu0 %v155
    %v157 = vpop.xlane.xlu0 %156
    %v158 = vsel %vm119, %v154, 0.0
    %159 = vadd.xlane.f32.xlu0 %v158
    %v160 = vpop.xlane.xlu0 %159
    %v161 = vmul.f32 %v157, %v148
    %v162 = vmul.f32 %v160, %v148
    %v163 = vadd.f32 %v161, 1e-05
    %v164 = vadd.f32 %v162, 1e-05
    %v165 = vrsqrt.pop %v163
    %v166 = vrsqrt.pop %v164
    %v167 = vmul.f32 %v151, %v165
    %v168 = vmul.f32 %v152, %v166
    %v169 = vld [vmem:[%s4] sm:$0x1]
    %v171 = vlaneseq
    %v172 = vshrl.u32 %v171, 7
    %v173 = vsub.s32 0, %v172
    %v174 = vrot.slane %v169, %v173
    %v176 = vmul.f32 %v167, %v174
    %v177 = vmul.f32 %v168, %v174
    %v178 = vld [vmem:[%s5] sm:$0x1]
    %v180 = vlaneseq
    %v181 = vshrl.u32 %v180, 7
    %v182 = vsub.s32 0, %v181
    %v183 = vrot.slane %v178, %v182
    %v185 = vadd.f32 %v176, %v183
    %v186 = vadd.f32 %v177, %v183
    %v187 = vpack.c.bf16 %v186, %v185
    %v189 = vunpack.c.l.b16 %v187
    %v190 = vunpack.c.h.b16 %v187
    %v191 = vpack.c.b16 %v189, %v189
    %v192 = vpack.c.b16 %v190, %v190
    %vm195 = vcmask 257024
    %196 = vst.msk [vmem:[%s6] sm:$0xf] %vm195, %v191
    %197 = vst.msk [vmem:[%s6 + $0x4] sm:$0xf] %vm195, %v192
  $region33: #{transformer_forward.38} parent=0 // pred_fallthru
    _
  // Predicated region
  $region34: #{transformer_forward.38} parent=0 // pred_check
    _
  $region35: #{transformer_forward.38} parent=0 // pred_check_branch
    %199 = sbr.rel (0) target = $region37
  $region36: #{transformer_forward.38} parent=0 // pred_region
    _
  $region37: #{transformer_forward.38} parent=0 // pred_fallthru
    _
  // Predicated region
  $region38: #{transformer_forward.38} parent=0 // pred_check
    _
  $region39: #{transformer_forward.38} parent=0 // pred_check_branch
    %201 = sbr.rel (0) target = $region41
  $region40: #{transformer_forward.38} parent=0 // pred_region
    _
  $region41: #{transformer_forward.38} parent=0 // pred_fallthru
    _

// kernel: transformer_forward.46
$region0: #{transformer_forward.46}
  #allocation0 [shape = 'u32[]', space=smem, size = 0x4, offset = 0x4, fixed_abs, tag = 'smem constant byte address 0x4 - core index']
  #allocation1 [shape = 'u32[144,128]{1,0:T(1,128)}', space=vmem, size = 0x12000, scoped, tag = 'internal scratch']
  %s0 = inlined_call_operand.vmem [shape: bf16[2,8,96], index: 0, kind: input, shape index: {}]
  %s1 = inlined_call_operand.vmem [shape: f32[2,1,8], index: 1, kind: input, shape index: {}]
  %s2 = inlined_call_operand.vmem [shape: bf16[2,8,32], index: 2, kind: output, shape index: {}]
  %s3 = sld [smem:[#allocation0]]
  $region41: #{transformer_forward.46} parent=0
    _
  %s5 = ssub.s32 1, %s3
  %s6 = scalar_select 0, %s5, %s3
  loop: start=0, step=1, limit=4
  $region2: #{transformer_forward.46} parent=0 // loop_pre_header
    _
  $region3: #{transformer_forward.46} parent=0 // loop_header
    %s8 = sphi 0, %s12
    %p9 = scmp.ge.s32.totalorder %s8, 4
    %s18 = sphi 0, %s20
    %s21 = sphi 0, %s18
    %s22 = sphi 0, %s21
    %s38 = sphi 0, %s22
    %s44 = sphi 0, %s46
    %s47 = sphi 0, %s44
    %s48 = sphi 0, %s47
    %s64 = sphi 0, %s48
    %s70 = sphi 0, %s72
    %s73 = sphi 0, %s70
    %s74 = sphi 0, %s73
    %s90 = sphi 0, %s74
  $region4: #{transformer_forward.46} parent=0 // loop_header_branch
    %11 = sbr.rel (%p9) target = $region8
  $region5: #{transformer_forward.46} parent=0 // loop_body
    %s13 = ssub.s32 %s8, 1
    %s14 = ssub.s32 %s8, 2
    %s15 = sadd.s32 %s8, 1
    %s16 = ssub.s32 %s8, %s15
    %p17 = scmp.eq.s32.totalorder %s16, 0
    %s19 = sadd.s32 %s18, 1
    %s20 = scalar_select %p17, %s18, %s19
    %p23 = pneg %p17
    %p24 = scmp.eq.s32.totalorder %s8, 1
    %p25 = por %p23, %p24
    %p26 = scmp.ne.s32.totalorder %s18, %s21
    %p27 = scmp.eq.s32.totalorder %s8, 0
    %p28 = por %p26, %p27
    %p29 = scmp.ne.s32.totalorder %s18, %s21
    %p30 = scmp.eq.s32.totalorder %s13, 1
    %p31 = por %p29, %p30
    %p32 = scmp.ne.s32.totalorder %s21, %s22
    %p33 = scmp.eq.s32.totalorder %s13, 0
    %p34 = por %p32, %p33
    %p35 = scmp.ne.s32.totalorder %s21, %s22
    %p36 = scmp.eq.s32.totalorder %s14, 1
    %p37 = por %p35, %p36
    %p39 = scmp.ne.s32.totalorder %s22, %s38
    %p40 = scmp.eq.s32.totalorder %s14, 0
    %p41 = por %p39, %p40
    %s42 = ssub.s32 %s8, %s15
    %p43 = scmp.eq.s32.totalorder %s42, 0
    %s45 = sadd.s32 %s44, 1
    %s46 = scalar_select %p43, %s44, %s45
    %p49 = pneg %p43
    %p50 = scmp.eq.s32.totalorder %s8, 1
    %p51 = por %p49, %p50
    %p52 = scmp.ne.s32.totalorder %s44, %s47
    %p53 = scmp.eq.s32.totalorder %s8, 0
    %p54 = por %p52, %p53
    %p55 = scmp.ne.s32.totalorder %s44, %s47
    %p56 = scmp.eq.s32.totalorder %s13, 1
    %p57 = por %p55, %p56
    %p58 = scmp.ne.s32.totalorder %s47, %s48
    %p59 = scmp.eq.s32.totalorder %s13, 0
    %p60 = por %p58, %p59
    %p61 = scmp.ne.s32.totalorder %s47, %s48
    %p62 = scmp.eq.s32.totalorder %s14, 1
    %p63 = por %p61, %p62
    %p65 = scmp.ne.s32.totalorder %s48, %s64
    %p66 = scmp.eq.s32.totalorder %s14, 0
    %p67 = por %p65, %p66
    %s68 = ssub.s32 %s8, %s15
    %p69 = scmp.eq.s32.totalorder %s68, 0
    %s71 = sadd.s32 %s70, 1
    %s72 = scalar_select %p69, %s70, %s71
    %p75 = pneg %p69
    %p76 = scmp.eq.s32.totalorder %s8, 1
    %p77 = por %p75, %p76
    %p78 = scmp.ne.s32.totalorder %s70, %s73
    %p79 = scmp.eq.s32.totalorder %s8, 0
    %p80 = por %p78, %p79
    %p81 = scmp.ne.s32.totalorder %s70, %s73
    %p82 = scmp.eq.s32.totalorder %s13, 1
    %p83 = por %p81, %p82
    %p84 = scmp.ne.s32.totalorder %s73, %s74
    %p85 = scmp.eq.s32.totalorder %s13, 0
    %p86 = por %p84, %p85
    %p87 = scmp.ne.s32.totalorder %s73, %s74
    %p88 = scmp.eq.s32.totalorder %s14, 1
    %p89 = por %p87, %p88
    %p91 = scmp.ne.s32.totalorder %s74, %s90
    %p92 = scmp.eq.s32.totalorder %s14, 0
    %p93 = por %p91, %p92
    %p94 = scmp.le.s32.totalorder 1, %s8
    %p95 = scmp.lt.s32.totalorder %s8, 3
    %p96 = pnand %p94, %p95
    %p97 = pneg %p96
    // Predicated region
    $region9: #{transformer_forward.46} parent=5 // pred_check
      _
    $region10: #{transformer_forward.46} parent=5 // pred_check_branch
      %99 = sbr.rel (%p96) target = $region12
    $region11: #{transformer_forward.46} parent=5 // pred_region
      %s100 = ssub.s32 %s8, 1
    $region12: #{transformer_forward.46} parent=5 // pred_fallthru
      _
    %p101 = scmp.lt.s32.totalorder %s8, 2
    // Predicated region
    $region13: #{transformer_forward.46} parent=5 // pred_check
      %p102 = pneg %p101
    $region14: #{transformer_forward.46} parent=5 // pred_check_branch
      %104 = sbr.rel (%p102) target = $region16
    $region15: #{transformer_forward.46} parent=5 // pred_region
      // Predicated region
      $region17: #{transformer_forward.46} parent=15 // pred_check
        %p105 = pneg %p28
      $region18: #{transformer_forward.46} parent=15 // pred_check_branch
        %107 = sbr.rel (%p105) target = $region20
      $region19: #{transformer_forward.46} parent=15 // pred_region
        %p108 = scmp.lt.s32.totalorder %s8, 1
        %s109 = scalar_select %p108, %s8, 1
        %s110 = smul.addr %s109, 4
        %s111 = scalar_lea.vmem %s0, %s110
      $region20: #{transformer_forward.46} parent=15 // pred_fallthru
        _
      // Predicated region
      $region21: #{transformer_forward.46} parent=15 // pred_check
        %p112 = pneg %p54
      $region22: #{transformer_forward.46} parent=15 // pred_check_branch
        %114 = sbr.rel (%p112) target = $region24
      $region23: #{transformer_forward.46} parent=15 // pred_region
        %p115 = scmp.lt.s32.totalorder %s8, 1
        %s116 = scalar_select %p115, %s8, 1
        %s117 = scalar_lea.vmem %s1, %s116
      $region24: #{transformer_forward.46} parent=15 // pred_fallthru
        _
    $region16: #{transformer_forward.46} parent=5 // pred_fallthru
      _
    %p118 = scmp.le.s32.totalorder 1, %s8
    %p119 = scmp.lt.s32.totalorder %s8, 3
    %p120 = pnand %p118, %p119
    %p121 = pneg %p120
    // Predicated region
    $region25: #{transformer_forward.46} parent=5 // pred_check
      _
    $region26: #{transformer_forward.46} parent=5 // pred_check_branch
      %123 = sbr.rel (%p120) target = $region28
    $region27: #{transformer_forward.46} parent=5 // pred_region
      %s124 = ssub.s32 %s8, 1
      %p125 = scmp.lt.s32.totalorder %s13, 1
      %s126 = scalar_select %p125, %s13, 1
      %s127 = smul.addr %s126, 4
      %s128 = scalar_lea.vmem %s0, %s127
      %p129 = pneg %p34
      %p130 = pneg %p31
      %p131 = scmp.lt.s32.totalorder %s13, 1
      %s132 = scalar_select %p131, %s13, 1
      %s133 = scalar_lea.vmem %s1, %s132
      %p134 = pneg %p60
      %p135 = pneg %p57
      %p136 = pneg %p86
      %p137 = pneg %p83
      %p138 = scmp.lt.s32.totalorder %s13, 1
      %s139 = scalar_select %p138, %s13, 1
      %s140 = smul.addr %s139, 4
      %s141 = scalar_lea.vmem %s2, %s140
      %p142 = scmp.lt.s32.totalorder %s13, 1
      %s143 = scalar_select %p142, %s13, 1
      %s144 = smul.addr %s143, 4
      %s145 = scalar_lea.vmem %s0, %s144
      %p146 = scmp.lt.s32.totalorder %s13, 1
      %s147 = scalar_select %p146, %s13, 1
      %s148 = scalar_lea.vmem %s1, %s147
      %p149 = scmp.lt.s32.totalorder %s13, 1
      %s150 = scalar_select %p149, %s13, 1
      %s151 = smul.addr %s150, 4
      %s152 = scalar_lea.vmem %s2, %s151
      %v154 = vld [vmem:[%s145] sm:$0xf]
      %v155 = vld [vmem:[%s148] sm:$0x1]
      %v156 = vlaneseq
      %v157 = vshrl.u32 %v156, 7
      %v158 = vlaneseq
      %v159 = vand.u32 %v158, 127
      %vm160 = vcmp.ge.s32.totalorder %v157, %v159
      %v161 = vsel %vm160, 0.0, -1e+30
      %v163 = vlaneseq
      %v164 = vshrl.u32 %v163, 7
      %v165 = vsub.s32 0, %v164
      %v166 = vrot.slane %v155, %v165
      %v168 = vadd.f32 %v166, %v161
      %v170 = vunpack.c.l.b16 %v154
      %v171 = vpack.c.b16 %v170, %v170
      %172 = vrot.lane.b32.xlu0 %v171, 96
      %v173 = vpop.permute.xlu0 %172
      %vm174 = vcmask 64512
      %v176 = vsel %vm174, %v154, 0
      %v179 = vsel %vm174, %v173, 0
      %181 = vmatprep.subr.bf16.mxu0 0
      %182 = vmatpush1.bf16.xpose.msra.mxu0 %v179
      %183 = vmatprep.subr.bf16.mxu0 0
      %184 = vmatpush1.bf16.xpose.msra.mxu0 0
      %185 = vmatprep.subr.bf16.mxu0 0
      %186 = vmatpush1.bf16.xpose.msra.mxu0 0
      %187 = vmatprep.subr.bf16.mxu0 0
      %188 = vmatpush1.bf16.xpose.msra.mxu0 0
      %189 = vmatprep.subr.bf16.mxu0 0
      %190 = vmatpush1.bf16.xpose.msra.mxu0 0
      %191 = vmatprep.subr.bf16.mxu0 0
      %192 = vmatpush1.bf16.xpose.msra.mxu0 0
      %193 = vmatprep.subr.bf16.mxu0 0
      %194 = vmatpush1.bf16.xpose.msra.mxu0 0
      %195 = vmatprep.subr.bf16.mxu0 0
      %196 = vmatpush1.bf16.xpose.msra.mxu0 0
      %197 = vmatprep.subr.bf16.mxu0 0
      %198 = vmatpush1.bf16.xpose.msra.mxu0 0
      %199 = vmatprep.subr.bf16.mxu0 0
      %200 = vmatpush1.bf16.xpose.msra.mxu0 0
      %201 = vmatprep.subr.bf16.mxu0 0
      %202 = vmatpush1.bf16.xpose.msra.mxu0 0
      %203 = vmatprep.subr.bf16.mxu0 0
      %204 = vmatpush1.bf16.xpose.msra.mxu0 0
      %205 = vmatprep.subr.bf16.mxu0 0
      %206 = vmatpush1.bf16.xpose.msra.mxu0 0
      %207 = vmatprep.subr.bf16.mxu0 0
      %208 = vmatpush1.bf16.xpose.msra.mxu0 0
      %209 = vmatprep.subr.bf16.mxu0 0
      %210 = vmatpush1.bf16.xpose.msra.mxu0 0
      %211 = vmatprep.subr.bf16.mxu0 0
      %212 = vmatpush1.bf16.xpose.msra.mxu0 0
      %213 = vmatprep.mubr.bf16.mxu0 0
      %214 = vmatmul.mubr.bf16.gmra.mrb[0].mxu0 %v176
      %v215 = vpop.f32.mrb[0].mxu0
      %v216 = vadd.f32 %v168, %v215
      %v217 = vpop.f32.mrb[0].mxu0
      %v218 = vpop.f32.mrb[0].mxu0
      %v219 = vpop.f32.mrb[0].mxu0
      %220 = vdwg.mxu0
      %v221 = vsel %vm174, %v216, -inf
      %222 = vmax.xlane.f32.xlu0 %v221
      %v223 = vpop.xlane.xlu0 %222
      %v224 = vsub.f32 %v216, %v223
      %v225 = vmul.f32 %v224, 1.442695
      %v226 = vpow.pop %v225
      %v227 = vsel %vm174, %v226, 0.0
      %228 = vadd.xlane.f32.xlu0 %v227
      %v229 = vpop.xlane.xlu0 %228
      %v230 = vrcp.pop %v229
      %v231 = vmul.f32 %v226, %v230
      %v232 = vpack.c.bf16 %v231, %v231
      %233 = vrot.lane.b32.xlu0 %v171, 64
      %v234 = vpop.permute.xlu0 %233
      %v236 = vsel %vm174, %v232, 0
      %vm238 = vcmask 1043456
      %v240 = vsel %vm238, %v234, 0
      %242 = vmatprep.subr.bf16.mxu0 0
      %243 = vmatpush1.bf16.msra.mxu0 %v240
      %244 = vmatprep.subr.bf16.mxu0 0
      %245 = vmatpush1.bf16.msra.mxu0 0
      %246 = vmatprep.subr.bf16.mxu0 0
      %247 = vmatpush1.bf16.msra.mxu0 0
      %248 = vmatprep.subr.bf16.mxu0 0
      %249 = vmatpush1.bf16.msra.mxu0 0
      %250 = vmatprep.subr.bf16.mxu0 0
      %251 = vmatpush1.bf16.msra.mxu0 0
      %252 = vmatprep.subr.bf16.mxu0 0
      %253 = vmatpush1.bf16.msra.mxu0 0
      %254 = vmatprep.subr.bf16.mxu0 0
      %255 = vmatpush1.bf16.msra.mxu0 0
      %256 = vmatprep.subr.bf16.mxu0 0
      %257 = vmatpush1.bf16.msra.mxu0 0
      %258 = vmatprep.subr.bf16.mxu0 0
      %259 = vmatpush1.bf16.msra.mxu0 0
      %260 = vmatprep.subr.bf16.mxu0 0
      %261 = vmatpush1.bf16.msra.mxu0 0
      %262 = vmatprep.subr.bf16.mxu0 0
      %263 = vmatpush1.bf16.msra.mxu0 0
      %264 = vmatprep.subr.bf16.mxu0 0
      %265 = vmatpush1.bf16.msra.mxu0 0
      %266 = vmatprep.subr.bf16.mxu0 0
      %267 = vmatpush1.bf16.msra.mxu0 0
      %268 = vmatprep.subr.bf16.mxu0 0
      %269 = vmatpush1.bf16.msra.mxu0 0
      %270 = vmatprep.subr.bf16.mxu0 0
      %271 = vmatpush1.bf16.msra.mxu0 0
      %272 = vmatprep.subr.bf16.mxu0 0
      %273 = vmatpush1.bf16.msra.mxu0 0
      %274 = vmatprep.mubr.bf16.mxu0 0
      %275 = vmatmul.mubr.bf16.gmra.mrb[0].mxu0 %v236
      %v276 = vpop.f32.mrb[0].mxu0
      %v277 = vadd.f32 0.0, %v276
      %v278 = vpop.f32.mrb[0].mxu0
      %v279 = vpop.f32.mrb[0].mxu0
      %v280 = vpop.f32.mrb[0].mxu0
      %281 = vdwg.mxu0
      %v282 = vpack.c.bf16 %v277, %v277
      %vm283 = vcmask 60416
      %284 = vst.msk [vmem:[%s152] sm:$0xf] %vm283, %v282
      %285 = vrot.lane.b32.xlu0 %v171, 120
      %v286 = vpop.permute.xlu0 %285
      %287 = vrot.lane.b32.xlu0 %v171, 88
      %v288 = vpop.permute.xlu0 %287
      %v290 = vsel %vm174, %v286, 0
      %v293 = vsel %vm174, %v288, 0
      %295 = vmatprep.subr.bf16.mxu0 0
      %296 = vmatpush1.bf16.xpose.msra.mxu0 %v293
      %297 = vmatprep.subr.bf16.mxu0 0
      %298 = vmatpush1.bf16.xpose.msra.mxu0 0
      %299 = vmatprep.subr.bf16.mxu0 0
      %300 = vmatpush1.bf16.xpose.msra.mxu0 0
      %301 = vmatprep.subr.bf16.mxu0 0
      %302 = vmatpush1.bf16.xpose.msra.mxu0 0
      %303 = vmatprep.subr.bf16.mxu0 0
      %304 = vmatpush1.bf16.xpose.msra.mxu0 0
      %305 = vmatprep.subr.bf16.mxu0 0
      %306 = vmatpush1.bf16.xpose.msra.mxu0 0
      %307 = vmatprep.subr.bf16.mxu0 0
      %308 = vmatpush1.bf16.xpose.msra.mxu0 0
      %309 = vmatprep.subr.bf16.mxu0 0
      %310 = vmatpush1.bf16.xpose.msra.mxu0 0
      %311 = vmatprep.subr.bf16.mxu0 0
      %312 = vmatpush1.bf16.xpose.msra.mxu0 0
      %313 = vmatprep.subr.bf16.mxu0 0
      %314 = vmatpush1.bf16.xpose.msra.mxu0 0
      %315 = vmatprep.subr.bf16.mxu0 0
      %316 = vmatpush1.bf16.xpose.msra.mxu0 0
      %317 = vmatprep.subr.bf16.mxu0 0
      %318 = vmatpush1.bf16.xpose.msra.mxu0 0
      %319 = vmatprep.subr.bf16.mxu0 0
      %320 = vmatpush1.bf16.xpose.msra.mxu0 0
      %321 = vmatprep.subr.bf16.mxu0 0
      %322 = vmatpush1.bf16.xpose.msra.mxu0 0
      %323 = vmatprep.subr.bf16.mxu0 0
      %324 = vmatpush1.bf16.xpose.msra.mxu0 0
      %325 = vmatprep.subr.bf16.mxu0 0
      %326 = vmatpush1.bf16.xpose.msra.mxu0 0
      %327 = vmatprep.mubr.bf16.mxu0 0
      %328 = vmatmul.mubr.bf16.gmra.mrb[0].mxu0 %v290
      %v329 = vpop.f32.mrb[0].mxu0
      %v330 = vadd.f32 %v168, %v329
      %v331 = vpop.f32.mrb[0].mxu0
      %v332 = vpop.f32.mrb[0].mxu0
      %v333 = vpop.f32.mrb[0].mxu0
      %334 = vdwg.mxu0
      %v335 = vsel %vm174, %v330, -inf
      %336 = vmax.xlane.f32.xlu0 %v335
      %v337 = vpop.xlane.xlu0 %336
      %v338 = vsub.f32 %v330, %v337
      %v339 = vmul.f32 %v338, 1.442695
      %v340 = vpow.pop %v339
      %v341 = vsel %vm174, %v340, 0.0
      %342 = vadd.xlane.f32.xlu0 %v341
      %v343 = vpop.xlane.xlu0 %342
      %v344 = vrcp.pop %v343
      %v345 = vmul.f32 %v340, %v344
      %v346 = vpack.c.bf16 %v345, %v345
      %347 = vrot.lane.b32.xlu0 %v171, 56
      %v348 = vpop.permute.xlu0 %347
      %v350 = vsel %vm174, %v346, 0
      %v353 = vsel %vm238, %v348, 0
      %355 = vmatprep.subr.bf16.mxu0 0
      %356 = vmatpush1.bf16.msra.mxu0 %v353
      %357 = vmatprep.subr.bf16.mxu0 0
      %358 = vmatpush1.bf16.msra.mxu0 0
      %359 = vmatprep.subr.bf16.mxu0 0
      %360 = vmatpush1.bf16.msra.mxu0 0
      %361 = vmatprep.subr.bf16.mxu0 0
      %362 = vmatpush1.bf16.msra.mxu0 0
      %363 = vmatprep.subr.bf16.mxu0 0
      %364 = vmatpush1.bf16.msra.mxu0 0
      %365 = vmatprep.subr.bf16.mxu0 0
      %366 = vmatpush1.bf16.msra.mxu0 0
      %367 = vmatprep.subr.bf16.mxu0 0
      %368 = vmatpush1.bf16.msra.mxu0 0
      %369 = vmatprep.subr.bf16.mxu0 0
      %370 = vmatpush1.bf16.msra.mxu0 0
      %371 = vmatprep.subr.bf16.mxu0 0
      %372 = vmatpush1.bf16.msra.mxu0 0
      %373 = vmatprep.subr.bf16.mxu0 0
      %374 = vmatpush1.bf16.msra.mxu0 0
      %375 = vmatprep.subr.bf16.mxu0 0
      %376 = vmatpush1.bf16.msra.mxu0 0
      %377 = vmatprep.subr.bf16.mxu0 0
      %378 = vmatpush1.bf16.msra.mxu0 0
      %379 = vmatprep.subr.bf16.mxu0 0
      %380 = vmatpush1.bf16.msra.mxu0 0
      %381 = vmatprep.subr.bf16.mxu0 0
      %382 = vmatpush1.bf16.msra.mxu0 0
      %383 = vmatprep.subr.bf16.mxu0 0
      %384 = vmatpush1.bf16.msra.mxu0 0
      %385 = vmatprep.subr.bf16.mxu0 0
      %386 = vmatpush1.bf16.msra.mxu0 0
      %387 = vmatprep.mubr.bf16.mxu0 0
      %388 = vmatmul.mubr.bf16.gmra.mrb[0].mxu0 %v350
      %v389 = vpop.f32.mrb[0].mxu0
      %v390 = vadd.f32 0.0, %v389
      %v391 = vpop.f32.mrb[0].mxu0
      %v392 = vpop.f32.mrb[0].mxu0
      %v393 = vpop.f32.mrb[0].mxu0
      %394 = vdwg.mxu0
      %v395 = vpack.c.bf16 %v390, %v390
      %v397 = vunpack.c.l.b16 %v395
      %v398 = vpack.c.b16 %v397, %v397
      %399 = vrot.lane.b32.xlu0 %v398, 8
      %v400 = vpop.permute.xlu0 %399
      %vm402 = vcmask 126016
      %403 = vst.msk [vmem:[%s152] sm:$0xf] %vm402, %v400
      %404 = vrot.lane.b32.xlu0 %v171, 112
      %v405 = vpop.permute.xlu0 %404
      %406 = vrot.lane.b32.xlu0 %v171, 80
      %v407 = vpop.permute.xlu0 %406
      %v409 = vsel %vm174, %v405, 0
      %v412 = vsel %vm174, %v407, 0
      %414 = vmatprep.subr.bf16.mxu0 0
      %415 = vmatpush1.bf16.xpose.msra.mxu0 %v412
      %416 = vmatprep.subr.bf16.mxu0 0
      %417 = vmatpush1.bf16.xpose.msra.mxu0 0
      %418 = vmatprep.subr.bf16.mxu0 0
      %419 = vmatpush1.bf16.xpose.msra.mxu0 0
      %420 = vmatprep.subr.bf16.mxu0 0
      %421 = vmatpush1.bf16.xpose.msra.mxu0 0
      %422 = vmatprep.subr.bf16.mxu0 0
      %423 = vmatpush1.bf16.xpose.msra.mxu0 0
      %424 = vmatprep.subr.bf16.mxu0 0
      %425 = vmatpush1.bf16.xpose.msra.mxu0 0
      %426 = vmatprep.subr.bf16.mxu0 0
      %427 = vmatpush1.bf16.xpose.msra.mxu0 0
      %428 = vmatprep.subr.bf16.mxu0 0
      %429 = vmatpush1.bf16.xpose.msra.mxu0 0
      %430 = vmatprep.subr.bf16.mxu0 0
      %431 = vmatpush1.bf16.xpose.msra.mxu0 0
      %432 = vmatprep.subr.bf16.mxu0 0
      %433 = vmatpush1.bf16.xpose.msra.mxu0 0
      %434 = vmatprep.subr.bf16.mxu0 0
      %435 = vmatpush1.bf16.xpose.msra.mxu0 0
      %436 = vmatprep.subr.bf16.mxu0 0
      %437 = vmatpush1.bf16.xpose.msra.mxu0 0
      %438 = vmatprep.subr.bf16.mxu0 0
      %439 = vmatpush1.bf16.xpose.msra.mxu0 0
      %440 = vmatprep.subr.bf16.mxu0 0
      %441 = vmatpush1.bf16.xpose.msra.mxu0 0
      %442 = vmatprep.subr.bf16.mxu0 0
      %443 = vmatpush1.bf16.xpose.msra.mxu0 0
      %444 = vmatprep.subr.bf16.mxu0 0
      %445 = vmatpush1.bf16.xpose.msra.mxu0 0
      %446 = vmatprep.mubr.bf16.mxu0 0
      %447 = vmatmul.mubr.bf16.gmra.mrb[0].mxu0 %v409
      %v448 = vpop.f32.mrb[0].mxu0
      %v449 = vadd.f32 %v168, %v448
      %v450 = vpop.f32.mrb[0].mxu0
      %v451 = vpop.f32.mrb[0].mxu0
      %v452 = vpop.f32.mrb[0].mxu0
      %453 = vdwg.mxu0
      %v454 = vsel %vm174, %v449, -inf
      %455 = vmax.xlane.f32.xlu0 %v454
      %v456 = vpop.xlane.xlu0 %455
      %v457 = vsub.f32 %v449, %v456
      %v458 = vmul.f32 %v457, 1.442695
      %v459 = vpow.pop %v458
      %v460 = vsel %vm174, %v459, 0.0
      %461 = vadd.xlane.f32.xlu0 %v460
      %v462 = vpop.xlane.xlu0 %461
      %v463 = vrcp.pop %v462
      %v464 = vmul.f32 %v459, %v463
      %v465 = vpack.c.bf16 %v464, %v464
      %466 = vrot.lane.b32.xlu0 %v171, 48
      %v467 = vpop.permute.xlu0 %466
      %v469 = vsel %vm174, %v465, 0
      %v472 = vsel %vm238, %v467, 0
      %474 = vmatprep.subr.bf16.mxu0 0
      %475 = vmatpush1.bf16.msra.mxu0 %v472
      %476 = vmatprep.subr.bf16.mxu0 0
      %477 = vmatpush1.bf16.msra.mxu0 0
      %478 = vmatprep.subr.bf16.mxu0 0
      %479 = vmatpush1.bf16.msra.mxu0 0
      %480 = vmatprep.subr.bf16.mxu0 0
      %481 = vmatpush1.bf16.msra.mxu0 0
      %482 = vmatprep.subr.bf16.mxu0 0
      %483 = vmatpush1.bf16.msra.mxu0 0
      %484 = vmatprep.subr.bf16.mxu0 0
      %485 = vmatpush1.bf16.msra.mxu0 0
      %486 = vmatprep.subr.bf16.mxu0 0
      %487 = vmatpush1.bf16.msra.mxu0 0
      %488 = vmatprep.subr.bf16.mxu0 0
      %489 = vmatpush1.bf16.msra.mxu0 0
      %490 = vmatprep.subr.bf16.mxu0 0
      %491 = vmatpush1.bf16.msra.mxu0 0
      %492 = vmatprep.subr.bf16.mxu0 0
      %493 = vmatpush1.bf16.msra.mxu0 0
      %494 = vmatprep.subr.bf16.mxu0 0
      %495 = vmatpush1.bf16.msra.mxu0 0
      %496 = vmatprep.subr.bf16.mxu0 0
      %497 = vmatpush1.bf16.msra.mxu0 0
      %498 = vmatprep.subr.bf16.mxu0 0
      %499 = vmatpush1.bf16.msra.mxu0 0
      %500 = vmatprep.subr.bf16.mxu0 0
      %501 = vmatpush1.bf16.msra.mxu0 0
      %502 = vmatprep.subr.bf16.mxu0 0
      %503 = vmatpush1.bf16.msra.mxu0 0
      %504 = vmatprep.subr.bf16.mxu0 0
      %505 = vmatpush1.bf16.msra.mxu0 0
      %506 = vmatprep.mubr.bf16.mxu0 0
      %507 = vmatmul.mubr.bf16.gmra.mrb[0].mxu0 %v469
      %v508 = vpop.f32.mrb[0].mxu0
      %v509 = vadd.f32 0.0, %v508
      %v510 = vpop.f32.mrb[0].mxu0
      %v511 = vpop.f32.mrb[0].mxu0
      %v512 = vpop.f32.mrb[0].mxu0
      %513 = vdwg.mxu0
      %v514 = vpack.c.bf16 %v509, %v509
      %v516 = vunpack.c.l.b16 %v514
      %v517 = vpack.c.b16 %v516, %v516
      %518 = vrot.lane.b32.xlu0 %v517, 16
      %v519 = vpop.permute.xlu0 %518
      %vm521 = vcmask 191616
      %522 = vst.msk [vmem:[%s152] sm:$0xf] %vm521, %v519
      %523 = vrot.lane.b32.xlu0 %v171, 104
      %v524 = vpop.permute.xlu0 %523
      %525 = vrot.lane.b32.xlu0 %v171, 72
      %v526 = vpop.permute.xlu0 %525
      %v528 = vsel %vm174, %v524, 0
      %v531 = vsel %vm174, %v526, 0
      %533 = vmatprep.subr.bf16.mxu0 0
      %534 = vmatpush1.bf16.xpose.msra.mxu0 %v531
      %535 = vmatprep.subr.bf16.mxu0 0
      %536 = vmatpush1.bf16.xpose.msra.mxu0 0
      %537 = vmatprep.subr.bf16.mxu0 0
      %538 = vmatpush1.bf16.xpose.msra.mxu0 0
      %539 = vmatprep.subr.bf16.mxu0 0
      %540 = vmatpush1.bf16.xpose.msra.mxu0 0
      %541 = vmatprep.subr.bf16.mxu0 0
      %542 = vmatpush1.bf16.xpose.msra.mxu0 0
      %543 = vmatprep.subr.bf16.mxu0 0
      %544 = vmatpush1.bf16.xpose.msra.mxu0 0
      %545 = vmatprep.subr.bf16.mxu0 0
      %546 = vmatpush1.bf16.xpose.msra.mxu0 0
      %547 = vmatprep.subr.bf16.mxu0 0
      %548 = vmatpush1.bf16.xpose.msra.mxu0 0
      %549 = vmatprep.subr.bf16.mxu0 0
      %550 = vmatpush1.bf16.xpose.msra.mxu0 0
      %551 = vmatprep.subr.bf16.mxu0 0
      %552 = vmatpush1.bf16.xpose.msra.mxu0 0
      %553 = vmatprep.subr.bf16.mxu0 0
      %554 = vmatpush1.bf16.xpose.msra.mxu0 0
      %555 = vmatprep.subr.bf16.mxu0 0
      %556 = vmatpush1.bf16.xpose.msra.mxu0 0
      %557 = vmatprep.subr.bf16.mxu0 0
      %558 = vmatpush1.bf16.xpose.msra.mxu0 0
      %559 = vmatprep.subr.bf16.mxu0 0
      %560 = vmatpush1.bf16.xpose.msra.mxu0 0
      %561 = vmatprep.subr.bf16.mxu0 0
      %562 = vmatpush1.bf16.xpose.msra.mxu0 0
      %563 = vmatprep.subr.bf16.mxu0 0
      %564 = vmatpush1.bf16.xpose.msra.mxu0 0
      %565 = vmatprep.mubr.bf16.mxu0 0
      %566 = vmatmul.mubr.bf16.gmra.mrb[0].mxu0 %v528
      %v567 = vpop.f32.mrb[0].mxu0
      %v568 = vadd.f32 %v168, %v567
      %v569 = vpop.f32.mrb[0].mxu0
      %v570 = vpop.f32.mrb[0].mxu0
      %v571 = vpop.f32.mrb[0].mxu0
      %572 = vdwg.mxu0
      %v573 = vsel %vm174, %v568, -inf
      %574 = vmax.xlane.f32.xlu0 %v573
      %v575 = vpop.xlane.xlu0 %574
      %v576 = vsub.f32 %v568, %v575
      %v577 = vmul.f32 %v576, 1.442695
      %v578 = vpow.pop %v577
      %v579 = vsel %vm174, %v578, 0.0
      %580 = vadd.xlane.f32.xlu0 %v579
      %v581 = vpop.xlane.xlu0 %580
      %v582 = vrcp.pop %v581
      %v583 = vmul.f32 %v578, %v582
      %v584 = vpack.c.bf16 %v583, %v583
      %585 = vrot.lane.b32.xlu0 %v171, 40
      %v586 = vpop.permute.xlu0 %585
      %v588 = vsel %vm174, %v584, 0
      %v591 = vsel %vm238, %v586, 0
      %593 = vmatprep.subr.bf16.mxu0 0
      %594 = vmatpush1.bf16.msra.mxu0 %v591
      %595 = vmatprep.subr.bf16.mxu0 0
      %596 = vmatpush1.bf16.msra.mxu0 0
      %597 = vmatprep.subr.bf16.mxu0 0
      %598 = vmatpush1.bf16.msra.mxu0 0
      %599 = vmatprep.subr.bf16.mxu0 0
      %600 = vmatpush1.bf16.msra.mxu0 0
      %601 = vmatprep.subr.bf16.mxu0 0
      %602 = vmatpush1.bf16.msra.mxu0 0
      %603 = vmatprep.subr.bf16.mxu0 0
      %604 = vmatpush1.bf16.msra.mxu0 0
      %605 = vmatprep.subr.bf16.mxu0 0
      %606 = vmatpush1.bf16.msra.mxu0 0
      %607 = vmatprep.subr.bf16.mxu0 0
      %608 = vmatpush1.bf16.msra.mxu0 0
      %609 = vmatprep.subr.bf16.mxu0 0
      %610 = vmatpush1.bf16.msra.mxu0 0
      %611 = vmatprep.subr.bf16.mxu0 0
      %612 = vmatpush1.bf16.msra.mxu0 0
      %613 = vmatprep.subr.bf16.mxu0 0
      %614 = vmatpush1.bf16.msra.mxu0 0
      %615 = vmatprep.subr.bf16.mxu0 0
      %616 = vmatpush1.bf16.msra.mxu0 0
      %617 = vmatprep.subr.bf16.mxu0 0
      %618 = vmatpush1.bf16.msra.mxu0 0
      %619 = vmatprep.subr.bf16.mxu0 0
      %620 = vmatpush1.bf16.msra.mxu0 0
      %621 = vmatprep.subr.bf16.mxu0 0
      %622 = vmatpush1.bf16.msra.mxu0 0
      %623 = vmatprep.subr.bf16.mxu0 0
      %624 = vmatpush1.bf16.msra.mxu0 0
      %625 = vmatprep.mubr.bf16.mxu0 0
      %626 = vmatmul.mubr.bf16.gmra.mrb[0].mxu0 %v588
      %v627 = vpop.f32.mrb[0].mxu0
      %v628 = vadd.f32 0.0, %v627
      %v629 = vpop.f32.mrb[0].mxu0
      %v630 = vpop.f32.mrb[0].mxu0
      %v631 = vpop.f32.mrb[0].mxu0
      %632 = vdwg.mxu0
      %v633 = vpack.c.bf16 %v628, %v628
      %v635 = vunpack.c.l.b16 %v633
      %v636 = vpack.c.b16 %v635, %v635
      %637 = vrot.lane.b32.xlu0 %v636, 24
      %v638 = vpop.permute.xlu0 %637
      %vm640 = vcmask 257216
      %641 = vst.msk [vmem:[%s152] sm:$0xf] %vm640, %v638
      %p642 = scmp.lt.s32.totalorder %s13, 1
      %s643 = scalar_select %p642, %s13, 1
      %s644 = smul.addr %s643, 4
      %s645 = scalar_lea.vmem %s2, %s644
      // Predicated region
      $region29: #{transformer_forward.46} parent=27 // pred_check
        %p646 = pneg %p83
      $region30: #{transformer_forward.46} parent=27 // pred_check_branch
        %648 = sbr.rel (%p646) target = $region32
      $region31: #{transformer_forward.46} parent=27 // pred_region
        _
      $region32: #{transformer_forward.46} parent=27 // pred_fallthru
        _
    $region28: #{transformer_forward.46} parent=5 // pred_fallthru
      _
    %p649 = scmp.le.s32.totalorder 2, %s8
    // Predicated region
    $region33: #{transformer_forward.46} parent=5 // pred_check
      %p650 = pneg %p649
    $region34: #{transformer_forward.46} parent=5 // pred_check_branch
      %652 = sbr.rel (%p650) target = $region36
    $region35: #{transformer_forward.46} parent=5 // pred_region
      %s653 = ssub.s32 %s8, 2
      // Predicated region
      $region37: #{transformer_forward.46} parent=35 // pred_check
        %p654 = pneg %p89
      $region38: #{transformer_forward.46} parent=35 // pred_check_branch
        %656 = sbr.rel (%p654) target = $region40
      $region39: #{transformer_forward.46} parent=35 // pred_region
        %p657 = scmp.lt.s32.totalorder %s14, 1
        %s658 = scalar_select %p657, %s14, 1
        %s659 = smul.addr %s658, 4
        %s660 = scalar_lea.vmem %s2, %s659
      $region40: #{transformer_forward.46} parent=35 // pred_fallthru
        _
    $region36: #{transformer_forward.46} parent=5 // pred_fallthru
      _
  $region6: #{transformer_forward.46} parent=0 // loop_footer
    %s12 = sadd.s32 1, %s8
  $region7: #{transformer_forward.46} parent=0 // loop_footer_branch
    %7 = sbr.rel target = $region3
  $region8: #{transformer_forward.46} parent=0 // loop_exit
    _

// kernel: transformer_forward.48
$region0: #{transformer_forward.48}
  #allocation0 [shape = 'u32[]', space=smem, size = 0x4, offset = 0x4, fixed_abs, tag = 'smem constant byte address 0x4 - core index']
  #allocation1 [shape = 'u32[144,128]{1,0:T(1,128)}', space=vmem, size = 0x12000, scoped, tag = 'internal scratch']
  #allocation2 [shape = 'f32[16,32]{1,0:T(8,128)}', space=vmem, size = 0x2000, scoped, tag = 'scratch operand']
  %s0 = inlined_call_operand.vmem [shape: bf16[16,32], index: 0, kind: input, shape index: {}]
  %s1 = inlined_call_operand.vmem [shape: bf16[32,32], index: 1, kind: input, shape index: {}]
  %s2 = inlined_call_operand.vmem [shape: f32[1,32], index: 2, kind: input, shape index: {}]
  %s3 = inlined_call_operand.vmem [shape: bf16[16,32], index: 3, kind: output, shape index: {}]
  %s4 = sld [smem:[#allocation0]]
  $region30: #{transformer_forward.48} parent=0
    _
  %s6 = ssub.s32 1, %s4
  %s7 = scalar_select 0, %s6, %s4
  // Predicated region
  $region2: #{transformer_forward.48} parent=0 // pred_check
    _
  $region3: #{transformer_forward.48} parent=0 // pred_check_branch
    %9 = sbr.rel (0) target = $region5
  $region4: #{transformer_forward.48} parent=0 // pred_region
    _
  $region5: #{transformer_forward.48} parent=0 // pred_fallthru
    _
  // Predicated region
  $region6: #{transformer_forward.48} parent=0 // pred_check
    _
  $region7: #{transformer_forward.48} parent=0 // pred_check_branch
    %11 = sbr.rel (0) target = $region9
  $region8: #{transformer_forward.48} parent=0 // pred_region
    _
  $region9: #{transformer_forward.48} parent=0 // pred_fallthru
    _
  // Predicated region
  $region10: #{transformer_forward.48} parent=0 // pred_check
    _
  $region11: #{transformer_forward.48} parent=0 // pred_check_branch
    %13 = sbr.rel (0) target = $region13
  $region12: #{transformer_forward.48} parent=0 // pred_region
    _
  $region13: #{transformer_forward.48} parent=0 // pred_fallthru
    _
  %p15 = scmp.eq.s32.totalorder 0, 0
  // Predicated region
  $region14: #{transformer_forward.48} parent=0 // pred_check
    %p16 = pneg %p15
  $region15: #{transformer_forward.48} parent=0 // pred_check_branch
    %18 = sbr.rel (%p16) target = $region17
  $region16: #{transformer_forward.48} parent=0 // pred_region
    %vm19 = vcmask 261120
    %20 = vst.msk [vmem:[#allocation2] sm:$0xff] %vm19, 0.0
    %21 = vst.msk [vmem:[#allocation2 + $0x8] sm:$0xff] %vm19, 0.0
  $region17: #{transformer_forward.48} parent=0 // pred_fallthru
    _
  %v22 = vld [vmem:[#allocation2] sm:$0xff]
  %v23 = vld [vmem:[#allocation2 + $0x8] sm:$0xff]
  %v24 = vld [vmem:[%s0] sm:$0xf]
  %v25 = vld [vmem:[%s0 + $0x4] sm:$0xf]
  %v26 = vld [vmem:[%s1] sm:$0xf]
  %v27 = vld [vmem:[%s1 + $0x4] sm:$0xf]
  %v28 = vld [vmem:[%s1 + $0x8] sm:$0xf]
  %v29 = vld [vmem:[%s1 + $0xc] sm:$0xf]
  %v32 = vunpack.c.l.b16 %v24
  %v33 = vunpack.c.l.b16 %v25
  %v34 = vpack.c.b16 %v33, %v32
  %v39 = vunpack.c.l.b16 %v26
  %v40 = vunpack.c.l.b16 %v27
  %v41 = vunpack.c.l.b16 %v28
  %v42 = vunpack.c.l.b16 %v29
  %v43 = vpack.c.b16 %v40, %v39
  %v44 = vpack.c.b16 %v42, %v41
  %vm47 = vcmask 261120
  %v49 = vsel %vm47, %v34, 0
  %51 = vmatprep.subr.bf16.mxu0 0
  %52 = vmatpush1.bf16.msra.mxu0 %v43
  %53 = vmatprep.subr.bf16.mxu0 0
  %54 = vmatpush1.bf16.msra.mxu0 %v44
  %55 = vmatprep.subr.bf16.mxu0 0
  %56 = vmatpush1.bf16.msra.mxu0 0
  %57 = vmatprep.subr.bf16.mxu0 0
  %58 = vmatpush1.bf16.msra.mxu0 0
  %59 = vmatprep.subr.bf16.mxu0 0
  %60 = vmatpush1.bf16.msra.mxu0 0
  %61 = vmatprep.subr.bf16.mxu0 0
  %62 = vmatpush1.bf16.msra.mxu0 0
  %63 = vmatprep.subr.bf16.mxu0 0
  %64 = vmatpush1.bf16.msra.mxu0 0
  %65 = vmatprep.subr.bf16.mxu0 0
  %66 = vmatpush1.bf16.msra.mxu0 0
  %67 = vmatprep.subr.bf16.mxu0 0
  %68 = vmatpush1.bf16.msra.mxu0 0
  %69 = vmatprep.subr.bf16.mxu0 0
  %70 = vmatpush1.bf16.msra.mxu0 0
  %71 = vmatprep.subr.bf16.mxu0 0
  %72 = vmatpush1.bf16.msra.mxu0 0
  %73 = vmatprep.subr.bf16.mxu0 0
  %74 = vmatpush1.bf16.msra.mxu0 0
  %75 = vmatprep.subr.bf16.mxu0 0
  %76 = vmatpush1.bf16.msra.mxu0 0
  %77 = vmatprep.subr.bf16.mxu0 0
  %78 = vmatpush1.bf16.msra.mxu0 0
  %79 = vmatprep.subr.bf16.mxu0 0
  %80 = vmatpush1.bf16.msra.mxu0 0
  %81 = vmatprep.subr.bf16.mxu0 0
  %82 = vmatpush1.bf16.msra.mxu0 0
  %83 = vmatprep.mubr.bf16.mxu0 0
  %84 = vmatmul.mubr.bf16.gmra.mrb[0].mxu0 %v49
  %v85 = vpop.f32.mrb[0].mxu0
  %v86 = vadd.f32 0.0, %v85
  %v87 = vpop.f32.mrb[0].mxu0
  %v88 = vpop.f32.mrb[0].mxu0
  %v89 = vadd.f32 0.0, %v88
  %v90 = vpop.f32.mrb[0].mxu0
  %91 = vdwg.mxu0
  %v92 = vadd.f32 %v22, %v86
  %v93 = vadd.f32 %v23, %v89
  %94 = vst.msk [vmem:[#allocation2] sm:$0xff] %vm47, %v92
  %95 = vst.msk [vmem:[#allocation2 + $0x8] sm:$0xff] %vm47, %v93
  // Predicated region
  $region18: #{transformer_forward.48} parent=0 // pred_check
    %p96 = pneg %p15
  $region19: #{transformer_forward.48} parent=0 // pred_check_branch
    %98 = sbr.rel (%p96) target = $region21
  $region20: #{transformer_forward.48} parent=0 // pred_region
    %v99 = vld [vmem:[#allocation2] sm:$0xff]
    %v100 = vld [vmem:[#allocation2 + $0x8] sm:$0xff]
    %v101 = vld [vmem:[%s2] sm:$0x1]
    %v103 = vlaneseq
    %v104 = vshrl.u32 %v103, 7
    %v105 = vsub.s32 0, %v104
    %v106 = vrot.slane %v101, %v105
    %v108 = vadd.f32 %v99, %v106
    %v109 = vadd.f32 %v100, %v106
    %v110 = vpack.c.bf16 %v109, %v108
    %v112 = vunpack.c.l.b16 %v110
    %v113 = vunpack.c.h.b16 %v110
    %v114 = vpack.c.b16 %v112, %v112
    %v115 = vpack.c.b16 %v113, %v113
    %vm118 = vcmask 257024
    %119 = vst.msk [vmem:[%s3] sm:$0xf] %vm118, %v114
    %120 = vst.msk [vmem:[%s3 + $0x4] sm:$0xf] %vm118, %v115
  $region21: #{transformer_forward.48} parent=0 // pred_fallthru
    _
  // Predicated region
  $region22: #{transformer_forward.48} parent=0 // pred_check
    _
  $region23: #{transformer_forward.48} parent=0 // pred_check_branch
    %122 = sbr.rel (0) target = $region25
  $region24: #{transformer_forward.48} parent=0 // pred_region
    _
  $region25: #{transformer_forward.48} parent=0 // pred_fallthru
    _
  // Predicated region
  $region26: #{transformer_forward.48} parent=0 // pred_check
    _
  $region27: #{transformer_forward.48} parent=0 // pred_check_branch
    %124 = sbr.rel (0) target = $region29
  $region28: #{transformer_forward.48} parent=0 // pred_region
    _
  $region29: #{transformer_forward.48} parent=0 // pred_fallthru
    _

// kernel: transformer_forward.64
$region0: #{transformer_forward.64}
  #allocation0 [shape = 'u32[]', space=smem, size = 0x4, offset = 0x4, fixed_abs, tag = 'smem constant byte address 0x4 - core index']
  #allocation1 [shape = 'u32[144,128]{1,0:T(1,128)}', space=vmem, size = 0x12000, scoped, tag = 'internal scratch']
  %s0 = inlined_call_operand.vmem [shape: bf16[16,32], index: 0, kind: input, shape index: {}]
  %s1 = inlined_call_operand.vmem [shape: bf16[32,64], index: 1, kind: input, shape index: {}]
  %s2 = inlined_call_operand.vmem [shape: f32[1,64], index: 2, kind: input, shape index: {}]
  %s3 = inlined_call_operand.vmem [shape: f32[16,64], index: 3, kind: output, shape index: {0}]
  %s4 = inlined_call_operand.vmem [shape: f32[16,1], index: 4, kind: output, shape index: {1}]
  %s5 = inlined_call_operand.vmem [shape: f32[16,1], index: 5, kind: output, shape index: {2}]
  %6 = xla_tuple %s3, %s4, %s5
  %s7 = sld [smem:[#allocation0]]
  $region42: #{transformer_forward.64} parent=0
    _
  %s9 = ssub.s32 1, %s7
  %s10 = scalar_select 0, %s9, %s7
  // Predicated region
  $region2: #{transformer_forward.64} parent=0 // pred_check
    _
  $region3: #{transformer_forward.64} parent=0 // pred_check_branch
    %12 = sbr.rel (0) target = $region5
  $region4: #{transformer_forward.64} parent=0 // pred_region
    _
  $region5: #{transformer_forward.64} parent=0 // pred_fallthru
    _
  // Predicated region
  $region6: #{transformer_forward.64} parent=0 // pred_check
    _
  $region7: #{transformer_forward.64} parent=0 // pred_check_branch
    %14 = sbr.rel (0) target = $region9
  $region8: #{transformer_forward.64} parent=0 // pred_region
    _
  $region9: #{transformer_forward.64} parent=0 // pred_fallthru
    _
  // Predicated region
  $region10: #{transformer_forward.64} parent=0 // pred_check
    _
  $region11: #{transformer_forward.64} parent=0 // pred_check_branch
    %16 = sbr.rel (0) target = $region13
  $region12: #{transformer_forward.64} parent=0 // pred_region
    _
  $region13: #{transformer_forward.64} parent=0 // pred_fallthru
    _
  %p18 = scmp.eq.s32.totalorder 0, 0
  // Predicated region
  $region14: #{transformer_forward.64} parent=0 // pred_check
    %p19 = pneg %p18
  $region15: #{transformer_forward.64} parent=0 // pred_check_branch
    %21 = sbr.rel (%p19) target = $region17
  $region16: #{transformer_forward.64} parent=0 // pred_region
    %vm22 = vcmask 7168
    %23 = vst.msk [vmem:[%s4] sm:$0xff] %vm22, -1e+30
    %24 = vst.msk [vmem:[%s4 + $0x8] sm:$0xff] %vm22, -1e+30
    %25 = vst.msk [vmem:[%s5] sm:$0xff] %vm22, 0.0
    %26 = vst.msk [vmem:[%s5 + $0x8] sm:$0xff] %vm22, 0.0
  $region17: #{transformer_forward.64} parent=0 // pred_fallthru
    _
  %v27 = vld [vmem:[%s0] sm:$0xf]
  %v28 = vld [vmem:[%s0 + $0x4] sm:$0xf]
  %v29 = vld [vmem:[%s1] sm:$0xf]
  %v30 = vld [vmem:[%s1 + $0x4] sm:$0xf]
  %v31 = vld [vmem:[%s1 + $0x8] sm:$0xf]
  %v32 = vld [vmem:[%s1 + $0xc] sm:$0xf]
  %v33 = vld [vmem:[%s2] sm:$0x1]
  %v35 = vlaneseq
  %v36 = vshrl.u32 %v35, 7
  %v37 = vsub.s32 0, %v36
  %v38 = vrot.slane %v33, %v37
  %v42 = vunpack.c.l.b16 %v27
  %v43 = vunpack.c.l.b16 %v28
  %v44 = vpack.c.b16 %v43, %v42
  %v49 = vunpack.c.l.b16 %v29
  %v50 = vunpack.c.l.b16 %v30
  %v51 = vunpack.c.l.b16 %v31
  %v52 = vunpack.c.l.b16 %v32
  %v53 = vpack.c.b16 %v50, %v49
  %v54 = vpack.c.b16 %v52, %v51
  %vm57 = vcmask 261120
  %v59 = vsel %vm57, %v44, 0
  %61 = vmatprep.subr.bf16.mxu0 0
  %62 = vmatpush1.bf16.msra.mxu0 %v53
  %63 = vmatprep.subr.bf16.mxu0 0
  %64 = vmatpush1.bf16.msra.mxu0 %v54
  %65 = vmatprep.subr.bf16.mxu0 0
  %66 = vmatpush1.bf16.msra.mxu0 0
  %67 = vmatprep.subr.bf16.mxu0 0
  %68 = vmatpush1.bf16.msra.mxu0 0
  %69 = vmatprep.subr.bf16.mxu0 0
  %70 = vmatpush1.bf16.msra.mxu0 0
  %71 = vmatprep.subr.bf16.mxu0 0
  %72 = vmatpush1.bf16.msra.mxu0 0
  %73 = vmatprep.subr.bf16.mxu0 0
  %74 = vmatpush1.bf16.msra.mxu0 0
  %75 = vmatprep.subr.bf16.mxu0 0
  %76 = vmatpush1.bf16.msra.mxu0 0
  %77 = vmatprep.subr.bf16.mxu0 0
  %78 = vmatpush1.bf16.msra.mxu0 0
  %79 = vmatprep.subr.bf16.mxu0 0
  %80 = vmatpush1.bf16.msra.mxu0 0
  %81 = vmatprep.subr.bf16.mxu0 0
  %82 = vmatpush1.bf16.msra.mxu0 0
  %83 = vmatprep.subr.bf16.mxu0 0
  %84 = vmatpush1.bf16.msra.mxu0 0
  %85 = vmatprep.subr.bf16.mxu0 0
  %86 = vmatpush1.bf16.msra.mxu0 0
  %87 = vmatprep.subr.bf16.mxu0 0
  %88 = vmatpush1.bf16.msra.mxu0 0
  %89 = vmatprep.subr.bf16.mxu0 0
  %90 = vmatpush1.bf16.msra.mxu0 0
  %91 = vmatprep.subr.bf16.mxu0 0
  %92 = vmatpush1.bf16.msra.mxu0 0
  %93 = vmatprep.mubr.bf16.mxu0 0
  %94 = vmatmul.mubr.bf16.gmra.mrb[0].mxu0 %v59
  %v95 = vpop.f32.mrb[0].mxu0
  %v96 = vadd.f32 %v38, %v95
  %v97 = vpop.f32.mrb[0].mxu0
  %v98 = vpop.f32.mrb[0].mxu0
  %v99 = vadd.f32 %v38, %v98
  %v100 = vpop.f32.mrb[0].mxu0
  %101 = vdwg.mxu0
  %vm102 = vcmask 523264
  %103 = vst.msk [vmem:[%s3] sm:$0xff] %vm102, %v96
  %104 = vst.msk [vmem:[%s3 + $0x8] sm:$0xff] %vm102, %v99
  %v105 = vld [vmem:[%s4] sm:$0xff]
  %v106 = vld [vmem:[%s4 + $0x8] sm:$0xff]
  %v107 = vsel %vm102, %v96, -inf
  %108 = vmax.xlane.f32.xlu0 %v107
  %v109 = vpop.xlane.xlu0 %108
  %v110 = vsel %vm102, %v99, -inf
  %111 = vmax.xlane.f32.xlu0 %v110
  %v112 = vpop.xlane.xlu0 %111
  %v113 = vmax.f32 %v105, %v109
  %v114 = vmax.f32 %v106, %v112
  %v115 = vld [vmem:[%s5] sm:$0xff]
  %v116 = vld [vmem:[%s5 + $0x8] sm:$0xff]
  %v117 = vsub.f32 %v105, %v113
  %v118 = vsub.f32 %v106, %v114
  %v119 = vmul.f32 %v117, 1.442695
  %v120 = vpow.pop %v119
  %v121 = vmul.f32 %v118, 1.442695
  %v122 = vpow.pop %v121
  %v123 = vmul.f32 %v115, %v120
  %v124 = vmul.f32 %v116, %v122
  %126 = vset.pattern.permute.xlu0 0
  %127 = vperm.xlu0 %126, %v113
  %v128 = vpop.permute.xlu0 %127
  %131 = vset.pattern.permute.xlu0 0
  %132 = vperm.xlu0 %131, %v114
  %v133 = vpop.permute.xlu0 %132
  %v135 = vsub.f32 %v96, %v128
  %v136 = vsub.f32 %v99, %v133
  %v137 = vmul.f32 %v135, 1.442695
  %v138 = vpow.pop %v137
  %v139 = vmul.f32 %v136, 1.442695
  %v140 = vpow.pop %v139
  %v141 = vsel %vm102, %v138, 0.0
  %142 = vadd.xlane.f32.xlu0 %v141
  %v143 = vpop.xlane.xlu0 %142
  %v144 = vsel %vm102, %v140, 0.0
  %145 = vadd.xlane.f32.xlu0 %v144
  %v146 = vpop.xlane.xlu0 %145
  %v147 = vadd.f32 %v123, %v143
  %v148 = vadd.f32 %v124, %v146
  %vm149 = vcmask 7168
  %150 = vst.msk [vmem:[%s5] sm:$0xff] %vm149, %v147
  %151 = vst.msk [vmem:[%s5 + $0x8] sm:$0xff] %vm149, %v148
  %152 = vst.msk [vmem:[%s4] sm:$0xff] %vm149, %v113
  %153 = vst.msk [vmem:[%s4 + $0x8] sm:$0xff] %vm149, %v114
  // Predicated region
  $region18: #{transformer_forward.64} parent=0 // pred_check
    _
  $region19: #{transformer_forward.64} parent=0 // pred_check_branch
    %155 = sbr.rel (0) target = $region21
  $region20: #{transformer_forward.64} parent=0 // pred_region
    _
  $region21: #{transformer_forward.64} parent=0 // pred_fallthru
    _
  // Predicated region
  $region22: #{transformer_forward.64} parent=0 // pred_check
    _
  $region23: #{transformer_forward.64} parent=0 // pred_check_branch
    %157 = sbr.rel (0) target = $region25
  $region24: #{transformer_forward.64} parent=0 // pred_region
    _
  $region25: #{transformer_forward.64} parent=0 // pred_fallthru
    _
  // Predicated region
  $region26: #{transformer_forward.64} parent=0 // pred_check
    _
  $region27: #{transformer_forward.64} parent=0 // pred_check_branch
    %159 = sbr.rel (0) target = $region29
  $region28: #{transformer_forward.64} parent=0 // pred_region
    _
  $region29: #{transformer_forward.64} parent=0 // pred_fallthru
    _
  // Predicated region
  $region30: #{transformer_forward.64} parent=0 // pred_check
    _
  $region31: #{transformer_forward.64} parent=0 // pred_check_branch
    %161 = sbr.rel (0) target = $region33
  $region32: #{transformer_forward.64} parent=0 // pred_region
    _
  $region33: #{transformer_forward.64} parent=0 // pred_fallthru
    _
  // Predicated region
  $region34: #{transformer_forward.64} parent=0 // pred_check
    _
  $region35: #{transformer_forward.64} parent=0 // pred_check_branch
    %163 = sbr.rel (0) target = $region37
  $region36: #{transformer_forward.64} parent=0 // pred_region
    _
  $region37: #{transformer_forward.64} parent=0 // pred_fallthru
    _
  // Predicated region
  $region38: #{transformer_forward.64} parent=0 // pred_check
    _
  $region39: #{transformer_forward.64} parent=0 // pred_check_branch
    %165 = sbr.rel (0) target = $region41
  $region40: #{transformer_forward.64} parent=0 // pred_region
    _
  $region41: #{transformer_forward.64} parent=0 // pred_fallthru
    _

// kernel: transformer_forward.50
$region0: #{transformer_forward.50}
  #allocation0 [shape = 'u32[]', space=smem, size = 0x4, offset = 0x4, fixed_abs, tag = 'smem constant byte address 0x4 - core index']
  #allocation1 [shape = 'u32[144,128]{1,0:T(1,128)}', space=vmem, size = 0x12000, scoped, tag = 'internal scratch']
  %s0 = inlined_call_operand.vmem [shape: bf16[2,8,32], index: 0, kind: input, shape index: {}]
  %s1 = inlined_call_operand.vmem [shape: bf16[2,8,64], index: 1, kind: input, shape index: {}]
  %s2 = inlined_call_operand.vmem [shape: f32[2,1,8], index: 2, kind: input, shape index: {}]
  %s3 = inlined_call_operand.vmem [shape: bf16[2,8,32], index: 3, kind: output, shape index: {}]
  %s4 = sld [smem:[#allocation0]]
  $region45: #{transformer_forward.50} parent=0
    _
  %s6 = ssub.s32 1, %s4
  %s7 = scalar_select 0, %s6, %s4
  loop: start=0, step=1, limit=4
  $region2: #{transformer_forward.50} parent=0 // loop_pre_header
    _
  $region3: #{transformer_forward.50} parent=0 // loop_header
    %s9 = sphi 0, %s13
    %p10 = scmp.ge.s32.totalorder %s9, 4
    %s19 = sphi 0, %s21
    %s22 = sphi 0, %s19
    %s23 = sphi 0, %s22
    %s39 = sphi 0, %s23
    %s45 = sphi 0, %s47
    %s48 = sphi 0, %s45
    %s49 = sphi 0, %s48
    %s65 = sphi 0, %s49
    %s71 = sphi 0, %s73
    %s74 = sphi 0, %s71
    %s75 = sphi 0, %s74
    %s91 = sphi 0, %s75
    %s97 = sphi 0, %s99
    %s100 = sphi 0, %s97
    %s101 = sphi 0, %s100
    %s117 = sphi 0, %s101
  $region4: #{transformer_forward.50} parent=0 // loop_header_branch
    %12 = sbr.rel (%p10) target = $region8
  $region5: #{transformer_forward.50} parent=0 // loop_body
    %s14 = ssub.s32 %s9, 1
    %s15 = ssub.s32 %s9, 2
    %s16 = sadd.s32 %s9, 1
    %s17 = ssub.s32 %s9, %s16
    %p18 = scmp.eq.s32.totalorder %s17, 0
    %s20 = sadd.s32 %s19, 1
    %s21 = scalar_select %p18, %s19, %s20
    %p24 = pneg %p18
    %p25 = scmp.eq.s32.totalorder %s9, 1
    %p26 = por %p24, %p25
    %p27 = scmp.ne.s32.totalorder %s19, %s22
    %p28 = scmp.eq.s32.totalorder %s9, 0
    %p29 = por %p27, %p28
    %p30 = scmp.ne.s32.totalorder %s19, %s22
    %p31 = scmp.eq.s32.totalorder %s14, 1
    %p32 = por %p30, %p31
    %p33 = scmp.ne.s32.totalorder %s22, %s23
    %p34 = scmp.eq.s32.totalorder %s14, 0
    %p35 = por %p33, %p34
    %p36 = scmp.ne.s32.totalorder %s22, %s23
    %p37 = scmp.eq.s32.totalorder %s15, 1
    %p38 = por %p36, %p37
    %p40 = scmp.ne.s32.totalorder %s23, %s39
    %p41 = scmp.eq.s32.totalorder %s15, 0
    %p42 = por %p40, %p41
    %s43 = ssub.s32 %s9, %s16
    %p44 = scmp.eq.s32.totalorder %s43, 0
    %s46 = sadd.s32 %s45, 1
    %s47 = scalar_select %p44, %s45, %s46
    %p50 = pneg %p44
    %p51 = scmp.eq.s32.totalorder %s9, 1
    %p52 = por %p50, %p51
    %p53 = scmp.ne.s32.totalorder %s45, %s48
    %p54 = scmp.eq.s32.totalorder %s9, 0
    %p55 = por %p53, %p54
    %p56 = scmp.ne.s32.totalorder %s45, %s48
    %p57 = scmp.eq.s32.totalorder %s14, 1
    %p58 = por %p56, %p57
    %p59 = scmp.ne.s32.totalorder %s48, %s49
    %p60 = scmp.eq.s32.totalorder %s14, 0
    %p61 = por %p59, %p60
    %p62 = scmp.ne.s32.totalorder %s48, %s49
    %p63 = scmp.eq.s32.totalorder %s15, 1
    %p64 = por %p62, %p63
    %p66 = scmp.ne.s32.totalorder %s49, %s65
    %p67 = scmp.eq.s32.totalorder %s15, 0
    %p68 = por %p66, %p67
    %s69 = ssub.s32 %s9, %s16
    %p70 = scmp.eq.s32.totalorder %s69, 0
    %s72 = sadd.s32 %s71, 1
    %s73 = scalar_select %p70, %s71, %s72
    %p76 = pneg %p70
    %p77 = scmp.eq.s32.totalorder %s9, 1
    %p78 = por %p76, %p77
    %p79 = scmp.ne.s32.totalorder %s71, %s74
    %p80 = scmp.eq.s32.totalorder %s9, 0
    %p81 = por %p79, %p80
    %p82 = scmp.ne.s32.totalorder %s71, %s74
    %p83 = scmp.eq.s32.totalorder %s14, 1
    %p84 = por %p82, %p83
    %p85 = scmp.ne.s32.totalorder %s74, %s75
    %p86 = scmp.eq.s32.totalorder %s14, 0
    %p87 = por %p85, %p86
    %p88 = scmp.ne.s32.totalorder %s74, %s75
    %p89 = scmp.eq.s32.totalorder %s15, 1
    %p90 = por %p88, %p89
    %p92 = scmp.ne.s32.totalorder %s75, %s91
    %p93 = scmp.eq.s32.totalorder %s15, 0
    %p94 = por %p92, %p93
    %s95 = ssub.s32 %s9, %s16
    %p96 = scmp.eq.s32.totalorder %s95, 0
    %s98 = sadd.s32 %s97, 1
    %s99 = scalar_select %p96, %s97, %s98
    %p102 = pneg %p96
    %p103 = scmp.eq.s32.totalorder %s9, 1
    %p104 = por %p102, %p103
    %p105 = scmp.ne.s32.totalorder %s97, %s100
    %p106 = scmp.eq.s32.totalorder %s9, 0
    %p107 = por %p105, %p106
    %p108 = scmp.ne.s32.totalorder %s97, %s100
    %p109 = scmp.eq.s32.totalorder %s14, 1
    %p110 = por %p108, %p109
    %p111 = scmp.ne.s32.totalorder %s100, %s101
    %p112 = scmp.eq.s32.totalorder %s14, 0
    %p113 = por %p111, %p112
    %p114 = scmp.ne.s32.totalorder %s100, %s101
    %p115 = scmp.eq.s32.totalorder %s15, 1
    %p116 = por %p114, %p115
    %p118 = scmp.ne.s32.totalorder %s101, %s117
    %p119 = scmp.eq.s32.totalorder %s15, 0
    %p120 = por %p118, %p119
    %p121 = scmp.le.s32.totalorder 1, %s9
    %p122 = scmp.lt.s32.totalorder %s9, 3
    %p123 = pnand %p121, %p122
    %p124 = pneg %p123
    // Predicated region
    $region9: #{transformer_forward.50} parent=5 // pred_check
      _
    $region10: #{transformer_forward.50} parent=5 // pred_check_branch
      %126 = sbr.rel (%p123) target = $region12
    $region11: #{transformer_forward.50} parent=5 // pred_region
      %s127 = ssub.s32 %s9, 1
    $region12: #{transformer_forward.50} parent=5 // pred_fallthru
      _
    %p128 = scmp.lt.s32.totalorder %s9, 2
    // Predicated region
    $region13: #{transformer_forward.50} parent=5 // pred_check
      %p129 = pneg %p128
    $region14: #{transformer_forward.50} parent=5 // pred_check_branch
      %131 = sbr.rel (%p129) target = $region16
    $region15: #{transformer_forward.50} parent=5 // pred_region
      // Predicated region
      $region17: #{transformer_forward.50} parent=15 // pred_check
        %p132 = pneg %p29
      $region18: #{transformer_forward.50} parent=15 // pred_check_branch
        %134 = sbr.rel (%p132) target = $region20
      $region19: #{transformer_forward.50} parent=15 // pred_region
        %p135 = scmp.lt.s32.totalorder %s9, 1
        %s136 = scalar_select %p135, %s9, 1
        %s137 = smul.addr %s136, 4
        %s138 = scalar_lea.vmem %s0, %s137
      $region20: #{transformer_forward.50} parent=15 // pred_fallthru
        _
      // Predicated region
      $region21: #{transformer_forward.50} parent=15 // pred_check
        %p139 = pneg %p55
      $region22: #{transformer_forward.50} parent=15 // pred_check_branch
        %141 = sbr.rel (%p139) target = $region24
      $region23: #{transformer_forward.50} parent=15 // pred_region
        %p142 = scmp.lt.s32.totalorder %s9, 1
        %s143 = scalar_select %p142, %s9, 1
        %s144 = smul.addr %s143, 4
        %s145 = scalar_lea.vmem %s1, %s144
      $region24: #{transformer_forward.50} parent=15 // pred_fallthru
        _
      // Predicated region
      $region25: #{transformer_forward.50} parent=15 // pred_check
        %p146 = pneg %p81
      $region26: #{transformer_forward.50} parent=15 // pred_check_branch
        %148 = sbr.rel (%p146) target = $region28
      $region27: #{transformer_forward.50} parent=15 // pred_region
        %p149 = scmp.lt.s32.totalorder %s9, 1
        %s150 = scalar_select %p149, %s9, 1
        %s151 = scalar_lea.vmem %s2, %s150
      $region28: #{transformer_forward.50} parent=15 // pred_fallthru
        _
    $region16: #{transformer_forward.50} parent=5 // pred_fallthru
      _
    %p152 = scmp.le.s32.totalorder 1, %s9
    %p153 = scmp.lt.s32.totalorder %s9, 3
    %p154 = pnand %p152, %p153
    %p155 = pneg %p154
    // Predicated region
    $region29: #{transformer_forward.50} parent=5 // pred_check
      _
    $region30: #{transformer_forward.50} parent=5 // pred_check_branch
      %157 = sbr.rel (%p154) target = $region32
    $region31: #{transformer_forward.50} parent=5 // pred_region
      %s158 = ssub.s32 %s9, 1
      %p159 = scmp.lt.s32.totalorder %s14, 1
      %s160 = scalar_select %p159, %s14, 1
      %s161 = smul.addr %s160, 4
      %s162 = scalar_lea.vmem %s0, %s161
      %p163 = pneg %p35
      %p164 = pneg %p32
      %p165 = scmp.lt.s32.totalorder %s14, 1
      %s166 = scalar_select %p165, %s14, 1
      %s167 = smul.addr %s166, 4
      %s168 = scalar_lea.vmem %s1, %s167
      %p169 = pneg %p61
      %p170 = pneg %p58
      %p171 = scmp.lt.s32.totalorder %s14, 1
      %s172 = scalar_select %p171, %s14, 1
      %s173 = scalar_lea.vmem %s2, %s172
      %p174 = pneg %p87
      %p175 = pneg %p84
      %p176 = pneg %p113
      %p177 = pneg %p110
      %p178 = scmp.lt.s32.totalorder %s14, 1
      %s179 = scalar_select %p178, %s14, 1
      %s180 = smul.addr %s179, 4
      %s181 = scalar_lea.vmem %s3, %s180
      %p182 = scmp.lt.s32.totalorder %s14, 1
      %s183 = scalar_select %p182, %s14, 1
      %s184 = smul.addr %s183, 4
      %s185 = scalar_lea.vmem %s0, %s184
      %p186 = scmp.lt.s32.totalorder %s14, 1
      %s187 = scalar_select %p186, %s14, 1
      %s188 = smul.addr %s187, 4
      %s189 = scalar_lea.vmem %s1, %s188
      %p190 = scmp.lt.s32.totalorder %s14, 1
      %s191 = scalar_select %p190, %s14, 1
      %s192 = scalar_lea.vmem %s2, %s191
      %p193 = scmp.lt.s32.totalorder %s14, 1
      %s194 = scalar_select %p193, %s14, 1
      %s195 = smul.addr %s194, 4
      %s196 = scalar_lea.vmem %s3, %s195
      %v198 = vld [vmem:[%s189] sm:$0xf]
      %v199 = vld [vmem:[%s192] sm:$0x1]
      %v200 = vld [vmem:[%s185] sm:$0xf]
      %v202 = vlaneseq
      %v203 = vshrl.u32 %v202, 7
      %v204 = vsub.s32 0, %v203
      %v205 = vrot.slane %v199, %v204
      %vm207 = vcmask 64512
      %v209 = vsel %vm207, %v200, 0
      %v212 = vsel %vm207, %v198, 0
      %214 = vmatprep.subr.bf16.mxu0 0
      %215 = vmatpush1.bf16.xpose.msra.mxu0 %v212
      %216 = vmatprep.subr.bf16.mxu0 0
      %217 = vmatpush1.bf16.xpose.msra.mxu0 0
      %218 = vmatprep.subr.bf16.mxu0 0
      %219 = vmatpush1.bf16.xpose.msra.mxu0 0
      %220 = vmatprep.subr.bf16.mxu0 0
      %221 = vmatpush1.bf16.xpose.msra.mxu0 0
      %222 = vmatprep.subr.bf16.mxu0 0
      %223 = vmatpush1.bf16.xpose.msra.mxu0 0
      %224 = vmatprep.subr.bf16.mxu0 0
      %225 = vmatpush1.bf16.xpose.msra.mxu0 0
      %226 = vmatprep.subr.bf16.mxu0 0
      %227 = vmatpush1.bf16.xpose.msra.mxu0 0
      %228 = vmatprep.subr.bf16.mxu0 0
      %229 = vmatpush1.bf16.xpose.msra.mxu0 0
      %230 = vmatprep.subr.bf16.mxu0 0
      %231 = vmatpush1.bf16.xpose.msra.mxu0 0
      %232 = vmatprep.subr.bf16.mxu0 0
      %233 = vmatpush1.bf16.xpose.msra.mxu0 0
      %234 = vmatprep.subr.bf16.mxu0 0
      %235 = vmatpush1.bf16.xpose.msra.mxu0 0
      %236 = vmatprep.subr.bf16.mxu0 0
      %237 = vmatpush1.bf16.xpose.msra.mxu0 0
      %238 = vmatprep.subr.bf16.mxu0 0
      %239 = vmatpush1.bf16.xpose.msra.mxu0 0
      %240 = vmatprep.subr.bf16.mxu0 0
      %241 = vmatpush1.bf16.xpose.msra.mxu0 0
      %242 = vmatprep.subr.bf16.mxu0 0
      %243 = vmatpush1.bf16.xpose.msra.mxu0 0
      %244 = vmatprep.subr.bf16.mxu0 0
      %245 = vmatpush1.bf16.xpose.msra.mxu0 0
      %246 = vmatprep.mubr.bf16.mxu0 0
      %247 = vmatmul.mubr.bf16.gmra.mrb[0].mxu0 %v209
      %v248 = vpop.f32.mrb[0].mxu0
      %v249 = vadd.f32 %v205, %v248
      %v250 = vpop.f32.mrb[0].mxu0
      %v251 = vpop.f32.mrb[0].mxu0
      %v252 = vpop.f32.mrb[0].mxu0
      %253 = vdwg.mxu0
      %v254 = vsel %vm207, %v249, -inf
      %255 = vmax.xlane.f32.xlu0 %v254
      %v256 = vpop.xlane.xlu0 %255
      %v257 = vsub.f32 %v249, %v256
      %v258 = vmul.f32 %v257, 1.442695
      %v259 = vpow.pop %v258
      %v260 = vsel %vm207, %v259, 0.0
      %261 = vadd.xlane.f32.xlu0 %v260
      %v262 = vpop.xlane.xlu0 %261
      %v263 = vrcp.pop %v262
      %v264 = vmul.f32 %v259, %v263
      %v265 = vpack.c.bf16 %v264, %v264
      %v267 = vunpack.c.l.b16 %v198
      %v268 = vpack.c.b16 %v267, %v267
      %269 = vrot.lane.b32.xlu0 %v268, 96
      %v270 = vpop.permute.xlu0 %269
      %v272 = vsel %vm207, %v265, 0
      %vm274 = vcmask 1043456
      %v276 = vsel %vm274, %v270, 0
      %278 = vmatprep.subr.bf16.mxu0 0
      %279 = vmatpush1.bf16.msra.mxu0 %v276
      %280 = vmatprep.subr.bf16.mxu0 0
      %281 = vmatpush1.bf16.msra.mxu0 0
      %282 = vmatprep.subr.bf16.mxu0 0
      %283 = vmatpush1.bf16.msra.mxu0 0
      %284 = vmatprep.subr.bf16.mxu0 0
      %285 = vmatpush1.bf16.msra.mxu0 0
      %286 = vmatprep.subr.bf16.mxu0 0
      %287 = vmatpush1.bf16.msra.mxu0 0
      %288 = vmatprep.subr.bf16.mxu0 0
      %289 = vmatpush1.bf16.msra.mxu0 0
      %290 = vmatprep.subr.bf16.mxu0 0
      %291 = vmatpush1.bf16.msra.mxu0 0
      %292 = vmatprep.subr.bf16.mxu0 0
      %293 = vmatpush1.bf16.msra.mxu0 0
      %294 = vmatprep.subr.bf16.mxu0 0
      %295 = vmatpush1.bf16.msra.mxu0 0
      %296 = vmatprep.subr.bf16.mxu0 0
      %297 = vmatpush1.bf16.msra.mxu0 0
      %298 = vmatprep.subr.bf16.mxu0 0
      %299 = vmatpush1.bf16.msra.mxu0 0
      %300 = vmatprep.subr.bf16.mxu0 0
      %301 = vmatpush1.bf16.msra.mxu0 0
      %302 = vmatprep.subr.bf16.mxu0 0
      %303 = vmatpush1.bf16.msra.mxu0 0
      %304 = vmatprep.subr.bf16.mxu0 0
      %305 = vmatpush1.bf16.msra.mxu0 0
      %306 = vmatprep.subr.bf16.mxu0 0
      %307 = vmatpush1.bf16.msra.mxu0 0
      %308 = vmatprep.subr.bf16.mxu0 0
      %309 = vmatpush1.bf16.msra.mxu0 0
      %310 = vmatprep.mubr.bf16.mxu0 0
      %311 = vmatmul.mubr.bf16.gmra.mrb[0].mxu0 %v272
      %v312 = vpop.f32.mrb[0].mxu0
      %v313 = vadd.f32 0.0, %v312
      %v314 = vpop.f32.mrb[0].mxu0
      %v315 = vpop.f32.mrb[0].mxu0
      %v316 = vpop.f32.mrb[0].mxu0
      %317 = vdwg.mxu0
      %v318 = vpack.c.bf16 %v313, %v313
      %vm319 = vcmask 60416
      %320 = vst.msk [vmem:[%s196] sm:$0xf] %vm319, %v318
      %v322 = vunpack.c.l.b16 %v200
      %v323 = vpack.c.b16 %v322, %v322
      %324 = vrot.lane.b32.xlu0 %v323, 120
      %v325 = vpop.permute.xlu0 %324
      %326 = vrot.lane.b32.xlu0 %v268, 120
      %v327 = vpop.permute.xlu0 %326
      %v329 = vsel %vm207, %v325, 0
      %v332 = vsel %vm207, %v327, 0
      %334 = vmatprep.subr.bf16.mxu0 0
      %335 = vmatpush1.bf16.xpose.msra.mxu0 %v332
      %336 = vmatprep.subr.bf16.mxu0 0
      %337 = vmatpush1.bf16.xpose.msra.mxu0 0
      %338 = vmatprep.subr.bf16.mxu0 0
      %339 = vmatpush1.bf16.xpose.msra.mxu0 0
      %340 = vmatprep.subr.bf16.mxu0 0
      %341 = vmatpush1.bf16.xpose.msra.mxu0 0
      %342 = vmatprep.subr.bf16.mxu0 0
      %343 = vmatpush1.bf16.xpose.msra.mxu0 0
      %344 = vmatprep.subr.bf16.mxu0 0
      %345 = vmatpush1.bf16.xpose.msra.mxu0 0
      %346 = vmatprep.subr.bf16.mxu0 0
      %347 = vmatpush1.bf16.xpose.msra.mxu0 0
      %348 = vmatprep.subr.bf16.mxu0 0
      %349 = vmatpush1.bf16.xpose.msra.mxu0 0
      %350 = vmatprep.subr.bf16.mxu0 0
      %351 = vmatpush1.bf16.xpose.msra.mxu0 0
      %352 = vmatprep.subr.bf16.mxu0 0
      %353 = vmatpush1.bf16.xpose.msra.mxu0 0
      %354 = vmatprep.subr.bf16.mxu0 0
      %355 = vmatpush1.bf16.xpose.msra.mxu0 0
      %356 = vmatprep.subr.bf16.mxu0 0
      %357 = vmatpush1.bf16.xpose.msra.mxu0 0
      %358 = vmatprep.subr.bf16.mxu0 0
      %359 = vmatpush1.bf16.xpose.msra.mxu0 0
      %360 = vmatprep.subr.bf16.mxu0 0
      %361 = vmatpush1.bf16.xpose.msra.mxu0 0
      %362 = vmatprep.subr.bf16.mxu0 0
      %363 = vmatpush1.bf16.xpose.msra.mxu0 0
      %364 = vmatprep.subr.bf16.mxu0 0
      %365 = vmatpush1.bf16.xpose.msra.mxu0 0
      %366 = vmatprep.mubr.bf16.mxu0 0
      %367 = vmatmul.mubr.bf16.gmra.mrb[0].mxu0 %v329
      %v368 = vpop.f32.mrb[0].mxu0
      %v369 = vadd.f32 %v205, %v368
      %v370 = vpop.f32.mrb[0].mxu0
      %v371 = vpop.f32.mrb[0].mxu0
      %v372 = vpop.f32.mrb[0].mxu0
      %373 = vdwg.mxu0
      %v374 = vsel %vm207, %v369, -inf
      %375 = vmax.xlane.f32.xlu0 %v374
      %v376 = vpop.xlane.xlu0 %375
      %v377 = vsub.f32 %v369, %v376
      %v378 = vmul.f32 %v377, 1.442695
      %v379 = vpow.pop %v378
      %v380 = vsel %vm207, %v379, 0.0
      %381 = vadd.xlane.f32.xlu0 %v380
      %v382 = vpop.xlane.xlu0 %381
      %v383 = vrcp.pop %v382
      %v384 = vmul.f32 %v379, %v383
      %v385 = vpack.c.bf16 %v384, %v384
      %386 = vrot.lane.b32.xlu0 %v268, 88
      %v387 = vpop.permute.xlu0 %386
      %v389 = vsel %vm207, %v385, 0
      %v392 = vsel %vm274, %v387, 0
      %394 = vmatprep.subr.bf16.mxu0 0
      %395 = vmatpush1.bf16.msra.mxu0 %v392
      %396 = vmatprep.subr.bf16.mxu0 0
      %397 = vmatpush1.bf16.msra.mxu0 0
      %398 = vmatprep.subr.bf16.mxu0 0
      %399 = vmatpush1.bf16.msra.mxu0 0
      %400 = vmatprep.subr.bf16.mxu0 0
      %401 = vmatpush1.bf16.msra.mxu0 0
      %402 = vmatprep.subr.bf16.mxu0 0
      %403 = vmatpush1.bf16.msra.mxu0 0
      %404 = vmatprep.subr.bf16.mxu0 0
      %405 = vmatpush1.bf16.msra.mxu0 0
      %406 = vmatprep.subr.bf16.mxu0 0
      %407 = vmatpush1.bf16.msra.mxu0 0
      %408 = vmatprep.subr.bf16.mxu0 0
      %409 = vmatpush1.bf16.msra.mxu0 0
      %410 = vmatprep.subr.bf16.mxu0 0
      %411 = vmatpush1.bf16.msra.mxu0 0
      %412 = vmatprep.subr.bf16.mxu0 0
      %413 = vmatpush1.bf16.msra.mxu0 0
      %414 = vmatprep.subr.bf16.mxu0 0
      %415 = vmatpush1.bf16.msra.mxu0 0
      %416 = vmatprep.subr.bf16.mxu0 0
      %417 = vmatpush1.bf16.msra.mxu0 0
      %418 = vmatprep.subr.bf16.mxu0 0
      %419 = vmatpush1.bf16.msra.mxu0 0
      %420 = vmatprep.subr.bf16.mxu0 0
      %421 = vmatpush1.bf16.msra.mxu0 0
      %422 = vmatprep.subr.bf16.mxu0 0
      %423 = vmatpush1.bf16.msra.mxu0 0
      %424 = vmatprep.subr.bf16.mxu0 0
      %425 = vmatpush1.bf16.msra.mxu0 0
      %426 = vmatprep.mubr.bf16.mxu0 0
      %427 = vmatmul.mubr.bf16.gmra.mrb[0].mxu0 %v389
      %v428 = vpop.f32.mrb[0].mxu0
      %v429 = vadd.f32 0.0, %v428
      %v430 = vpop.f32.mrb[0].mxu0
      %v431 = vpop.f32.mrb[0].mxu0
      %v432 = vpop.f32.mrb[0].mxu0
      %433 = vdwg.mxu0
      %v434 = vpack.c.bf16 %v429, %v429
      %v436 = vunpack.c.l.b16 %v434
      %v437 = vpack.c.b16 %v436, %v436
      %438 = vrot.lane.b32.xlu0 %v437, 8
      %v439 = vpop.permute.xlu0 %438
      %vm441 = vcmask 126016
      %442 = vst.msk [vmem:[%s196] sm:$0xf] %vm441, %v439
      %443 = vrot.lane.b32.xlu0 %v323, 112
      %v444 = vpop.permute.xlu0 %443
      %445 = vrot.lane.b32.xlu0 %v268, 112
      %v446 = vpop.permute.xlu0 %445
      %v448 = vsel %vm207, %v444, 0
      %v451 = vsel %vm207, %v446, 0
      %453 = vmatprep.subr.bf16.mxu0 0
      %454 = vmatpush1.bf16.xpose.msra.mxu0 %v451
      %455 = vmatprep.subr.bf16.mxu0 0
      %456 = vmatpush1.bf16.xpose.msra.mxu0 0
      %457 = vmatprep.subr.bf16.mxu0 0
      %458 = vmatpush1.bf16.xpose.msra.mxu0 0
      %459 = vmatprep.subr.bf16.mxu0 0
      %460 = vmatpush1.bf16.xpose.msra.mxu0 0
      %461 = vmatprep.subr.bf16.mxu0 0
      %462 = vmatpush1.bf16.xpose.msra.mxu0 0
      %463 = vmatprep.subr.bf16.mxu0 0
      %464 = vmatpush1.bf16.xpose.msra.mxu0 0
      %465 = vmatprep.subr.bf16.mxu0 0
      %466 = vmatpush1.bf16.xpose.msra.mxu0 0
      %467 = vmatprep.subr.bf16.mxu0 0
      %468 = vmatpush1.bf16.xpose.msra.mxu0 0
      %469 = vmatprep.subr.bf16.mxu0 0
      %470 = vmatpush1.bf16.xpose.msra.mxu0 0
      %471 = vmatprep.subr.bf16.mxu0 0
      %472 = vmatpush1.bf16.xpose.msra.mxu0 0
      %473 = vmatprep.subr.bf16.mxu0 0
      %474 = vmatpush1.bf16.xpose.msra.mxu0 0
      %475 = vmatprep.subr.bf16.mxu0 0
      %476 = vmatpush1.bf16.xpose.msra.mxu0 0
      %477 = vmatprep.subr.bf16.mxu0 0
      %478 = vmatpush1.bf16.xpose.msra.mxu0 0
      %479 = vmatprep.subr.bf16.mxu0 0
      %480 = vmatpush1.bf16.xpose.msra.mxu0 0
      %481 = vmatprep.subr.bf16.mxu0 0
      %482 = vmatpush1.bf16.xpose.msra.mxu0 0
      %483 = vmatprep.subr.bf16.mxu0 0
      %484 = vmatpush1.bf16.xpose.msra.mxu0 0
      %485 = vmatprep.mubr.bf16.mxu0 0
      %486 = vmatmul.mubr.bf16.gmra.mrb[0].mxu0 %v448
      %v487 = vpop.f32.mrb[0].mxu0
      %v488 = vadd.f32 %v205, %v487
      %v489 = vpop.f32.mrb[0].mxu0
      %v490 = vpop.f32.mrb[0].mxu0
      %v491 = vpop.f32.mrb[0].mxu0
      %492 = vdwg.mxu0
      %v493 = vsel %vm207, %v488, -inf
      %494 = vmax.xlane.f32.xlu0 %v493
      %v495 = vpop.xlane.xlu0 %494
      %v496 = vsub.f32 %v488, %v495
      %v497 = vmul.f32 %v496, 1.442695
      %v498 = vpow.pop %v497
      %v499 = vsel %vm207, %v498, 0.0
      %500 = vadd.xlane.f32.xlu0 %v499
      %v501 = vpop.xlane.xlu0 %500
      %v502 = vrcp.pop %v501
      %v503 = vmul.f32 %v498, %v502
      %v504 = vpack.c.bf16 %v503, %v503
      %505 = vrot.lane.b32.xlu0 %v268, 80
      %v506 = vpop.permute.xlu0 %505
      %v508 = vsel %vm207, %v504, 0
      %v511 = vsel %vm274, %v506, 0
      %513 = vmatprep.subr.bf16.mxu0 0
      %514 = vmatpush1.bf16.msra.mxu0 %v511
      %515 = vmatprep.subr.bf16.mxu0 0
      %516 = vmatpush1.bf16.msra.mxu0 0
      %517 = vmatprep.subr.bf16.mxu0 0
      %518 = vmatpush1.bf16.msra.mxu0 0
      %519 = vmatprep.subr.bf16.mxu0 0
      %520 = vmatpush1.bf16.msra.mxu0 0
      %521 = vmatprep.subr.bf16.mxu0 0
      %522 = vmatpush1.bf16.msra.mxu0 0
      %523 = vmatprep.subr.bf16.mxu0 0
      %524 = vmatpush1.bf16.msra.mxu0 0
      %525 = vmatprep.subr.bf16.mxu0 0
      %526 = vmatpush1.bf16.msra.mxu0 0
      %527 = vmatprep.subr.bf16.mxu0 0
      %528 = vmatpush1.bf16.msra.mxu0 0
      %529 = vmatprep.subr.bf16.mxu0 0
      %530 = vmatpush1.bf16.msra.mxu0 0
      %531 = vmatprep.subr.bf16.mxu0 0
      %532 = vmatpush1.bf16.msra.mxu0 0
      %533 = vmatprep.subr.bf16.mxu0 0
      %534 = vmatpush1.bf16.msra.mxu0 0
      %535 = vmatprep.subr.bf16.mxu0 0
      %536 = vmatpush1.bf16.msra.mxu0 0
      %537 = vmatprep.subr.bf16.mxu0 0
      %538 = vmatpush1.bf16.msra.mxu0 0
      %539 = vmatprep.subr.bf16.mxu0 0
      %540 = vmatpush1.bf16.msra.mxu0 0
      %541 = vmatprep.subr.bf16.mxu0 0
      %542 = vmatpush1.bf16.msra.mxu0 0
      %543 = vmatprep.subr.bf16.mxu0 0
      %544 = vmatpush1.bf16.msra.mxu0 0
      %545 = vmatprep.mubr.bf16.mxu0 0
      %546 = vmatmul.mubr.bf16.gmra.mrb[0].mxu0 %v508
      %v547 = vpop.f32.mrb[0].mxu0
      %v548 = vadd.f32 0.0, %v547
      %v549 = vpop.f32.mrb[0].mxu0
      %v550 = vpop.f32.mrb[0].mxu0
      %v551 = vpop.f32.mrb[0].mxu0
      %552 = vdwg.mxu0
      %v553 = vpack.c.bf16 %v548, %v548
      %v555 = vunpack.c.l.b16 %v553
      %v556 = vpack.c.b16 %v555, %v555
      %557 = vrot.lane.b32.xlu0 %v556, 16
      %v558 = vpop.permute.xlu0 %557
      %vm560 = vcmask 191616
      %561 = vst.msk [vmem:[%s196] sm:$0xf] %vm560, %v558
      %562 = vrot.lane.b32.xlu0 %v323, 104
      %v563 = vpop.permute.xlu0 %562
      %564 = vrot.lane.b32.xlu0 %v268, 104
      %v565 = vpop.permute.xlu0 %564
      %v567 = vsel %vm207, %v563, 0
      %v570 = vsel %vm207, %v565, 0
      %572 = vmatprep.subr.bf16.mxu0 0
      %573 = vmatpush1.bf16.xpose.msra.mxu0 %v570
      %574 = vmatprep.subr.bf16.mxu0 0
      %575 = vmatpush1.bf16.xpose.msra.mxu0 0
      %576 = vmatprep.subr.bf16.mxu0 0
      %577 = vmatpush1.bf16.xpose.msra.mxu0 0
      %578 = vmatprep.subr.bf16.mxu0 0
      %579 = vmatpush1.bf16.xpose.msra.mxu0 0
      %580 = vmatprep.subr.bf16.mxu0 0
      %581 = vmatpush1.bf16.xpose.msra.mxu0 0
      %582 = vmatprep.subr.bf16.mxu0 0
      %583 = vmatpush1.bf16.xpose.msra.mxu0 0
      %584 = vmatprep.subr.bf16.mxu0 0
      %585 = vmatpush1.bf16.xpose.msra.mxu0 0
      %586 = vmatprep.subr.bf16.mxu0 0
      %587 = vmatpush1.bf16.xpose.msra.mxu0 0
      %588 = vmatprep.subr.bf16.mxu0 0
      %589 = vmatpush1.bf16.xpose.msra.mxu0 0
      %590 = vmatprep.subr.bf16.mxu0 0
      %591 = vmatpush1.bf16.xpose.msra.mxu0 0
      %592 = vmatprep.subr.bf16.mxu0 0
      %593 = vmatpush1.bf16.xpose.msra.mxu0 0
      %594 = vmatprep.subr.bf16.mxu0 0
      %595 = vmatpush1.bf16.xpose.msra.mxu0 0
      %596 = vmatprep.subr.bf16.mxu0 0
      %597 = vmatpush1.bf16.xpose.msra.mxu0 0
      %598 = vmatprep.subr.bf16.mxu0 0
      %599 = vmatpush1.bf16.xpose.msra.mxu0 0
      %600 = vmatprep.subr.bf16.mxu0 0
      %601 = vmatpush1.bf16.xpose.msra.mxu0 0
      %602 = vmatprep.subr.bf16.mxu0 0
      %603 = vmatpush1.bf16.xpose.msra.mxu0 0
      %604 = vmatprep.mubr.bf16.mxu0 0
      %605 = vmatmul.mubr.bf16.gmra.mrb[0].mxu0 %v567
      %v606 = vpop.f32.mrb[0].mxu0
      %v607 = vadd.f32 %v205, %v606
      %v608 = vpop.f32.mrb[0].mxu0
      %v609 = vpop.f32.mrb[0].mxu0
      %v610 = vpop.f32.mrb[0].mxu0
      %611 = vdwg.mxu0
      %v612 = vsel %vm207, %v607, -inf
      %613 = vmax.xlane.f32.xlu0 %v612
      %v614 = vpop.xlane.xlu0 %613
      %v615 = vsub.f32 %v607, %v614
      %v616 = vmul.f32 %v615, 1.442695
      %v617 = vpow.pop %v616
      %v618 = vsel %vm207, %v617, 0.0
      %619 = vadd.xlane.f32.xlu0 %v618
      %v620 = vpop.xlane.xlu0 %619
      %v621 = vrcp.pop %v620
      %v622 = vmul.f32 %v617, %v621
      %v623 = vpack.c.bf16 %v622, %v622
      %624 = vrot.lane.b32.xlu0 %v268, 72
      %v625 = vpop.permute.xlu0 %624
      %v627 = vsel %vm207, %v623, 0
      %v630 = vsel %vm274, %v625, 0
      %632 = vmatprep.subr.bf16.mxu0 0
      %633 = vmatpush1.bf16.msra.mxu0 %v630
      %634 = vmatprep.subr.bf16.mxu0 0
      %635 = vmatpush1.bf16.msra.mxu0 0
      %636 = vmatprep.subr.bf16.mxu0 0
      %637 = vmatpush1.bf16.msra.mxu0 0
      %638 = vmatprep.subr.bf16.mxu0 0
      %639 = vmatpush1.bf16.msra.mxu0 0
      %640 = vmatprep.subr.bf16.mxu0 0
      %641 = vmatpush1.bf16.msra.mxu0 0
      %642 = vmatprep.subr.bf16.mxu0 0
      %643 = vmatpush1.bf16.msra.mxu0 0
      %644 = vmatprep.subr.bf16.mxu0 0
      %645 = vmatpush1.bf16.msra.mxu0 0
      %646 = vmatprep.subr.bf16.mxu0 0
      %647 = vmatpush1.bf16.msra.mxu0 0
      %648 = vmatprep.subr.bf16.mxu0 0
      %649 = vmatpush1.bf16.msra.mxu0 0
      %650 = vmatprep.subr.bf16.mxu0 0
      %651 = vmatpush1.bf16.msra.mxu0 0
      %652 = vmatprep.subr.bf16.mxu0 0
      %653 = vmatpush1.bf16.msra.mxu0 0
      %654 = vmatprep.subr.bf16.mxu0 0
      %655 = vmatpush1.bf16.msra.mxu0 0
      %656 = vmatprep.subr.bf16.mxu0 0
      %657 = vmatpush1.bf16.msra.mxu0 0
      %658 = vmatprep.subr.bf16.mxu0 0
      %659 = vmatpush1.bf16.msra.mxu0 0
      %660 = vmatprep.subr.bf16.mxu0 0
      %661 = vmatpush1.bf16.msra.mxu0 0
      %662 = vmatprep.subr.bf16.mxu0 0
      %663 = vmatpush1.bf16.msra.mxu0 0
      %664 = vmatprep.mubr.bf16.mxu0 0
      %665 = vmatmul.mubr.bf16.gmra.mrb[0].mxu0 %v627
      %v666 = vpop.f32.mrb[0].mxu0
      %v667 = vadd.f32 0.0, %v666
      %v668 = vpop.f32.mrb[0].mxu0
      %v669 = vpop.f32.mrb[0].mxu0
      %v670 = vpop.f32.mrb[0].mxu0
      %671 = vdwg.mxu0
      %v672 = vpack.c.bf16 %v667, %v667
      %v674 = vunpack.c.l.b16 %v672
      %v675 = vpack.c.b16 %v674, %v674
      %676 = vrot.lane.b32.xlu0 %v675, 24
      %v677 = vpop.permute.xlu0 %676
      %vm679 = vcmask 257216
      %680 = vst.msk [vmem:[%s196] sm:$0xf] %vm679, %v677
      %p681 = scmp.lt.s32.totalorder %s14, 1
      %s682 = scalar_select %p681, %s14, 1
      %s683 = smul.addr %s682, 4
      %s684 = scalar_lea.vmem %s3, %s683
      // Predicated region
      $region33: #{transformer_forward.50} parent=31 // pred_check
        %p685 = pneg %p110
      $region34: #{transformer_forward.50} parent=31 // pred_check_branch
        %687 = sbr.rel (%p685) target = $region36
      $region35: #{transformer_forward.50} parent=31 // pred_region
        _
      $region36: #{transformer_forward.50} parent=31 // pred_fallthru
        _
    $region32: #{transformer_forward.50} parent=5 // pred_fallthru
      _
    %p688 = scmp.le.s32.totalorder 2, %s9
    // Predicated region
    $region37: #{transformer_forward.50} parent=5 // pred_check
      %p689 = pneg %p688
    $region38: #{transformer_forward.50} parent=5 // pred_check_branch
      %691 = sbr.rel (%p689) target = $region40
    $region39: #{transformer_forward.50} parent=5 // pred_region
      %s692 = ssub.s32 %s9, 2
      // Predicated region
      $region41: #{transformer_forward.50} parent=39 // pred_check
        %p693 = pneg %p116
      $region42: #{transformer_forward.50} parent=39 // pred_check_branch
        %695 = sbr.rel (%p693) target = $region44
      $region43: #{transformer_forward.50} parent=39 // pred_region
        %p696 = scmp.lt.s32.totalorder %s15, 1
        %s697 = scalar_select %p696, %s15, 1
        %s698 = smul.addr %s697, 4
        %s699 = scalar_lea.vmem %s3, %s698
      $region44: #{transformer_forward.50} parent=39 // pred_fallthru
        _
    $region40: #{transformer_forward.50} parent=5 // pred_fallthru
      _
  $region6: #{transformer_forward.50} parent=0 // loop_footer
    %s13 = sadd.s32 1, %s9
  $region7: #{transformer_forward.50} parent=0 // loop_footer_branch
    %8 = sbr.rel target = $region3
  $region8: #{transformer_forward.50} parent=0 // loop_exit
    _

// kernel: transformer_forward.65
$region0: #{transformer_forward.65}
  #allocation0 [shape = 'u32[]', space=smem, size = 0x4, offset = 0x4, fixed_abs, tag = 'smem constant byte address 0x4 - core index']
  #allocation1 [shape = 'u32[144,128]{1,0:T(1,128)}', space=vmem, size = 0x12000, scoped, tag = 'internal scratch']
  %s0 = inlined_call_operand.vmem [shape: f32[16,64], index: 0, kind: input, shape index: {}]
  %s1 = inlined_call_operand.vmem [shape: f32[16,1], index: 1, kind: input, shape index: {}]
  %s2 = inlined_call_operand.vmem [shape: f32[16,1], index: 2, kind: input, shape index: {}]
  %s3 = inlined_call_operand.vmem [shape: f32[16,64], index: 3, kind: output, shape index: {}]
  %s4 = sld [smem:[#allocation0]]
  $region22: #{transformer_forward.65} parent=0
    _
  %s6 = ssub.s32 1, %s4
  %s7 = scalar_select 0, %s6, %s4
  // Predicated region
  $region2: #{transformer_forward.65} parent=0 // pred_check
    _
  $region3: #{transformer_forward.65} parent=0 // pred_check_branch
    %9 = sbr.rel (0) target = $region5
  $region4: #{transformer_forward.65} parent=0 // pred_region
    _
  $region5: #{transformer_forward.65} parent=0 // pred_fallthru
    _
  // Predicated region
  $region6: #{transformer_forward.65} parent=0 // pred_check
    _
  $region7: #{transformer_forward.65} parent=0 // pred_check_branch
    %11 = sbr.rel (0) target = $region9
  $region8: #{transformer_forward.65} parent=0 // pred_region
    _
  $region9: #{transformer_forward.65} parent=0 // pred_fallthru
    _
  // Predicated region
  $region10: #{transformer_forward.65} parent=0 // pred_check
    _
  $region11: #{transformer_forward.65} parent=0 // pred_check_branch
    %13 = sbr.rel (0) target = $region13
  $region12: #{transformer_forward.65} parent=0 // pred_region
    _
  $region13: #{transformer_forward.65} parent=0 // pred_fallthru
    _
  %v14 = vld [vmem:[%s0] sm:$0xff]
  %v15 = vld [vmem:[%s0 + $0x8] sm:$0xff]
  %v16 = vld [vmem:[%s1] sm:$0xff]
  %v17 = vld [vmem:[%s1 + $0x8] sm:$0xff]
  %v18 = vld [vmem:[%s2] sm:$0xff]
  %v19 = vld [vmem:[%s2 + $0x8] sm:$0xff]
  %v20 = vlog2.pop %v18
  %v21 = vmul.f32 %v20, 0.6931472
  %v22 = vlog2.pop %v19
  %v23 = vmul.f32 %v22, 0.6931472
  %v24 = vadd.f32 %v16, %v21
  %v25 = vadd.f32 %v17, %v23
  %27 = vset.pattern.permute.xlu0 0
  %28 = vperm.xlu0 %27, %v24
  %v29 = vpop.permute.xlu0 %28
  %32 = vset.pattern.permute.xlu0 0
  %33 = vperm.xlu0 %32, %v25
  %v34 = vpop.permute.xlu0 %33
  %v36 = vsub.f32 %v14, %v29
  %v37 = vsub.f32 %v15, %v34
  %vm38 = vcmask 523264
  %39 = vst.msk [vmem:[%s3] sm:$0xff] %vm38, %v36
  %40 = vst.msk [vmem:[%s3 + $0x8] sm:$0xff] %vm38, %v37
  // Predicated region
  $region14: #{transformer_forward.65} parent=0 // pred_check
    _
  $region15: #{transformer_forward.65} parent=0 // pred_check_branch
    %42 = sbr.rel (0) target = $region17
  $region16: #{transformer_forward.65} parent=0 // pred_region
    _
  $region17: #{transformer_forward.65} parent=0 // pred_fallthru
    _
  // Predicated region
  $region18: #{transformer_forward.65} parent=0 // pred_check
    _
  $region19: #{transformer_forward.65} parent=0 // pred_check_branch
    %44 = sbr.rel (0) target = $region21
  $region20: #{transformer_forward.65} parent=0 // pred_region
    _
  $region21: #{transformer_forward.65} parent=0 // pred_fallthru
    _

// kernel: transformer_forward.66
$region0: #{transformer_forward.66}
  #allocation0 [shape = 'u32[]', space=smem, size = 0x4, offset = 0x4, fixed_abs, tag = 'smem constant byte address 0x4 - core index']
  #allocation1 [shape = 'u32[144,128]{1,0:T(1,128)}', space=vmem, size = 0x12000, scoped, tag = 'internal scratch']
  #allocation2 [shape = 'f32[2,32]{1,0:T(2,128)}', space=vmem, size = 0x400, scoped, tag = 'scratch operand']
  %s0 = inlined_call_operand.vmem [shape: bf16[2,32], index: 0, kind: input, shape index: {}]
  %s1 = inlined_call_operand.vmem [shape: bf16[32,32], index: 1, kind: input, shape index: {}]
  %s2 = inlined_call_operand.vmem [shape: f32[1,32], index: 2, kind: input, shape index: {}]
  %s3 = inlined_call_operand.vmem [shape: bf16[2,32], index: 3, kind: output, shape index: {}]
  %s4 = sld [smem:[#allocation0]]
  $region30: #{transformer_forward.66} parent=0
    _
  %s6 = ssub.s32 1, %s4
  %s7 = scalar_select 0, %s6, %s4
  // Predicated region
  $region2: #{transformer_forward.66} parent=0 // pred_check
    _
  $region3: #{transformer_forward.66} parent=0 // pred_check_branch
    %9 = sbr.rel (0) target = $region5
  $region4: #{transformer_forward.66} parent=0 // pred_region
    _
  $region5: #{transformer_forward.66} parent=0 // pred_fallthru
    _
  // Predicated region
  $region6: #{transformer_forward.66} parent=0 // pred_check
    _
  $region7: #{transformer_forward.66} parent=0 // pred_check_branch
    %11 = sbr.rel (0) target = $region9
  $region8: #{transformer_forward.66} parent=0 // pred_region
    _
  $region9: #{transformer_forward.66} parent=0 // pred_fallthru
    _
  // Predicated region
  $region10: #{transformer_forward.66} parent=0 // pred_check
    _
  $region11: #{transformer_forward.66} parent=0 // pred_check_branch
    %13 = sbr.rel (0) target = $region13
  $region12: #{transformer_forward.66} parent=0 // pred_region
    _
  $region13: #{transformer_forward.66} parent=0 // pred_fallthru
    _
  %p15 = scmp.eq.s32.totalorder 0, 0
  // Predicated region
  $region14: #{transformer_forward.66} parent=0 // pred_check
    %p16 = pneg %p15
  $region15: #{transformer_forward.66} parent=0 // pred_check_branch
    %18 = sbr.rel (%p16) target = $region17
  $region16: #{transformer_forward.66} parent=0 // pred_region
    %vm19 = vcmask 254976
    %20 = vst.msk [vmem:[#allocation2] sm:$0x3] %vm19, 0.0
  $region17: #{transformer_forward.66} parent=0 // pred_fallthru
    _
  %v21 = vld [vmem:[#allocation2] sm:$0x3]
  %v22 = vld [vmem:[%s0] sm:$0x1]
  %v23 = vld [vmem:[%s1] sm:$0xf]
  %v24 = vld [vmem:[%s1 + $0x4] sm:$0xf]
  %v25 = vld [vmem:[%s1 + $0x8] sm:$0xf]
  %v26 = vld [vmem:[%s1 + $0xc] sm:$0xf]
  %v31 = vunpack.c.l.b16 %v23
  %v32 = vunpack.c.l.b16 %v24
  %v33 = vunpack.c.l.b16 %v25
  %v34 = vunpack.c.l.b16 %v26
  %v35 = vpack.c.b16 %v32, %v31
  %v36 = vpack.c.b16 %v34, %v33
  %vm39 = vcmask 261120
  %v41 = vsel %vm39, %v22, 0
  %43 = vmatprep.subr.bf16.mxu0 0
  %44 = vmatpush1.bf16.msra.mxu0 %v35
  %45 = vmatprep.subr.bf16.mxu0 0
  %46 = vmatpush1.bf16.msra.mxu0 %v36
  %47 = vmatprep.subr.bf16.mxu0 0
  %48 = vmatpush1.bf16.msra.mxu0 0
  %49 = vmatprep.subr.bf16.mxu0 0
  %50 = vmatpush1.bf16.msra.mxu0 0
  %51 = vmatprep.subr.bf16.mxu0 0
  %52 = vmatpush1.bf16.msra.mxu0 0
  %53 = vmatprep.subr.bf16.mxu0 0
  %54 = vmatpush1.bf16.msra.mxu0 0
  %55 = vmatprep.subr.bf16.mxu0 0
  %56 = vmatpush1.bf16.msra.mxu0 0
  %57 = vmatprep.subr.bf16.mxu0 0
  %58 = vmatpush1.bf16.msra.mxu0 0
  %59 = vmatprep.subr.bf16.mxu0 0
  %60 = vmatpush1.bf16.msra.mxu0 0
  %61 = vmatprep.subr.bf16.mxu0 0
  %62 = vmatpush1.bf16.msra.mxu0 0
  %63 = vmatprep.subr.bf16.mxu0 0
  %64 = vmatpush1.bf16.msra.mxu0 0
  %65 = vmatprep.subr.bf16.mxu0 0
  %66 = vmatpush1.bf16.msra.mxu0 0
  %67 = vmatprep.subr.bf16.mxu0 0
  %68 = vmatpush1.bf16.msra.mxu0 0
  %69 = vmatprep.subr.bf16.mxu0 0
  %70 = vmatpush1.bf16.msra.mxu0 0
  %71 = vmatprep.subr.bf16.mxu0 0
  %72 = vmatpush1.bf16.msra.mxu0 0
  %73 = vmatprep.subr.bf16.mxu0 0
  %74 = vmatpush1.bf16.msra.mxu0 0
  %75 = vmatprep.mubr.bf16.mxu0 0
  %76 = vmatmul.mubr.bf16.gmra.mrb[0].mxu0 %v41
  %v77 = vpop.f32.mrb[0].mxu0
  %v78 = vadd.f32 0.0, %v77
  %v79 = vpop.f32.mrb[0].mxu0
  %v80 = vpop.f32.mrb[0].mxu0
  %v81 = vpop.f32.mrb[0].mxu0
  %82 = vdwg.mxu0
  %v83 = vadd.f32 %v21, %v78
  %vm84 = vcmask 254976
  %85 = vst.msk [vmem:[#allocation2] sm:$0x3] %vm84, %v83
  // Predicated region
  $region18: #{transformer_forward.66} parent=0 // pred_check
    %p86 = pneg %p15
  $region19: #{transformer_forward.66} parent=0 // pred_check_branch
    %88 = sbr.rel (%p86) target = $region21
  $region20: #{transformer_forward.66} parent=0 // pred_region
    %v89 = vld [vmem:[#allocation2] sm:$0x3]
    %v90 = vld [vmem:[%s2] sm:$0x1]
    %v92 = vlaneseq
    %v93 = vshrl.u32 %v92, 7
    %v94 = vsub.s32 0, %v93
    %v95 = vrot.slane %v90, %v94
    %v97 = vadd.f32 %v89, %v95
    %v98 = vtanh.pop %v97
    %v99 = vpack.c.bf16 %v98, %v98
    %vm100 = vcmask 253952
    %101 = vst.msk [vmem:[%s3] sm:$0x1] %vm100, %v99
  $region21: #{transformer_forward.66} parent=0 // pred_fallthru
    _
  // Predicated region
  $region22: #{transformer_forward.66} parent=0 // pred_check
    _
  $region23: #{transformer_forward.66} parent=0 // pred_check_branch
    %103 = sbr.rel (0) target = $region25
  $region24: #{transformer_forward.66} parent=0 // pred_region
    _
  $region25: #{transformer_forward.66} parent=0 // pred_fallthru
    _
  // Predicated region
  $region26: #{transformer_forward.66} parent=0 // pred_check
    _
  $region27: #{transformer_forward.66} parent=0 // pred_check_branch
    %105 = sbr.rel (0) target = $region29
  $region28: #{transformer_forward.66} parent=0 // pred_region
    _
  $region29: #{transformer_forward.66} parent=0 // pred_fallthru
    _

// kernel: transformer_forward.67
$region0: #{transformer_forward.67}
  #allocation0 [shape = 'u32[]', space=smem, size = 0x4, offset = 0x4, fixed_abs, tag = 'smem constant byte address 0x4 - core index']
  #allocation1 [shape = 'u32[144,128]{1,0:T(1,128)}', space=vmem, size = 0x12000, scoped, tag = 'internal scratch']
  #allocation2 [shape = 'f32[2,8]{1,0:T(2,128)}', space=vmem, size = 0x400, scoped, tag = 'scratch operand']
  %s0 = inlined_call_operand.vmem [shape: bf16[2,32], index: 0, kind: input, shape index: {}]
  %s1 = inlined_call_operand.vmem [shape: bf16[32,8], index: 1, kind: input, shape index: {}]
  %s2 = inlined_call_operand.vmem [shape: f32[1,8], index: 2, kind: input, shape index: {}]
  %s3 = inlined_call_operand.hbm [shape: f32[2,8], index: 3, kind: output, shape index: {}]
  %s4 = sld [smem:[#allocation0]]
  $region30: #{transformer_forward.67} parent=0
    _
  %s6 = ssub.s32 1, %s4
  %s7 = scalar_select 0, %s6, %s4
  $region1: #{transformer_forward.67} parent=0
    #allocation3 [shape = 'u8[1024]{0}', space=vmem, size = 0x400, scoped, tag = 'output window, operand 0, single buffered']
    #allocation4 [shape = 's32[1]{0}', space=sflag, size = 0x4, scoped, tag = 'scoped memory for transformer_forward.67']
    %8 = vsyncpa [#allocation4], 0
    // Predicated region
    $region2: #{transformer_forward.67} parent=1 // pred_check
      _
    $region3: #{transformer_forward.67} parent=1 // pred_check_branch
      %10 = sbr.rel (0) target = $region5
    $region4: #{transformer_forward.67} parent=1 // pred_region
      _
    $region5: #{transformer_forward.67} parent=1 // pred_fallthru
      _
    // Predicated region
    $region6: #{transformer_forward.67} parent=1 // pred_check
      _
    $region7: #{transformer_forward.67} parent=1 // pred_check_branch
      %12 = sbr.rel (0) target = $region9
    $region8: #{transformer_forward.67} parent=1 // pred_region
      _
    $region9: #{transformer_forward.67} parent=1 // pred_fallthru
      _
    // Predicated region
    $region10: #{transformer_forward.67} parent=1 // pred_check
      _
    $region11: #{transformer_forward.67} parent=1 // pred_check_branch
      %14 = sbr.rel (0) target = $region13
    $region12: #{transformer_forward.67} parent=1 // pred_region
      _
    $region13: #{transformer_forward.67} parent=1 // pred_fallthru
      _
    %p16 = scmp.eq.s32.totalorder 0, 0
    // Predicated region
    $region14: #{transformer_forward.67} parent=1 // pred_check
      %p17 = pneg %p16
    $region15: #{transformer_forward.67} parent=1 // pred_check_branch
      %19 = sbr.rel (%p17) target = $region17
    $region16: #{transformer_forward.67} parent=1 // pred_region
      %vm20 = vcmask 58368
      %21 = vst.msk [vmem:[#allocation2] sm:$0x3] %vm20, 0.0
    $region17: #{transformer_forward.67} parent=1 // pred_fallthru
      _
    %v22 = vld [vmem:[#allocation2] sm:$0x3]
    %v23 = vld [vmem:[%s0] sm:$0x1]
    %v24 = vld [vmem:[%s1] sm:$0xf]
    %v25 = vld [vmem:[%s1 + $0x4] sm:$0xf]
    %v26 = vld [vmem:[%s1 + $0x8] sm:$0xf]
    %v27 = vld [vmem:[%s1 + $0xc] sm:$0xf]
    %v32 = vunpack.c.l.b16 %v24
    %v33 = vunpack.c.l.b16 %v25
    %v34 = vunpack.c.l.b16 %v26
    %v35 = vunpack.c.l.b16 %v27
    %v36 = vpack.c.b16 %v33, %v32
    %v37 = vpack.c.b16 %v35, %v34
    %vm40 = vcmask 261120
    %v42 = vsel %vm40, %v23, 0
    %44 = vmatprep.subr.bf16.mxu0 0
    %45 = vmatpush1.bf16.msra.mxu0 %v36
    %46 = vmatprep.subr.bf16.mxu0 0
    %47 = vmatpush1.bf16.msra.mxu0 %v37
    %48 = vmatprep.subr.bf16.mxu0 0
    %49 = vmatpush1.bf16.msra.mxu0 0
    %50 = vmatprep.subr.bf16.mxu0 0
    %51 = vmatpush1.bf16.msra.mxu0 0
    %52 = vmatprep.subr.bf16.mxu0 0
    %53 = vmatpush1.bf16.msra.mxu0 0
    %54 = vmatprep.subr.bf16.mxu0 0
    %55 = vmatpush1.bf16.msra.mxu0 0
    %56 = vmatprep.subr.bf16.mxu0 0
    %57 = vmatpush1.bf16.msra.mxu0 0
    %58 = vmatprep.subr.bf16.mxu0 0
    %59 = vmatpush1.bf16.msra.mxu0 0
    %60 = vmatprep.subr.bf16.mxu0 0
    %61 = vmatpush1.bf16.msra.mxu0 0
    %62 = vmatprep.subr.bf16.mxu0 0
    %63 = vmatpush1.bf16.msra.mxu0 0
    %64 = vmatprep.subr.bf16.mxu0 0
    %65 = vmatpush1.bf16.msra.mxu0 0
    %66 = vmatprep.subr.bf16.mxu0 0
    %67 = vmatpush1.bf16.msra.mxu0 0
    %68 = vmatprep.subr.bf16.mxu0 0
    %69 = vmatpush1.bf16.msra.mxu0 0
    %70 = vmatprep.subr.bf16.mxu0 0
    %71 = vmatpush1.bf16.msra.mxu0 0
    %72 = vmatprep.subr.bf16.mxu0 0
    %73 = vmatpush1.bf16.msra.mxu0 0
    %74 = vmatprep.subr.bf16.mxu0 0
    %75 = vmatpush1.bf16.msra.mxu0 0
    %76 = vmatprep.mubr.bf16.mxu0 0
    %77 = vmatmul.mubr.bf16.gmra.mrb[0].mxu0 %v42
    %v78 = vpop.f32.mrb[0].mxu0
    %v79 = vadd.f32 0.0, %v78
    %v80 = vpop.f32.mrb[0].mxu0
    %v81 = vpop.f32.mrb[0].mxu0
    %v82 = vpop.f32.mrb[0].mxu0
    %83 = vdwg.mxu0
    %v84 = vadd.f32 %v22, %v79
    %vm85 = vcmask 58368
    %86 = vst.msk [vmem:[#allocation2] sm:$0x3] %vm85, %v84
    // Predicated region
    $region18: #{transformer_forward.67} parent=1 // pred_check
      %p87 = pneg %p16
    $region19: #{transformer_forward.67} parent=1 // pred_check_branch
      %89 = sbr.rel (%p87) target = $region21
    $region20: #{transformer_forward.67} parent=1 // pred_region
      %v90 = vld [vmem:[#allocation2] sm:$0x3]
      %v91 = vld [vmem:[%s2] sm:$0x1]
      %v93 = vlaneseq
      %v94 = vshrl.u32 %v93, 7
      %v95 = vsub.s32 0, %v94
      %v96 = vrot.slane %v91, %v95
      %v98 = vadd.f32 %v90, %v96
      %99 = vst.msk [vmem:[#allocation3] sm:$0x3] %vm85, %v98
    $region21: #{transformer_forward.67} parent=1 // pred_fallthru
      _
    // Predicated region
    $region22: #{transformer_forward.67} parent=1 // pred_check
      _
    $region23: #{transformer_forward.67} parent=1 // pred_check_branch
      %101 = sbr.rel (0) target = $region25
    $region24: #{transformer_forward.67} parent=1 // pred_region
      %s103 = ssub.s32 32, 32
      %104 = vsyncadd [#allocation4], %s103
      %s106 = sshll.u32 [#allocation3], 4
      %s107 = int_to_ptr.vmem [resolvable:$true] %s106
      %109 = dma.vmem_to_hbm [thread:$0]  %s107, 32, %s3, [#allocation4]
    $region25: #{transformer_forward.67} parent=1 // pred_fallthru
      _
    // Predicated region
    $region26: #{transformer_forward.67} parent=1 // pred_check
      _
    $region27: #{transformer_forward.67} parent=1 // pred_check_branch
      %111 = sbr.rel (0) target = $region29
    $region28: #{transformer_forward.67} parent=1 // pred_region
      %112 = dma.done [#allocation4], 32
    $region29: #{transformer_forward.67} parent=1 // pred_fallthru
      _
    %113 = vsyncpa [#allocation4], 1

</llo_original>
